<compile_context>
chip_gen: v7x
topology: tpu7x:2x2x1
jax: 0.10.0
libtpu: 0.0.40
codegen_flags: <defaults>
</compile_context>

<pallas_src>
import functools

import jax
import jax.numpy as jnp
from jax.experimental import pallas as pl
from jax.experimental.pallas import tpu as pltpu

MXU_DTYPE = jnp.bfloat16   # MXU operand dtype; accumulation stays float32
_EPS_COS = 1e-8            # torch cos_sim eps
_EPS_L1 = 1e-12            # torch F.normalize default eps

EDGE_TYPES = ('H-H', 'L-L', 'H-L')
# node-type block index (0 = 'H' rows, 1 = 'L' rows) of feature1 / feature2
_ROW_SEL = (0, 1, 0)   # r[0]
_COL_SEL = (0, 1, 1)   # r[-1]


# --------------------------- in-kernel helpers ------------------------------

def _fix_zero_rows(f):
    # torch: feature1[zero_lines, :] += 1e-8
    row_sum = jnp.sum(f, axis=1, keepdims=True)
    return jnp.where(row_sum == 0.0, f + _EPS_COS, f)


def _normalized_heads(f, w_all, num_head):
    """Per-head weighted, row-L2-normalized copies of f concatenated along the
    feature axis -> (rows, num_head*dim).  rsqrt (EUP) instead of sqrt+div."""
    blocks = []
    for h in range(num_head):          # num_head is tiny & static -> unrolled
        w = w_all[h:h + 1, :]          # (1, dim), broadcasts over rows
        a = f * w
        ss = jnp.sum(a * a, axis=1, keepdims=True)
        # a / max(||a||, eps)  ==  a * (rsqrt(ss) if ss >= eps^2 else 1/eps)
        inv = jnp.where(ss < _EPS_COS * _EPS_COS, 1.0 / _EPS_COS,
                        jax.lax.rsqrt(ss))
        blocks.append(a * inv)
    return jnp.concatenate(blocks, axis=1) if num_head > 1 else blocks[0]


def _mh_cos_self(f, w_all, num_head, threshold):
    """FeatureSimilarityGraphBuilder with feature1 IS feature2 (nsim calls):
    the in-place zero-row fix hits both sides, so normalize once and contract
    against itself.  Dead-input case is a scalar mask multiply (no zeros
    materialization)."""
    alive = jnp.where(jnp.sum(f) == 0.0, 0.0, 1.0)
    a = _normalized_heads(_fix_zero_rows(f), w_all, num_head).astype(MXU_DTYPE)
    # single MXU contraction over num_head*dim (the head-sum folds into it)
    s = jax.lax.dot_general(a, a, (((1,), (1,)), ((), ())),
                            preferred_element_type=jnp.float32)
    s = s * (alive / num_head)
    return jnp.where(s < threshold, 0.0, s)


def _encode(f, w, b):
    # relu(x @ W + b); bf16 operands, f32 accumulation.
    y = jnp.dot(f.astype(MXU_DTYPE), w.astype(MXU_DTYPE),
                preferred_element_type=jnp.float32)
    return jnp.maximum(y + b, 0.0)


def _l1_col_inv(m):
    # exact per-column L1 inverse norm, (1, n) vector -> negligible cost
    col = jnp.sum(jnp.abs(m), axis=0, keepdims=True)
    return 1.0 / jnp.maximum(col, _EPS_L1)


# ----------------------------- Pallas kernels -------------------------------

def _edge_kernel(rsel_ref, csel_ref,                # scalar prefetch (SMEM)
                 f_row_ref, f_col_ref,              # raw features of row / col node type
                 wr_ref, br_ref, wc_ref, bc_ref,    # encoder weights of row / col node type
                 init_ref,                          # adjacency block of this edge type
                 fsw_ref, n1w_ref, n2w_ref,         # per-edge similarity weights
                 agg_ref,                           # (3,4) softmaxed aggregate weights (SMEM)
                 op_ref,                            # (1,n,n) output block
                 b_scr,                             # VMEM scratch: fsim's "b" side (bf16)
                 *, num_head, thr_fg, thr_fag):
    i = pl.program_id(0)
    init_b = init_ref[...].astype(MXU_DTYPE)

    # ---- channel 1: nsim1 = sim1 @ init_adj -------------------------------
    sim1 = _mh_cos_self(f_row_ref[...], n1w_ref[0], num_head, thr_fag)
    nsim1 = jnp.dot(sim1.astype(MXU_DTYPE), init_b,
                    preferred_element_type=jnp.float32)
    acc = nsim1 * (_l1_col_inv(nsim1) * agg_ref[i, 1])

    # ---- channel 2: nsim2 = (sim2 @ init.T).T == init @ sim2 (sim2 symmetric)
    sim2 = _mh_cos_self(f_col_ref[...], n2w_ref[0], num_head, thr_fag)
    nsim2 = jax.lax.dot_general(init_b, sim2.astype(MXU_DTYPE),
                                (((1,), (0,)), ((), ())),
                                preferred_element_type=jnp.float32)
    acc = acc + nsim2 * (_l1_col_inv(nsim2) * agg_ref[i, 2])

    # ---- channel 0: fsim on encoded features (encoder fused in-kernel) ----
    e_row = _encode(f_row_ref[...], wr_ref[0], br_ref[0])
    alive_row = jnp.where(jnp.sum(e_row) == 0.0, 0.0, 1.0)
    a_b16 = _normalized_heads(_fix_zero_rows(e_row), fsw_ref[0],
                              num_head).astype(MXU_DTYPE)
    b_scr[...] = a_b16                      # diagonal edge types: b == a

    @pl.when(rsel_ref[i] != csel_ref[i])    # only the H-L step does extra work
    def _():
        e_col = _encode(f_col_ref[...], wc_ref[0], bc_ref[0])
        alive_col = jnp.where(jnp.sum(e_col) == 0.0, 0.0, 1.0)
        # torch does not apply the zero-row fix to feature2
        b_scr[...] = (_normalized_heads(e_col, fsw_ref[0], num_head)
                      * alive_col).astype(MXU_DTYPE)

    s = jax.lax.dot_general(a_b16, b_scr[...], (((1,), (1,)), ((), ())),
                            preferred_element_type=jnp.float32)
    s = s * (alive_row / num_head)
    fsim = jnp.where(s < thr_fg, 0.0, s)
    acc = acc + fsim * (_l1_col_inv(fsim) * agg_ref[i, 0])

    # ---- channel 3: init_adj itself ----------------------------------------
    init_adj = init_ref[...]
    acc = acc + init_adj * (_l1_col_inv(init_adj) * agg_ref[i, 3])

    op_ref[0] = acc


def _finalize_kernel(ops_ref, o_ref, *, n):
    # new_adj += new_adj.T ; then column-wise L1 normalize (F.normalize dim=0, p=1)
    op_hh = ops_ref[0]
    op_ll = ops_ref[1]
    op_hl = ops_ref[2]
    blk_hh = op_hh + op_hh.T          # rows H, cols H
    blk_ll = op_ll + op_ll.T          # rows L, cols L
    blk_lh = op_hl                    # rows L, cols H ('H-L' edge position)
    blk_hl = op_hl.T                  # rows H, cols L (was zero before symmetrize)
    col_h = (jnp.sum(jnp.abs(blk_hh), axis=0, keepdims=True)
             + jnp.sum(jnp.abs(blk_lh), axis=0, keepdims=True))
    col_l = (jnp.sum(jnp.abs(blk_hl), axis=0, keepdims=True)
             + jnp.sum(jnp.abs(blk_ll), axis=0, keepdims=True))
    inv_h = 1.0 / jnp.maximum(col_h, _EPS_L1)   # exact: final columns sum to 1
    inv_l = 1.0 / jnp.maximum(col_l, _EPS_L1)
    o_ref[0:n, 0:n] = blk_hh * inv_h
    o_ref[n:2 * n, 0:n] = blk_lh * inv_h
    o_ref[0:n, n:2 * n] = blk_hl * inv_l
    o_ref[n:2 * n, n:2 * n] = blk_ll * inv_l


# ---------------------------- kernel wrappers --------------------------------

def edge_pipeline(features, adj_ori, enc_W, enc_b, fsim_w, nsim1_w, nsim2_w,
                  agg_sw, *, num_nodes, num_head, thr_fg, thr_fag):
    n = num_nodes
    input_dim = features.shape[1]
    feat_dim = enc_W.shape[-1]
    rsel = jnp.array(_ROW_SEL, jnp.int32)
    csel = jnp.array(_COL_SEL, jnp.int32)

    kern = functools.partial(_edge_kernel, num_head=num_head,
                             thr_fg=float(thr_fg), thr_fag=float(thr_fag))

    grid_spec = pltpu.PrefetchScalarGridSpec(
        num_scalar_prefetch=2,
        grid=(3,),
        in_specs=[
            pl.BlockSpec((n, input_dim), lambda i, r, c: (r[i], 0)),        # features1
            pl.BlockSpec((n, input_dim), lambda i, r, c: (c[i], 0)),        # features2
            pl.BlockSpec((1, input_dim, feat_dim), lambda i, r, c: (r[i], 0, 0)),  # enc W (row type)
            pl.BlockSpec((1, 1, feat_dim), lambda i, r, c: (r[i], 0, 0)),          # enc b (row type)
            pl.BlockSpec((1, input_dim, feat_dim), lambda i, r, c: (c[i], 0, 0)),  # enc W (col type)
            pl.BlockSpec((1, 1, feat_dim), lambda i, r, c: (c[i], 0, 0)),          # enc b (col type)
            # adjacency block of this edge type: rows follow r[-1], cols r[0]
            pl.BlockSpec((n, n), lambda i, r, c: (c[i], r[i])),
            pl.BlockSpec((1, num_head, feat_dim), lambda i, r, c: (i, 0, 0)),
            pl.BlockSpec((1, num_head, input_dim), lambda i, r, c: (i, 0, 0)),
            pl.BlockSpec((1, num_head, input_dim), lambda i, r, c: (i, 0, 0)),
            pl.BlockSpec(memory_space=pltpu.MemorySpace.SMEM),               # agg softmax
        ],
        out_specs=pl.BlockSpec((1, n, n), lambda i, r, c: (i, 0, 0)),
        scratch_shapes=[pltpu.VMEM((n, num_head * feat_dim), MXU_DTYPE)],
    )
    return pl.pallas_call(
        kern,
        out_shape=jax.ShapeDtypeStruct((3, n, n), jnp.float32),
        grid_spec=grid_spec,
        compiler_params=pltpu.CompilerParams(
            dimension_semantics=("parallel",),     # independent edge types
            vmem_limit_bytes=32 * 1024 * 1024),    # safe on v5e/v6e/v7x
    )(rsel, csel, features, features, enc_W, enc_b, enc_W, enc_b, adj_ori,
      fsim_w, nsim1_w, nsim2_w, agg_sw)


def finalize_adj(op_stack, *, num_nodes):
    n = num_nodes
    return pl.pallas_call(
        functools.partial(_finalize_kernel, n=n),
        out_shape=jax.ShapeDtypeStruct((2 * n, 2 * n), jnp.float32),
        in_specs=[pl.BlockSpec(memory_space=pltpu.MemorySpace.VMEM)],
        out_specs=pl.BlockSpec(memory_space=pltpu.MemorySpace.VMEM),
    )(op_stack)


# ------------------------------ DHGSLM forward --------------------------------

def init_params(key, *, input_dim, feat_dim, num_head):
    ks = jax.random.split(key, 5)
    bf = (6.0 / (1.0 + feat_dim)) ** 0.5    # xavier-uniform bound for (1, dim)
    bi = (6.0 / (1.0 + input_dim)) ** 0.5
    return {
        # encoder (x @ W + b), stacked over node types [H, L]
        'enc_W': jax.random.uniform(ks[0], (2, input_dim, feat_dim), jnp.float32, -0.1, 0.1),
        'enc_b': jax.random.uniform(ks[1], (2, 1, feat_dim), jnp.float32, -0.1, 0.1),
        # per-edge-type multi-head similarity weights, stacked over EDGE_TYPES
        'fsim_w': jax.random.uniform(ks[2], (3, num_head, feat_dim), jnp.float32, -bf, bf),
        'nsim1_w': jax.random.uniform(ks[3], (3, num_head, input_dim), jnp.float32, -bi, bi),
        'nsim2_w': jax.random.uniform(ks[4], (3, num_head, input_dim), jnp.float32, -bi, bi),
        # GraphAggregateLayer weights, nn.init.constant_(0.1)
        'agg_w': jnp.full((3, 4), 0.1, jnp.float32),
    }


def dhgslm_forward(features, adj_ori, params, *, num_nodes, thr_fg, thr_fag):
    # softmax of the 4 aggregate channel weights is a 3x4 scalar op -> outside
    # the kernel, handed in via SMEM.
    agg_sw = jax.nn.softmax(params['agg_w'], axis=1)
    # fused encoder + per-edge-type pipeline (fsim / sim1 / sim2 / nsim1 / nsim2
    # / 4-channel aggregate), one grid step per edge type.
    op_stack = edge_pipeline(features, adj_ori,
                             params['enc_W'], params['enc_b'],
                             params['fsim_w'], params['nsim1_w'], params['nsim2_w'],
                             agg_sw,
                             num_nodes=num_nodes,
                             num_head=params['fsim_w'].shape[1],
                             thr_fg=thr_fg, thr_fag=thr_fag)
    # new_adj += new_adj.T ; column-wise L1 normalize, assembled block-wise
    return finalize_adj(op_stack, num_nodes=num_nodes)


# ----------------------------------- driver -----------------------------------

if __name__ == "__main__":
    NUM_NODES = 128    # per node type -> adjacency is (256, 256); lane-dense blocks
    INPUT_DIM = 128
    FEAT_DIM = 128
    NUM_HEAD = 2
    THR_FG = 0.1
    THR_FAG = 0.1

    key = jax.random.PRNGKey(0)
    k_feat, k_adj, k_par = jax.random.split(key, 3)

    features = jax.random.uniform(k_feat, (2 * NUM_NODES, INPUT_DIM), jnp.float32)
    adj_ori = jax.random.uniform(k_adj, (2 * NUM_NODES, 2 * NUM_NODES), jnp.float32)
    params = init_params(k_par, input_dim=INPUT_DIM, feat_dim=FEAT_DIM,
                         num_head=NUM_HEAD)

    fwd = jax.jit(functools.partial(dhgslm_forward, num_nodes=NUM_NODES,
                                    thr_fg=THR_FG, thr_fag=THR_FAG))
    new_adj = fwd(features, adj_ori, params)
    jax.block_until_ready(new_adj)

    assert new_adj.shape == (2 * NUM_NODES, 2 * NUM_NODES)
    assert bool(jnp.all(jnp.isfinite(new_adj)))
    # column L1 norms should be ~1 after the final (exact) normalization
    col_sums = jnp.sum(jnp.abs(new_adj), axis=0)
    assert bool(jnp.all(jnp.abs(col_sums - 1.0) < 1e-2))
    print("KERNEL_OK")
</pallas_src>

<mosaic_0001>
module attributes {stable_mosaic.version = 11 : i64} {
  func.func @_edge_kernel(%arg0: i32, %arg1: memref<3xi32, #tpu.memory_space<smem>>, %arg2: memref<3xi32, #tpu.memory_space<smem>>, %arg3: memref<128x128xf32, #tpu.memory_space<vmem>>, %arg4: memref<128x128xf32, #tpu.memory_space<vmem>>, %arg5: memref<1x128x128xf32, #tpu.memory_space<vmem>>, %arg6: memref<1x1x128xf32, #tpu.memory_space<vmem>>, %arg7: memref<1x128x128xf32, #tpu.memory_space<vmem>>, %arg8: memref<1x1x128xf32, #tpu.memory_space<vmem>>, %arg9: memref<128x128xf32, #tpu.memory_space<vmem>>, %arg10: memref<1x2x128xf32, #tpu.memory_space<vmem>>, %arg11: memref<1x2x128xf32, #tpu.memory_space<vmem>>, %arg12: memref<1x2x128xf32, #tpu.memory_space<vmem>>, %arg13: memref<3x4xf32, #tpu.memory_space<smem>>, %arg14: memref<1x128x128xf32, #tpu.memory_space<vmem>>, %arg15: memref<128x256xbf16, #tpu.memory_space<vmem>>) attributes {dimension_semantics = [#tpu.dimension_semantics<parallel>], iteration_bounds = array<i64: 3>, scalar_prefetch = 2 : i64, scratch_operands = 1 : i64, tpu.core_type = #tpu.core_type<tc>, window_params = [{transform_indices = @transform_0, window_bounds = array<i64: 128, 128>}, {transform_indices = @transform_1, window_bounds = array<i64: 128, 128>}, {transform_indices = @transform_2, window_bounds = array<i64: 1, 128, 128>}, {transform_indices = @transform_3, window_bounds = array<i64: 1, 1, 128>}, {transform_indices = @transform_4, window_bounds = array<i64: 1, 128, 128>}, {transform_indices = @transform_5, window_bounds = array<i64: 1, 1, 128>}, {transform_indices = @transform_6, window_bounds = array<i64: 128, 128>}, {transform_indices = @transform_7, window_bounds = array<i64: 1, 2, 128>}, {transform_indices = @transform_8, window_bounds = array<i64: 1, 2, 128>}, {transform_indices = @transform_9, window_bounds = array<i64: 1, 2, 128>}, {transform_indices = @transform_10, window_bounds = array<i64: 3, 4>}, {transform_indices = @transform_11, window_bounds = array<i64: 1, 128, 128>}]} {
    %c0 = arith.constant 0 : index
    %c0_0 = arith.constant 0 : index
    %0 = vector.load %arg9[%c0, %c0_0] : memref<128x128xf32, #tpu.memory_space<vmem>>, vector<128x128xf32>
    %1 = arith.truncf %0 : vector<128x128xf32> to vector<128x128xbf16>
    %c0_1 = arith.constant 0 : index
    %c0_2 = arith.constant 0 : index
    %2 = vector.load %arg3[%c0_1, %c0_2] : memref<128x128xf32, #tpu.memory_space<vmem>>, vector<128x128xf32>
    %c0_3 = arith.constant 0 : index
    %c0_4 = arith.constant 0 : index
    %c0_5 = arith.constant 0 : index
    %3 = vector.load %arg11[%c0_3, %c0_4, %c0_5] : memref<1x2x128xf32, #tpu.memory_space<vmem>>, vector<1x2x128xf32>
    %4 = vector.shape_cast %3 : vector<1x2x128xf32> to vector<2x128xf32>
    %5 = vector.shape_cast %2 : vector<128x128xf32> to vector<1x128x128xf32>
    %cst = arith.constant dense<0.000000e+00> : vector<1xf32>
    %6 = vector.multi_reduction <add>, %5, %cst [1, 2] : vector<1x128x128xf32> to vector<1xf32>
    %7 = vector.shape_cast %6 : vector<1xf32> to vector<1x1x1xf32>
    %8 = vector.extract %7[0, 0, 0] : f32 from vector<1x1x1xf32>
    %cst_6 = arith.constant 0.000000e+00 : f32
    %9 = arith.cmpf oeq, %8, %cst_6 : f32
    %cst_7 = arith.constant 0.000000e+00 : f32
    %cst_8 = arith.constant 1.000000e+00 : f32
    %10 = arith.select %9, %cst_7, %cst_8 : f32
    %cst_9 = arith.constant dense<0.000000e+00> : vector<128xf32>
    %11 = vector.multi_reduction <add>, %2, %cst_9 [1] : vector<128x128xf32> to vector<128xf32>
    %12 = vector.shape_cast %11 : vector<128xf32> to vector<128x1xf32>
    %cst_10 = arith.constant 0.000000e+00 : f32
    %13 = vector.broadcast %cst_10 : f32 to vector<128x1xf32>
    %14 = arith.cmpf oeq, %12, %13 : vector<128x1xf32>
    %cst_11 = arith.constant 9.99999993E-9 : f32
    %15 = vector.broadcast %cst_11 : f32 to vector<128x128xf32>
    %16 = arith.addf %2, %15 : vector<128x128xf32>
    %17 = vector.shape_cast %14 : vector<128x1xi1> to vector<128x1xi1>
    %18 = vector.broadcast %17 : vector<128x1xi1> to vector<128x128xi1>
    %19 = arith.select %18, %16, %2 : vector<128x128xi1>, vector<128x128xf32>
    %20 = vector.extract_strided_slice %4 {offsets = [0, 0], sizes = [1, 128], strides = [1, 1]} : vector<2x128xf32> to vector<1x128xf32>
    %21 = vector.broadcast %20 : vector<1x128xf32> to vector<128x128xf32>
    %22 = arith.mulf %19, %21 : vector<128x128xf32>
    %23 = arith.mulf %22, %22 : vector<128x128xf32>
    %cst_12 = arith.constant dense<0.000000e+00> : vector<128xf32>
    %24 = vector.multi_reduction <add>, %23, %cst_12 [1] : vector<128x128xf32> to vector<128xf32>
    %25 = vector.shape_cast %24 : vector<128xf32> to vector<128x1xf32>
    %cst_13 = arith.constant 1.000000e-16 : f32
    %26 = vector.broadcast %cst_13 : f32 to vector<128x1xf32>
    %27 = arith.cmpf olt, %25, %26 : vector<128x1xf32>
    %28 = math.rsqrt %25 : vector<128x1xf32>
    %cst_14 = arith.constant 1.000000e+08 : f32
    %29 = vector.broadcast %cst_14 : f32 to vector<128x1xf32>
    %30 = arith.select %27, %29, %28 : vector<128x1xi1>, vector<128x1xf32>
    %31 = vector.broadcast %30 : vector<128x1xf32> to vector<128x128xf32>
    %32 = arith.mulf %22, %31 : vector<128x128xf32>
    %33 = vector.extract_strided_slice %4 {offsets = [1, 0], sizes = [1, 128], strides = [1, 1]} : vector<2x128xf32> to vector<1x128xf32>
    %34 = vector.broadcast %33 : vector<1x128xf32> to vector<128x128xf32>
    %35 = arith.mulf %19, %34 : vector<128x128xf32>
    %36 = arith.mulf %35, %35 : vector<128x128xf32>
    %cst_15 = arith.constant dense<0.000000e+00> : vector<128xf32>
    %37 = vector.multi_reduction <add>, %36, %cst_15 [1] : vector<128x128xf32> to vector<128xf32>
    %38 = vector.shape_cast %37 : vector<128xf32> to vector<128x1xf32>
    %cst_16 = arith.constant 1.000000e-16 : f32
    %39 = vector.broadcast %cst_16 : f32 to vector<128x1xf32>
    %40 = arith.cmpf olt, %38, %39 : vector<128x1xf32>
    %41 = math.rsqrt %38 : vector<128x1xf32>
    %cst_17 = arith.constant 1.000000e+08 : f32
    %42 = vector.broadcast %cst_17 : f32 to vector<128x1xf32>
    %43 = arith.select %40, %42, %41 : vector<128x1xi1>, vector<128x1xf32>
    %44 = vector.broadcast %43 : vector<128x1xf32> to vector<128x128xf32>
    %45 = arith.mulf %35, %44 : vector<128x128xf32>
    %46 = tpu.concatenate %32, %45 in 1 : vector<128x128xf32>, vector<128x128xf32> -> vector<128x256xf32>
    %47 = arith.truncf %46 : vector<128x256xf32> to vector<128x256xbf16>
    %cst_18 = arith.constant dense<0.000000e+00> : vector<128x128xf32>
    %48 = tpu.matmul %47, %47, %cst_18 {dimension_numbers = #tpu.dot_dimension_numbers<[1], [1], [0], [0], [0, 0, 1, 0], [], []>} : vector<128x256xbf16>, vector<128x256xbf16>, vector<128x128xf32> -> vector<128x128xf32>
    %cst_19 = arith.constant 2.000000e+00 : f32
    %49 = arith.divf %10, %cst_19 : f32
    %50 = vector.broadcast %49 : f32 to vector<128x128xf32>
    %51 = arith.mulf %48, %50 : vector<128x128xf32>
    %cst_20 = arith.constant 1.000000e-01 : f32
    %52 = vector.broadcast %cst_20 : f32 to vector<128x128xf32>
    %53 = arith.cmpf olt, %51, %52 : vector<128x128xf32>
    %cst_21 = arith.constant 0.000000e+00 : f32
    %54 = vector.broadcast %cst_21 : f32 to vector<128x128xf32>
    %55 = arith.select %53, %54, %51 : vector<128x128xi1>, vector<128x128xf32>
    %56 = arith.truncf %55 : vector<128x128xf32> to vector<128x128xbf16>
    %cst_22 = arith.constant dense<0.000000e+00> : vector<128x128xf32>
    %57 = tpu.matmul %56, %1, %cst_22 {dimension_numbers = #tpu.dot_dimension_numbers<[1], [0], [0], [1], [0, 0, 1, 1], [], []>} : vector<128x128xbf16>, vector<128x128xbf16>, vector<128x128xf32> -> vector<128x128xf32>
    %58 = math.absf %57 : vector<128x128xf32>
    %cst_23 = arith.constant dense<0.000000e+00> : vector<128xf32>
    %59 = vector.multi_reduction <add>, %58, %cst_23 [0] : vector<128x128xf32> to vector<128xf32>
    %60 = vector.shape_cast %59 : vector<128xf32> to vector<1x128xf32>
    %cst_24 = arith.constant 9.99999996E-13 : f32
    %61 = vector.broadcast %cst_24 : f32 to vector<1x128xf32>
    %62 = arith.maximumf %60, %61 : vector<1x128xf32>
    %cst_25 = arith.constant 1.000000e+00 : f32
    %63 = vector.broadcast %cst_25 : f32 to vector<1x128xf32>
    %64 = arith.divf %63, %62 : vector<1x128xf32>
    %65 = arith.index_cast %arg0 : i32 to index
    %c1 = arith.constant 1 : index
    %66 = memref.load %arg13[%65, %c1] : memref<3x4xf32, #tpu.memory_space<smem>>
    %67 = vector.broadcast %66 : f32 to vector<1x128xf32>
    %68 = arith.mulf %64, %67 : vector<1x128xf32>
    %69 = vector.broadcast %68 : vector<1x128xf32> to vector<128x128xf32>
    %70 = arith.mulf %57, %69 : vector<128x128xf32>
    %c0_26 = arith.constant 0 : index
    %c0_27 = arith.constant 0 : index
    %71 = vector.load %arg4[%c0_26, %c0_27] : memref<128x128xf32, #tpu.memory_space<vmem>>, vector<128x128xf32>
    %c0_28 = arith.constant 0 : index
    %c0_29 = arith.constant 0 : index
    %c0_30 = arith.constant 0 : index
    %72 = vector.load %arg12[%c0_28, %c0_29, %c0_30] : memref<1x2x128xf32, #tpu.memory_space<vmem>>, vector<1x2x128xf32>
    %73 = vector.shape_cast %72 : vector<1x2x128xf32> to vector<2x128xf32>
    %74 = vector.shape_cast %71 : vector<128x128xf32> to vector<1x128x128xf32>
    %cst_31 = arith.constant dense<0.000000e+00> : vector<1xf32>
    %75 = vector.multi_reduction <add>, %74, %cst_31 [1, 2] : vector<1x128x128xf32> to vector<1xf32>
    %76 = vector.shape_cast %75 : vector<1xf32> to vector<1x1x1xf32>
    %77 = vector.extract %76[0, 0, 0] : f32 from vector<1x1x1xf32>
    %cst_32 = arith.constant 0.000000e+00 : f32
    %78 = arith.cmpf oeq, %77, %cst_32 : f32
    %cst_33 = arith.constant 0.000000e+00 : f32
    %cst_34 = arith.constant 1.000000e+00 : f32
    %79 = arith.select %78, %cst_33, %cst_34 : f32
    %cst_35 = arith.constant dense<0.000000e+00> : vector<128xf32>
    %80 = vector.multi_reduction <add>, %71, %cst_35 [1] : vector<128x128xf32> to vector<128xf32>
    %81 = vector.shape_cast %80 : vector<128xf32> to vector<128x1xf32>
    %cst_36 = arith.constant 0.000000e+00 : f32
    %82 = vector.broadcast %cst_36 : f32 to vector<128x1xf32>
    %83 = arith.cmpf oeq, %81, %82 : vector<128x1xf32>
    %cst_37 = arith.constant 9.99999993E-9 : f32
    %84 = vector.broadcast %cst_37 : f32 to vector<128x128xf32>
    %85 = arith.addf %71, %84 : vector<128x128xf32>
    %86 = vector.shape_cast %83 : vector<128x1xi1> to vector<128x1xi1>
    %87 = vector.broadcast %86 : vector<128x1xi1> to vector<128x128xi1>
    %88 = arith.select %87, %85, %71 : vector<128x128xi1>, vector<128x128xf32>
    %89 = vector.extract_strided_slice %73 {offsets = [0, 0], sizes = [1, 128], strides = [1, 1]} : vector<2x128xf32> to vector<1x128xf32>
    %90 = vector.broadcast %89 : vector<1x128xf32> to vector<128x128xf32>
    %91 = arith.mulf %88, %90 : vector<128x128xf32>
    %92 = arith.mulf %91, %91 : vector<128x128xf32>
    %cst_38 = arith.constant dense<0.000000e+00> : vector<128xf32>
    %93 = vector.multi_reduction <add>, %92, %cst_38 [1] : vector<128x128xf32> to vector<128xf32>
    %94 = vector.shape_cast %93 : vector<128xf32> to vector<128x1xf32>
    %cst_39 = arith.constant 1.000000e-16 : f32
    %95 = vector.broadcast %cst_39 : f32 to vector<128x1xf32>
    %96 = arith.cmpf olt, %94, %95 : vector<128x1xf32>
    %97 = math.rsqrt %94 : vector<128x1xf32>
    %cst_40 = arith.constant 1.000000e+08 : f32
    %98 = vector.broadcast %cst_40 : f32 to vector<128x1xf32>
    %99 = arith.select %96, %98, %97 : vector<128x1xi1>, vector<128x1xf32>
    %100 = vector.broadcast %99 : vector<128x1xf32> to vector<128x128xf32>
    %101 = arith.mulf %91, %100 : vector<128x128xf32>
    %102 = vector.extract_strided_slice %73 {offsets = [1, 0], sizes = [1, 128], strides = [1, 1]} : vector<2x128xf32> to vector<1x128xf32>
    %103 = vector.broadcast %102 : vector<1x128xf32> to vector<128x128xf32>
    %104 = arith.mulf %88, %103 : vector<128x128xf32>
    %105 = arith.mulf %104, %104 : vector<128x128xf32>
    %cst_41 = arith.constant dense<0.000000e+00> : vector<128xf32>
    %106 = vector.multi_reduction <add>, %105, %cst_41 [1] : vector<128x128xf32> to vector<128xf32>
    %107 = vector.shape_cast %106 : vector<128xf32> to vector<128x1xf32>
    %cst_42 = arith.constant 1.000000e-16 : f32
    %108 = vector.broadcast %cst_42 : f32 to vector<128x1xf32>
    %109 = arith.cmpf olt, %107, %108 : vector<128x1xf32>
    %110 = math.rsqrt %107 : vector<128x1xf32>
    %cst_43 = arith.constant 1.000000e+08 : f32
    %111 = vector.broadcast %cst_43 : f32 to vector<128x1xf32>
    %112 = arith.select %109, %111, %110 : vector<128x1xi1>, vector<128x1xf32>
    %113 = vector.broadcast %112 : vector<128x1xf32> to vector<128x128xf32>
    %114 = arith.mulf %104, %113 : vector<128x128xf32>
    %115 = tpu.concatenate %101, %114 in 1 : vector<128x128xf32>, vector<128x128xf32> -> vector<128x256xf32>
    %116 = arith.truncf %115 : vector<128x256xf32> to vector<128x256xbf16>
    %cst_44 = arith.constant dense<0.000000e+00> : vector<128x128xf32>
    %117 = tpu.matmul %116, %116, %cst_44 {dimension_numbers = #tpu.dot_dimension_numbers<[1], [1], [0], [0], [0, 0, 1, 0], [], []>} : vector<128x256xbf16>, vector<128x256xbf16>, vector<128x128xf32> -> vector<128x128xf32>
    %cst_45 = arith.constant 2.000000e+00 : f32
    %118 = arith.divf %79, %cst_45 : f32
    %119 = vector.broadcast %118 : f32 to vector<128x128xf32>
    %120 = arith.mulf %117, %119 : vector<128x128xf32>
    %cst_46 = arith.constant 1.000000e-01 : f32
    %121 = vector.broadcast %cst_46 : f32 to vector<128x128xf32>
    %122 = arith.cmpf olt, %120, %121 : vector<128x128xf32>
    %cst_47 = arith.constant 0.000000e+00 : f32
    %123 = vector.broadcast %cst_47 : f32 to vector<128x128xf32>
    %124 = arith.select %122, %123, %120 : vector<128x128xi1>, vector<128x128xf32>
    %125 = arith.truncf %124 : vector<128x128xf32> to vector<128x128xbf16>
    %cst_48 = arith.constant dense<0.000000e+00> : vector<128x128xf32>
    %126 = tpu.matmul %1, %125, %cst_48 {dimension_numbers = #tpu.dot_dimension_numbers<[1], [0], [0], [1], [0, 0, 1, 1], [], []>} : vector<128x128xbf16>, vector<128x128xbf16>, vector<128x128xf32> -> vector<128x128xf32>
    %127 = math.absf %126 : vector<128x128xf32>
    %cst_49 = arith.constant dense<0.000000e+00> : vector<128xf32>
    %128 = vector.multi_reduction <add>, %127, %cst_49 [0] : vector<128x128xf32> to vector<128xf32>
    %129 = vector.shape_cast %128 : vector<128xf32> to vector<1x128xf32>
    %cst_50 = arith.constant 9.99999996E-13 : f32
    %130 = vector.broadcast %cst_50 : f32 to vector<1x128xf32>
    %131 = arith.maximumf %129, %130 : vector<1x128xf32>
    %cst_51 = arith.constant 1.000000e+00 : f32
    %132 = vector.broadcast %cst_51 : f32 to vector<1x128xf32>
    %133 = arith.divf %132, %131 : vector<1x128xf32>
    %134 = arith.index_cast %arg0 : i32 to index
    %c2 = arith.constant 2 : index
    %135 = memref.load %arg13[%134, %c2] : memref<3x4xf32, #tpu.memory_space<smem>>
    %136 = vector.broadcast %135 : f32 to vector<1x128xf32>
    %137 = arith.mulf %133, %136 : vector<1x128xf32>
    %138 = vector.broadcast %137 : vector<1x128xf32> to vector<128x128xf32>
    %139 = arith.mulf %126, %138 : vector<128x128xf32>
    %140 = arith.addf %70, %139 : vector<128x128xf32>
    %c0_52 = arith.constant 0 : index
    %c0_53 = arith.constant 0 : index
    %141 = vector.load %arg3[%c0_52, %c0_53] : memref<128x128xf32, #tpu.memory_space<vmem>>, vector<128x128xf32>
    %c0_54 = arith.constant 0 : index
    %c0_55 = arith.constant 0 : index
    %c0_56 = arith.constant 0 : index
    %142 = vector.load %arg5[%c0_54, %c0_55, %c0_56] : memref<1x128x128xf32, #tpu.memory_space<vmem>>, vector<1x128x128xf32>
    %143 = vector.shape_cast %142 : vector<1x128x128xf32> to vector<128x128xf32>
    %c0_57 = arith.constant 0 : index
    %c0_58 = arith.constant 0 : index
    %c0_59 = arith.constant 0 : index
    %144 = vector.load %arg6[%c0_57, %c0_58, %c0_59] : memref<1x1x128xf32, #tpu.memory_space<vmem>>, vector<1x1x128xf32>
    %145 = vector.shape_cast %144 : vector<1x1x128xf32> to vector<1x128xf32>
    %146 = arith.truncf %141 : vector<128x128xf32> to vector<128x128xbf16>
    %147 = arith.truncf %143 : vector<128x128xf32> to vector<128x128xbf16>
    %cst_60 = arith.constant dense<0.000000e+00> : vector<128x128xf32>
    %148 = tpu.matmul %146, %147, %cst_60 {dimension_numbers = #tpu.dot_dimension_numbers<[1], [0], [0], [1], [0, 0, 1, 1], [], []>} : vector<128x128xbf16>, vector<128x128xbf16>, vector<128x128xf32> -> vector<128x128xf32>
    %149 = vector.broadcast %145 : vector<1x128xf32> to vector<128x128xf32>
    %150 = arith.addf %148, %149 : vector<128x128xf32>
    %cst_61 = arith.constant 0.000000e+00 : f32
    %151 = vector.broadcast %cst_61 : f32 to vector<128x128xf32>
    %152 = arith.maximumf %150, %151 : vector<128x128xf32>
    %153 = vector.shape_cast %152 : vector<128x128xf32> to vector<1x128x128xf32>
    %cst_62 = arith.constant dense<0.000000e+00> : vector<1xf32>
    %154 = vector.multi_reduction <add>, %153, %cst_62 [1, 2] : vector<1x128x128xf32> to vector<1xf32>
    %155 = vector.shape_cast %154 : vector<1xf32> to vector<1x1x1xf32>
    %156 = vector.extract %155[0, 0, 0] : f32 from vector<1x1x1xf32>
    %cst_63 = arith.constant 0.000000e+00 : f32
    %157 = arith.cmpf oeq, %156, %cst_63 : f32
    %cst_64 = arith.constant 0.000000e+00 : f32
    %cst_65 = arith.constant 1.000000e+00 : f32
    %158 = arith.select %157, %cst_64, %cst_65 : f32
    %cst_66 = arith.constant dense<0.000000e+00> : vector<128xf32>
    %159 = vector.multi_reduction <add>, %152, %cst_66 [1] : vector<128x128xf32> to vector<128xf32>
    %160 = vector.shape_cast %159 : vector<128xf32> to vector<128x1xf32>
    %cst_67 = arith.constant 0.000000e+00 : f32
    %161 = vector.broadcast %cst_67 : f32 to vector<128x1xf32>
    %162 = arith.cmpf oeq, %160, %161 : vector<128x1xf32>
    %cst_68 = arith.constant 9.99999993E-9 : f32
    %163 = vector.broadcast %cst_68 : f32 to vector<128x128xf32>
    %164 = arith.addf %152, %163 : vector<128x128xf32>
    %165 = vector.shape_cast %162 : vector<128x1xi1> to vector<128x1xi1>
    %166 = vector.broadcast %165 : vector<128x1xi1> to vector<128x128xi1>
    %167 = arith.select %166, %164, %152 : vector<128x128xi1>, vector<128x128xf32>
    %c0_69 = arith.constant 0 : index
    %c0_70 = arith.constant 0 : index
    %c0_71 = arith.constant 0 : index
    %168 = vector.load %arg10[%c0_69, %c0_70, %c0_71] : memref<1x2x128xf32, #tpu.memory_space<vmem>>, vector<1x2x128xf32>
    %169 = vector.shape_cast %168 : vector<1x2x128xf32> to vector<2x128xf32>
    %170 = vector.extract_strided_slice %169 {offsets = [0, 0], sizes = [1, 128], strides = [1, 1]} : vector<2x128xf32> to vector<1x128xf32>
    %171 = vector.broadcast %170 : vector<1x128xf32> to vector<128x128xf32>
    %172 = arith.mulf %167, %171 : vector<128x128xf32>
    %173 = arith.mulf %172, %172 : vector<128x128xf32>
    %cst_72 = arith.constant dense<0.000000e+00> : vector<128xf32>
    %174 = vector.multi_reduction <add>, %173, %cst_72 [1] : vector<128x128xf32> to vector<128xf32>
    %175 = vector.shape_cast %174 : vector<128xf32> to vector<128x1xf32>
    %cst_73 = arith.constant 1.000000e-16 : f32
    %176 = vector.broadcast %cst_73 : f32 to vector<128x1xf32>
    %177 = arith.cmpf olt, %175, %176 : vector<128x1xf32>
    %178 = math.rsqrt %175 : vector<128x1xf32>
    %cst_74 = arith.constant 1.000000e+08 : f32
    %179 = vector.broadcast %cst_74 : f32 to vector<128x1xf32>
    %180 = arith.select %177, %179, %178 : vector<128x1xi1>, vector<128x1xf32>
    %181 = vector.broadcast %180 : vector<128x1xf32> to vector<128x128xf32>
    %182 = arith.mulf %172, %181 : vector<128x128xf32>
    %183 = vector.extract_strided_slice %169 {offsets = [1, 0], sizes = [1, 128], strides = [1, 1]} : vector<2x128xf32> to vector<1x128xf32>
    %184 = vector.broadcast %183 : vector<1x128xf32> to vector<128x128xf32>
    %185 = arith.mulf %167, %184 : vector<128x128xf32>
    %186 = arith.mulf %185, %185 : vector<128x128xf32>
    %cst_75 = arith.constant dense<0.000000e+00> : vector<128xf32>
    %187 = vector.multi_reduction <add>, %186, %cst_75 [1] : vector<128x128xf32> to vector<128xf32>
    %188 = vector.shape_cast %187 : vector<128xf32> to vector<128x1xf32>
    %cst_76 = arith.constant 1.000000e-16 : f32
    %189 = vector.broadcast %cst_76 : f32 to vector<128x1xf32>
    %190 = arith.cmpf olt, %188, %189 : vector<128x1xf32>
    %191 = math.rsqrt %188 : vector<128x1xf32>
    %cst_77 = arith.constant 1.000000e+08 : f32
    %192 = vector.broadcast %cst_77 : f32 to vector<128x1xf32>
    %193 = arith.select %190, %192, %191 : vector<128x1xi1>, vector<128x1xf32>
    %194 = vector.broadcast %193 : vector<128x1xf32> to vector<128x128xf32>
    %195 = arith.mulf %185, %194 : vector<128x128xf32>
    %196 = tpu.concatenate %182, %195 in 1 : vector<128x128xf32>, vector<128x128xf32> -> vector<128x256xf32>
    %197 = arith.truncf %196 : vector<128x256xf32> to vector<128x256xbf16>
    %c0_78 = arith.constant 0 : index
    %c0_79 = arith.constant 0 : index
    %198 = vector.load %arg15[%c0_78, %c0_79] : memref<128x256xbf16, #tpu.memory_space<vmem>>, vector<128x256xbf16>
    tpu.vector_store %arg15[%c0_78, %c0_79], %197 {strides = array<i32>} : memref<128x256xbf16, #tpu.memory_space<vmem>>, vector<128x256xbf16>,
    %199 = arith.index_cast %arg0 : i32 to index
    %200 = memref.load %arg1[%199] : memref<3xi32, #tpu.memory_space<smem>>
    %201 = arith.index_cast %arg0 : i32 to index
    %202 = memref.load %arg2[%201] : memref<3xi32, #tpu.memory_space<smem>>
    %203 = arith.cmpi ne, %200, %202 : i32
    %204 = arith.extui %203 : i1 to i32
    %c0_i32 = arith.constant 0 : i32
    %205 = arith.cmpi ne, %204, %c0_i32 : i32
    scf.if %205 {
      %c0_98 = arith.constant 0 : index
      %c0_99 = arith.constant 0 : index
      %247 = vector.load %arg4[%c0_98, %c0_99] : memref<128x128xf32, #tpu.memory_space<vmem>>, vector<128x128xf32>
      %c0_100 = arith.constant 0 : index
      %c0_101 = arith.constant 0 : index
      %c0_102 = arith.constant 0 : index
      %248 = vector.load %arg7[%c0_100, %c0_101, %c0_102] : memref<1x128x128xf32, #tpu.memory_space<vmem>>, vector<1x128x128xf32>
      %249 = vector.shape_cast %248 : vector<1x128x128xf32> to vector<128x128xf32>
      %c0_103 = arith.constant 0 : index
      %c0_104 = arith.constant 0 : index
      %c0_105 = arith.constant 0 : index
      %250 = vector.load %arg8[%c0_103, %c0_104, %c0_105] : memref<1x1x128xf32, #tpu.memory_space<vmem>>, vector<1x1x128xf32>
      %251 = vector.shape_cast %250 : vector<1x1x128xf32> to vector<1x128xf32>
      %252 = arith.truncf %247 : vector<128x128xf32> to vector<128x128xbf16>
      %253 = arith.truncf %249 : vector<128x128xf32> to vector<128x128xbf16>
      %cst_106 = arith.constant dense<0.000000e+00> : vector<128x128xf32>
      %254 = tpu.matmul %252, %253, %cst_106 {dimension_numbers = #tpu.dot_dimension_numbers<[1], [0], [0], [1], [0, 0, 1, 1], [], []>} : vector<128x128xbf16>, vector<128x128xbf16>, vector<128x128xf32> -> vector<128x128xf32>
      %255 = vector.broadcast %251 : vector<1x128xf32> to vector<128x128xf32>
      %256 = arith.addf %254, %255 : vector<128x128xf32>
      %cst_107 = arith.constant 0.000000e+00 : f32
      %257 = vector.broadcast %cst_107 : f32 to vector<128x128xf32>
      %258 = arith.maximumf %256, %257 : vector<128x128xf32>
      %259 = vector.shape_cast %258 : vector<128x128xf32> to vector<1x128x128xf32>
      %cst_108 = arith.constant dense<0.000000e+00> : vector<1xf32>
      %260 = vector.multi_reduction <add>, %259, %cst_108 [1, 2] : vector<1x128x128xf32> to vector<1xf32>
      %261 = vector.shape_cast %260 : vector<1xf32> to vector<1x1x1xf32>
      %262 = vector.extract %261[0, 0, 0] : f32 from vector<1x1x1xf32>
      %cst_109 = arith.constant 0.000000e+00 : f32
      %263 = arith.cmpf oeq, %262, %cst_109 : f32
      %cst_110 = arith.constant 0.000000e+00 : f32
      %cst_111 = arith.constant 1.000000e+00 : f32
      %264 = arith.select %263, %cst_110, %cst_111 : f32
      %c0_112 = arith.constant 0 : index
      %c0_113 = arith.constant 0 : index
      %c0_114 = arith.constant 0 : index
      %265 = vector.load %arg10[%c0_112, %c0_113, %c0_114] : memref<1x2x128xf32, #tpu.memory_space<vmem>>, vector<1x2x128xf32>
      %266 = vector.shape_cast %265 : vector<1x2x128xf32> to vector<2x128xf32>
      %267 = vector.extract_strided_slice %266 {offsets = [0, 0], sizes = [1, 128], strides = [1, 1]} : vector<2x128xf32> to vector<1x128xf32>
      %268 = vector.broadcast %267 : vector<1x128xf32> to vector<128x128xf32>
      %269 = arith.mulf %258, %268 : vector<128x128xf32>
      %270 = arith.mulf %269, %269 : vector<128x128xf32>
      %cst_115 = arith.constant dense<0.000000e+00> : vector<128xf32>
      %271 = vector.multi_reduction <add>, %270, %cst_115 [1] : vector<128x128xf32> to vector<128xf32>
      %272 = vector.shape_cast %271 : vector<128xf32> to vector<128x1xf32>
      %cst_116 = arith.constant 1.000000e-16 : f32
      %273 = vector.broadcast %cst_116 : f32 to vector<128x1xf32>
      %274 = arith.cmpf olt, %272, %273 : vector<128x1xf32>
      %275 = math.rsqrt %272 : vector<128x1xf32>
      %cst_117 = arith.constant 1.000000e+08 : f32
      %276 = vector.broadcast %cst_117 : f32 to vector<128x1xf32>
      %277 = arith.select %274, %276, %275 : vector<128x1xi1>, vector<128x1xf32>
      %278 = vector.broadcast %277 : vector<128x1xf32> to vector<128x128xf32>
      %279 = arith.mulf %269, %278 : vector<128x128xf32>
      %280 = vector.extract_strided_slice %266 {offsets = [1, 0], sizes = [1, 128], strides = [1, 1]} : vector<2x128xf32> to vector<1x128xf32>
      %281 = vector.broadcast %280 : vector<1x128xf32> to vector<128x128xf32>
      %282 = arith.mulf %258, %281 : vector<128x128xf32>
      %283 = arith.mulf %282, %282 : vector<128x128xf32>
      %cst_118 = arith.constant dense<0.000000e+00> : vector<128xf32>
      %284 = vector.multi_reduction <add>, %283, %cst_118 [1] : vector<128x128xf32> to vector<128xf32>
      %285 = vector.shape_cast %284 : vector<128xf32> to vector<128x1xf32>
      %cst_119 = arith.constant 1.000000e-16 : f32
      %286 = vector.broadcast %cst_119 : f32 to vector<128x1xf32>
      %287 = arith.cmpf olt, %285, %286 : vector<128x1xf32>
      %288 = math.rsqrt %285 : vector<128x1xf32>
      %cst_120 = arith.constant 1.000000e+08 : f32
      %289 = vector.broadcast %cst_120 : f32 to vector<128x1xf32>
      %290 = arith.select %287, %289, %288 : vector<128x1xi1>, vector<128x1xf32>
      %291 = vector.broadcast %290 : vector<128x1xf32> to vector<128x128xf32>
      %292 = arith.mulf %282, %291 : vector<128x128xf32>
      %293 = tpu.concatenate %279, %292 in 1 : vector<128x128xf32>, vector<128x128xf32> -> vector<128x256xf32>
      %294 = vector.broadcast %264 : f32 to vector<128x256xf32>
      %295 = arith.mulf %293, %294 : vector<128x256xf32>
      %296 = arith.truncf %295 : vector<128x256xf32> to vector<128x256xbf16>
      %c0_121 = arith.constant 0 : index
      %c0_122 = arith.constant 0 : index
      %297 = vector.load %arg15[%c0_121, %c0_122] : memref<128x256xbf16, #tpu.memory_space<vmem>>, vector<128x256xbf16>
      tpu.vector_store %arg15[%c0_121, %c0_122], %296 {strides = array<i32>} : memref<128x256xbf16, #tpu.memory_space<vmem>>, vector<128x256xbf16>,
    } else {
    }
    %c0_80 = arith.constant 0 : index
    %c0_81 = arith.constant 0 : index
    %206 = vector.load %arg15[%c0_80, %c0_81] : memref<128x256xbf16, #tpu.memory_space<vmem>>, vector<128x256xbf16>
    %cst_82 = arith.constant dense<0.000000e+00> : vector<128x128xf32>
    %207 = tpu.matmul %197, %206, %cst_82 {dimension_numbers = #tpu.dot_dimension_numbers<[1], [1], [0], [0], [0, 0, 1, 0], [], []>} : vector<128x256xbf16>, vector<128x256xbf16>, vector<128x128xf32> -> vector<128x128xf32>
    %cst_83 = arith.constant 2.000000e+00 : f32
    %208 = arith.divf %158, %cst_83 : f32
    %209 = vector.broadcast %208 : f32 to vector<128x128xf32>
    %210 = arith.mulf %207, %209 : vector<128x128xf32>
    %cst_84 = arith.constant 1.000000e-01 : f32
    %211 = vector.broadcast %cst_84 : f32 to vector<128x128xf32>
    %212 = arith.cmpf olt, %210, %211 : vector<128x128xf32>
    %cst_85 = arith.constant 0.000000e+00 : f32
    %213 = vector.broadcast %cst_85 : f32 to vector<128x128xf32>
    %214 = arith.select %212, %213, %210 : vector<128x128xi1>, vector<128x128xf32>
    %215 = math.absf %214 : vector<128x128xf32>
    %cst_86 = arith.constant dense<0.000000e+00> : vector<128xf32>
    %216 = vector.multi_reduction <add>, %215, %cst_86 [0] : vector<128x128xf32> to vector<128xf32>
    %217 = vector.shape_cast %216 : vector<128xf32> to vector<1x128xf32>
    %cst_87 = arith.constant 9.99999996E-13 : f32
    %218 = vector.broadcast %cst_87 : f32 to vector<1x128xf32>
    %219 = arith.maximumf %217, %218 : vector<1x128xf32>
    %cst_88 = arith.constant 1.000000e+00 : f32
    %220 = vector.broadcast %cst_88 : f32 to vector<1x128xf32>
    %221 = arith.divf %220, %219 : vector<1x128xf32>
    %222 = arith.index_cast %arg0 : i32 to index
    %c0_89 = arith.constant 0 : index
    %223 = memref.load %arg13[%222, %c0_89] : memref<3x4xf32, #tpu.memory_space<smem>>
    %224 = vector.broadcast %223 : f32 to vector<1x128xf32>
    %225 = arith.mulf %221, %224 : vector<1x128xf32>
    %226 = vector.broadcast %225 : vector<1x128xf32> to vector<128x128xf32>
    %227 = arith.mulf %214, %226 : vector<128x128xf32>
    %228 = arith.addf %140, %227 : vector<128x128xf32>
    %c0_90 = arith.constant 0 : index
    %c0_91 = arith.constant 0 : index
    %229 = vector.load %arg9[%c0_90, %c0_91] : memref<128x128xf32, #tpu.memory_space<vmem>>, vector<128x128xf32>
    %230 = math.absf %229 : vector<128x128xf32>
    %cst_92 = arith.constant dense<0.000000e+00> : vector<128xf32>
    %231 = vector.multi_reduction <add>, %230, %cst_92 [0] : vector<128x128xf32> to vector<128xf32>
    %232 = vector.shape_cast %231 : vector<128xf32> to vector<1x128xf32>
    %cst_93 = arith.constant 9.99999996E-13 : f32
    %233 = vector.broadcast %cst_93 : f32 to vector<1x128xf32>
    %234 = arith.maximumf %232, %233 : vector<1x128xf32>
    %cst_94 = arith.constant 1.000000e+00 : f32
    %235 = vector.broadcast %cst_94 : f32 to vector<1x128xf32>
    %236 = arith.divf %235, %234 : vector<1x128xf32>
    %237 = arith.index_cast %arg0 : i32 to index
    %c3 = arith.constant 3 : index
    %238 = memref.load %arg13[%237, %c3] : memref<3x4xf32, #tpu.memory_space<smem>>
    %239 = vector.broadcast %238 : f32 to vector<1x128xf32>
    %240 = arith.mulf %236, %239 : vector<1x128xf32>
    %241 = vector.broadcast %240 : vector<1x128xf32> to vector<128x128xf32>
    %242 = arith.mulf %229, %241 : vector<128x128xf32>
    %243 = arith.addf %228, %242 : vector<128x128xf32>
    %c0_95 = arith.constant 0 : index
    %c0_96 = arith.constant 0 : index
    %c0_97 = arith.constant 0 : index
    %244 = vector.load %arg14[%c0_95, %c0_96, %c0_97] : memref<1x128x128xf32, #tpu.memory_space<vmem>>, vector<1x128x128xf32>
    %245 = vector.shape_cast %244 : vector<1x128x128xf32> to vector<128x128xf32>
    %246 = vector.shape_cast %243 : vector<128x128xf32> to vector<1x128x128xf32>
    tpu.vector_store %arg14[%c0_95, %c0_96, %c0_97], %246 {strides = array<i32>} : memref<1x128x128xf32, #tpu.memory_space<vmem>>, vector<1x128x128xf32>,
    return
  }
  func.func @transform_0(%arg0: i32, %arg1: memref<3xi32, #tpu.memory_space<smem>>, %arg2: memref<3xi32, #tpu.memory_space<smem>>) -> (i32, i32) {
    %0 = arith.index_cast %arg0 : i32 to index
    %1 = memref.load %arg1[%0] : memref<3xi32, #tpu.memory_space<smem>>
    %c0_i32 = arith.constant 0 : i32
    %c0_i32_0 = arith.constant 0 : i32
    return %1, %c0_i32 : i32, i32
  }
  func.func @transform_1(%arg0: i32, %arg1: memref<3xi32, #tpu.memory_space<smem>>, %arg2: memref<3xi32, #tpu.memory_space<smem>>) -> (i32, i32) {
    %0 = arith.index_cast %arg0 : i32 to index
    %1 = memref.load %arg2[%0] : memref<3xi32, #tpu.memory_space<smem>>
    %c0_i32 = arith.constant 0 : i32
    %c0_i32_0 = arith.constant 0 : i32
    return %1, %c0_i32 : i32, i32
  }
  func.func @transform_2(%arg0: i32, %arg1: memref<3xi32, #tpu.memory_space<smem>>, %arg2: memref<3xi32, #tpu.memory_space<smem>>) -> (i32, i32, i32) {
    %0 = arith.index_cast %arg0 : i32 to index
    %1 = memref.load %arg1[%0] : memref<3xi32, #tpu.memory_space<smem>>
    %c0_i32 = arith.constant 0 : i32
    %c0_i32_0 = arith.constant 0 : i32
    %c0_i32_1 = arith.constant 0 : i32
    return %1, %c0_i32, %c0_i32_0 : i32, i32, i32
  }
  func.func @transform_3(%arg0: i32, %arg1: memref<3xi32, #tpu.memory_space<smem>>, %arg2: memref<3xi32, #tpu.memory_space<smem>>) -> (i32, i32, i32) {
    %0 = arith.index_cast %arg0 : i32 to index
    %1 = memref.load %arg1[%0] : memref<3xi32, #tpu.memory_space<smem>>
    %c0_i32 = arith.constant 0 : i32
    %c0_i32_0 = arith.constant 0 : i32
    %c0_i32_1 = arith.constant 0 : i32
    return %1, %c0_i32, %c0_i32_0 : i32, i32, i32
  }
  func.func @transform_4(%arg0: i32, %arg1: memref<3xi32, #tpu.memory_space<smem>>, %arg2: memref<3xi32, #tpu.memory_space<smem>>) -> (i32, i32, i32) {
    %0 = arith.index_cast %arg0 : i32 to index
    %1 = memref.load %arg2[%0] : memref<3xi32, #tpu.memory_space<smem>>
    %c0_i32 = arith.constant 0 : i32
    %c0_i32_0 = arith.constant 0 : i32
    %c0_i32_1 = arith.constant 0 : i32
    return %1, %c0_i32, %c0_i32_0 : i32, i32, i32
  }
  func.func @transform_5(%arg0: i32, %arg1: memref<3xi32, #tpu.memory_space<smem>>, %arg2: memref<3xi32, #tpu.memory_space<smem>>) -> (i32, i32, i32) {
    %0 = arith.index_cast %arg0 : i32 to index
    %1 = memref.load %arg2[%0] : memref<3xi32, #tpu.memory_space<smem>>
    %c0_i32 = arith.constant 0 : i32
    %c0_i32_0 = arith.constant 0 : i32
    %c0_i32_1 = arith.constant 0 : i32
    return %1, %c0_i32, %c0_i32_0 : i32, i32, i32
  }
  func.func @transform_6(%arg0: i32, %arg1: memref<3xi32, #tpu.memory_space<smem>>, %arg2: memref<3xi32, #tpu.memory_space<smem>>) -> (i32, i32) {
    %0 = arith.index_cast %arg0 : i32 to index
    %1 = memref.load %arg2[%0] : memref<3xi32, #tpu.memory_space<smem>>
    %2 = arith.index_cast %arg0 : i32 to index
    %3 = memref.load %arg1[%2] : memref<3xi32, #tpu.memory_space<smem>>
    %c0_i32 = arith.constant 0 : i32
    return %1, %3 : i32, i32
  }
  func.func @transform_7(%arg0: i32, %arg1: memref<3xi32, #tpu.memory_space<smem>>, %arg2: memref<3xi32, #tpu.memory_space<smem>>) -> (i32, i32, i32) {
    %c0_i32 = arith.constant 0 : i32
    %c0_i32_0 = arith.constant 0 : i32
    %c0_i32_1 = arith.constant 0 : i32
    return %arg0, %c0_i32, %c0_i32_0 : i32, i32, i32
  }
  func.func @transform_8(%arg0: i32, %arg1: memref<3xi32, #tpu.memory_space<smem>>, %arg2: memref<3xi32, #tpu.memory_space<smem>>) -> (i32, i32, i32) {
    %c0_i32 = arith.constant 0 : i32
    %c0_i32_0 = arith.constant 0 : i32
    %c0_i32_1 = arith.constant 0 : i32
    return %arg0, %c0_i32, %c0_i32_0 : i32, i32, i32
  }
  func.func @transform_9(%arg0: i32, %arg1: memref<3xi32, #tpu.memory_space<smem>>, %arg2: memref<3xi32, #tpu.memory_space<smem>>) -> (i32, i32, i32) {
    %c0_i32 = arith.constant 0 : i32
    %c0_i32_0 = arith.constant 0 : i32
    %c0_i32_1 = arith.constant 0 : i32
    return %arg0, %c0_i32, %c0_i32_0 : i32, i32, i32
  }
  func.func @transform_10(%arg0: i32, %arg1: memref<3xi32, #tpu.memory_space<smem>>, %arg2: memref<3xi32, #tpu.memory_space<smem>>) -> (i32, i32) {
    %c0_i32 = arith.constant 0 : i32
    %c0_i32_0 = arith.constant 0 : i32
    %c0_i32_1 = arith.constant 0 : i32
    return %c0_i32, %c0_i32_0 : i32, i32
  }
  func.func @transform_11(%arg0: i32, %arg1: memref<3xi32, #tpu.memory_space<smem>>, %arg2: memref<3xi32, #tpu.memory_space<smem>>) -> (i32, i32, i32) {
    %c0_i32 = arith.constant 0 : i32
    %c0_i32_0 = arith.constant 0 : i32
    %c0_i32_1 = arith.constant 0 : i32
    return %arg0, %c0_i32, %c0_i32_0 : i32, i32, i32
  }
}

module attributes {stable_mosaic.version = 11 : i64} {
  func.func @_finalize_kernel(%arg0: memref<3x128x128xf32, #tpu.memory_space<vmem>>, %arg1: memref<256x256xf32, #tpu.memory_space<vmem>>) attributes {dimension_semantics = [], scalar_prefetch = 0 : i64, scratch_operands = 0 : i64, tpu.core_type = #tpu.core_type<tc>} {
    %c0 = arith.constant 0 : index
    %c0_0 = arith.constant 0 : index
    %c0_1 = arith.constant 0 : index
    %0 = vector.load %arg0[%c0, %c0_0, %c0_1] : memref<3x128x128xf32, #tpu.memory_space<vmem>>, vector<1x128x128xf32>
    %1 = vector.shape_cast %0 : vector<1x128x128xf32> to vector<128x128xf32>
    %c1 = arith.constant 1 : index
    %c0_2 = arith.constant 0 : index
    %c0_3 = arith.constant 0 : index
    %2 = vector.load %arg0[%c1, %c0_2, %c0_3] : memref<3x128x128xf32, #tpu.memory_space<vmem>>, vector<1x128x128xf32>
    %3 = vector.shape_cast %2 : vector<1x128x128xf32> to vector<128x128xf32>
    %c2 = arith.constant 2 : index
    %c0_4 = arith.constant 0 : index
    %c0_5 = arith.constant 0 : index
    %4 = vector.load %arg0[%c2, %c0_4, %c0_5] : memref<3x128x128xf32, #tpu.memory_space<vmem>>, vector<1x128x128xf32>
    %5 = vector.shape_cast %4 : vector<1x128x128xf32> to vector<128x128xf32>
    %6 = tpu.transpose %1, [1, 0] : vector<128x128xf32> -> vector<128x128xf32>
    %7 = arith.addf %1, %6 : vector<128x128xf32>
    %8 = tpu.transpose %3, [1, 0] : vector<128x128xf32> -> vector<128x128xf32>
    %9 = arith.addf %3, %8 : vector<128x128xf32>
    %10 = tpu.transpose %5, [1, 0] : vector<128x128xf32> -> vector<128x128xf32>
    %11 = math.absf %7 : vector<128x128xf32>
    %cst = arith.constant dense<0.000000e+00> : vector<128xf32>
    %12 = vector.multi_reduction <add>, %11, %cst [0] : vector<128x128xf32> to vector<128xf32>
    %13 = vector.shape_cast %12 : vector<128xf32> to vector<1x128xf32>
    %14 = math.absf %5 : vector<128x128xf32>
    %cst_6 = arith.constant dense<0.000000e+00> : vector<128xf32>
    %15 = vector.multi_reduction <add>, %14, %cst_6 [0] : vector<128x128xf32> to vector<128xf32>
    %16 = vector.shape_cast %15 : vector<128xf32> to vector<1x128xf32>
    %17 = arith.addf %13, %16 : vector<1x128xf32>
    %18 = math.absf %10 : vector<128x128xf32>
    %cst_7 = arith.constant dense<0.000000e+00> : vector<128xf32>
    %19 = vector.multi_reduction <add>, %18, %cst_7 [0] : vector<128x128xf32> to vector<128xf32>
    %20 = vector.shape_cast %19 : vector<128xf32> to vector<1x128xf32>
    %21 = math.absf %9 : vector<128x128xf32>
    %cst_8 = arith.constant dense<0.000000e+00> : vector<128xf32>
    %22 = vector.multi_reduction <add>, %21, %cst_8 [0] : vector<128x128xf32> to vector<128xf32>
    %23 = vector.shape_cast %22 : vector<128xf32> to vector<1x128xf32>
    %24 = arith.addf %20, %23 : vector<1x128xf32>
    %cst_9 = arith.constant 9.99999996E-13 : f32
    %25 = vector.broadcast %cst_9 : f32 to vector<1x128xf32>
    %26 = arith.maximumf %17, %25 : vector<1x128xf32>
    %cst_10 = arith.constant 1.000000e+00 : f32
    %27 = vector.broadcast %cst_10 : f32 to vector<1x128xf32>
    %28 = arith.divf %27, %26 : vector<1x128xf32>
    %cst_11 = arith.constant 9.99999996E-13 : f32
    %29 = vector.broadcast %cst_11 : f32 to vector<1x128xf32>
    %30 = arith.maximumf %24, %29 : vector<1x128xf32>
    %cst_12 = arith.constant 1.000000e+00 : f32
    %31 = vector.broadcast %cst_12 : f32 to vector<1x128xf32>
    %32 = arith.divf %31, %30 : vector<1x128xf32>
    %33 = vector.broadcast %28 : vector<1x128xf32> to vector<128x128xf32>
    %34 = arith.mulf %7, %33 : vector<128x128xf32>
    %c0_13 = arith.constant 0 : index
    %c0_14 = arith.constant 0 : index
    %35 = vector.load %arg1[%c0_13, %c0_14] : memref<256x256xf32, #tpu.memory_space<vmem>>, vector<128x128xf32>
    tpu.vector_store %arg1[%c0_13, %c0_14], %34 {strides = array<i32>} : memref<256x256xf32, #tpu.memory_space<vmem>>, vector<128x128xf32>,
    %36 = vector.broadcast %28 : vector<1x128xf32> to vector<128x128xf32>
    %37 = arith.mulf %5, %36 : vector<128x128xf32>
    %c128 = arith.constant 128 : index
    %c0_15 = arith.constant 0 : index
    %38 = vector.load %arg1[%c128, %c0_15] : memref<256x256xf32, #tpu.memory_space<vmem>>, vector<128x128xf32>
    tpu.vector_store %arg1[%c128, %c0_15], %37 {strides = array<i32>} : memref<256x256xf32, #tpu.memory_space<vmem>>, vector<128x128xf32>,
    %39 = vector.broadcast %32 : vector<1x128xf32> to vector<128x128xf32>
    %40 = arith.mulf %10, %39 : vector<128x128xf32>
    %c0_16 = arith.constant 0 : index
    %c128_17 = arith.constant 128 : index
    %41 = vector.load %arg1[%c0_16, %c128_17] : memref<256x256xf32, #tpu.memory_space<vmem>>, vector<128x128xf32>
    tpu.vector_store %arg1[%c0_16, %c128_17], %40 {strides = array<i32>} : memref<256x256xf32, #tpu.memory_space<vmem>>, vector<128x128xf32>,
    %42 = vector.broadcast %32 : vector<1x128xf32> to vector<128x128xf32>
    %43 = arith.mulf %9, %42 : vector<128x128xf32>
    %c128_18 = arith.constant 128 : index
    %c128_19 = arith.constant 128 : index
    %44 = vector.load %arg1[%c128_18, %c128_19] : memref<256x256xf32, #tpu.memory_space<vmem>>, vector<128x128xf32>
    tpu.vector_store %arg1[%c128_18, %c128_19], %43 {strides = array<i32>} : memref<256x256xf32, #tpu.memory_space<vmem>>, vector<128x128xf32>,
    return
  }
}

</mosaic_0001>

<llo_original>
// kernel: dhgslm_forward.3
$region0: #{dhgslm_forward.3}
  #allocation0 [shape = 'u32[]', space=smem, size = 0x4, offset = 0x4, fixed_abs, tag = 'smem constant byte address 0x4 - core index']
  #allocation1 [shape = 'u32[144,128]{1,0:T(1,128)}', space=vmem, size = 0x12000, scoped, tag = 'internal scratch']
  %s0 = inlined_call_operand.vmem [shape: f32[3,128,128], index: 0, kind: input, shape index: {}]
  %s1 = inlined_call_operand.hbm [shape: f32[256,256], index: 1, kind: output, shape index: {}]
  %s2 = sld [smem:[#allocation0]]
  $region14: #{dhgslm_forward.3} parent=0
    _
  %s4 = ssub.s32 1, %s2
  %s5 = scalar_select 0, %s4, %s2
  $region1: #{dhgslm_forward.3} parent=0
    #allocation2 [shape = 'u8[262144]{0}', space=vmem, size = 0x40000, scoped, tag = 'output window, operand 0, single buffered']
    #allocation3 [shape = 's32[1]{0}', space=sflag, size = 0x4, scoped, tag = 'scoped memory for dhgslm_forward.3']
    %6 = vsyncpa [#allocation3], 0
    // Predicated region
    $region2: #{dhgslm_forward.3} parent=1 // pred_check
      _
    $region3: #{dhgslm_forward.3} parent=1 // pred_check_branch
      %8 = sbr.rel (0) target = $region5
    $region4: #{dhgslm_forward.3} parent=1 // pred_region
      _
    $region5: #{dhgslm_forward.3} parent=1 // pred_fallthru
      _
    %v9 = vld [vmem:[%s0] sm:$0xff]
    %v10 = vld [vmem:[%s0 + $0x8] sm:$0xff]
    %v11 = vld [vmem:[%s0 + $0x10] sm:$0xff]
    %v12 = vld [vmem:[%s0 + $0x18] sm:$0xff]
    %v13 = vld [vmem:[%s0 + $0x20] sm:$0xff]
    %v14 = vld [vmem:[%s0 + $0x28] sm:$0xff]
    %v15 = vld [vmem:[%s0 + $0x30] sm:$0xff]
    %v16 = vld [vmem:[%s0 + $0x38] sm:$0xff]
    %v17 = vld [vmem:[%s0 + $0x40] sm:$0xff]
    %v18 = vld [vmem:[%s0 + $0x48] sm:$0xff]
    %v19 = vld [vmem:[%s0 + $0x50] sm:$0xff]
    %v20 = vld [vmem:[%s0 + $0x58] sm:$0xff]
    %v21 = vld [vmem:[%s0 + $0x60] sm:$0xff]
    %v22 = vld [vmem:[%s0 + $0x68] sm:$0xff]
    %v23 = vld [vmem:[%s0 + $0x70] sm:$0xff]
    %v24 = vld [vmem:[%s0 + $0x78] sm:$0xff]
    %s25 = scalar_lea.vmem %s0, 128
    %v26 = vld [vmem:[%s25] sm:$0xff]
    %v27 = vld [vmem:[%s25 + $0x8] sm:$0xff]
    %v28 = vld [vmem:[%s25 + $0x10] sm:$0xff]
    %v29 = vld [vmem:[%s25 + $0x18] sm:$0xff]
    %v30 = vld [vmem:[%s25 + $0x20] sm:$0xff]
    %v31 = vld [vmem:[%s25 + $0x28] sm:$0xff]
    %v32 = vld [vmem:[%s25 + $0x30] sm:$0xff]
    %v33 = vld [vmem:[%s25 + $0x38] sm:$0xff]
    %v34 = vld [vmem:[%s25 + $0x40] sm:$0xff]
    %v35 = vld [vmem:[%s25 + $0x48] sm:$0xff]
    %v36 = vld [vmem:[%s25 + $0x50] sm:$0xff]
    %v37 = vld [vmem:[%s25 + $0x58] sm:$0xff]
    %v38 = vld [vmem:[%s25 + $0x60] sm:$0xff]
    %v39 = vld [vmem:[%s25 + $0x68] sm:$0xff]
    %v40 = vld [vmem:[%s25 + $0x70] sm:$0xff]
    %v41 = vld [vmem:[%s25 + $0x78] sm:$0xff]
    %s42 = scalar_lea.vmem %s0, 256
    %v43 = vld [vmem:[%s42] sm:$0xff]
    %v44 = vld [vmem:[%s42 + $0x8] sm:$0xff]
    %v45 = vld [vmem:[%s42 + $0x10] sm:$0xff]
    %v46 = vld [vmem:[%s42 + $0x18] sm:$0xff]
    %v47 = vld [vmem:[%s42 + $0x20] sm:$0xff]
    %v48 = vld [vmem:[%s42 + $0x28] sm:$0xff]
    %v49 = vld [vmem:[%s42 + $0x30] sm:$0xff]
    %v50 = vld [vmem:[%s42 + $0x38] sm:$0xff]
    %v51 = vld [vmem:[%s42 + $0x40] sm:$0xff]
    %v52 = vld [vmem:[%s42 + $0x48] sm:$0xff]
    %v53 = vld [vmem:[%s42 + $0x50] sm:$0xff]
    %v54 = vld [vmem:[%s42 + $0x58] sm:$0xff]
    %v55 = vld [vmem:[%s42 + $0x60] sm:$0xff]
    %v56 = vld [vmem:[%s42 + $0x68] sm:$0xff]
    %v57 = vld [vmem:[%s42 + $0x70] sm:$0xff]
    %v58 = vld [vmem:[%s42 + $0x78] sm:$0xff]
    %59 = vxpose.xlu0.b32.start [1/16] %v9, 128
    %60 = vxpose.xlu0.b32.cont [2/16] %v10, 128
    %61 = vxpose.xlu0.b32.cont [3/16] %v11, 128
    %62 = vxpose.xlu0.b32.cont [4/16] %v12, 128
    %63 = vxpose.xlu0.b32.cont [5/16] %v13, 128
    %64 = vxpose.xlu0.b32.cont [6/16] %v14, 128
    %65 = vxpose.xlu0.b32.cont [7/16] %v15, 128
    %66 = vxpose.xlu0.b32.cont [8/16] %v16, 128
    %67 = vxpose.xlu0.b32.cont [9/16] %v17, 128
    %68 = vxpose.xlu0.b32.cont [10/16] %v18, 128
    %69 = vxpose.xlu0.b32.cont [11/16] %v19, 128
    %70 = vxpose.xlu0.b32.cont [12/16] %v20, 128
    %71 = vxpose.xlu0.b32.cont [13/16] %v21, 128
    %72 = vxpose.xlu0.b32.cont [14/16] %v22, 128
    %73 = vxpose.xlu0.b32.cont [15/16] %v23, 128
    %74 = vxpose.xlu0.b32.end [16/16] %v24, 128
    %v75 = vpop.trf.xlu0
    %v76 = vpop.trf.xlu0
    %v77 = vpop.trf.xlu0
    %v78 = vpop.trf.xlu0
    %v79 = vpop.trf.xlu0
    %v80 = vpop.trf.xlu0
    %v81 = vpop.trf.xlu0
    %v82 = vpop.trf.xlu0
    %v83 = vpop.trf.xlu0
    %v84 = vpop.trf.xlu0
    %v85 = vpop.trf.xlu0
    %v86 = vpop.trf.xlu0
    %v87 = vpop.trf.xlu0
    %v88 = vpop.trf.xlu0
    %v89 = vpop.trf.xlu0
    %v90 = vpop.trf.xlu0
    %v91 = vadd.f32 %v9, %v75
    %v92 = vadd.f32 %v10, %v76
    %v93 = vadd.f32 %v11, %v77
    %v94 = vadd.f32 %v12, %v78
    %v95 = vadd.f32 %v13, %v79
    %v96 = vadd.f32 %v14, %v80
    %v97 = vadd.f32 %v15, %v81
    %v98 = vadd.f32 %v16, %v82
    %v99 = vadd.f32 %v17, %v83
    %v100 = vadd.f32 %v18, %v84
    %v101 = vadd.f32 %v19, %v85
    %v102 = vadd.f32 %v20, %v86
    %v103 = vadd.f32 %v21, %v87
    %v104 = vadd.f32 %v22, %v88
    %v105 = vadd.f32 %v23, %v89
    %v106 = vadd.f32 %v24, %v90
    %107 = vxpose.xlu0.b32.start [1/16] %v26, 128
    %108 = vxpose.xlu0.b32.cont [2/16] %v27, 128
    %109 = vxpose.xlu0.b32.cont [3/16] %v28, 128
    %110 = vxpose.xlu0.b32.cont [4/16] %v29, 128
    %111 = vxpose.xlu0.b32.cont [5/16] %v30, 128
    %112 = vxpose.xlu0.b32.cont [6/16] %v31, 128
    %113 = vxpose.xlu0.b32.cont [7/16] %v32, 128
    %114 = vxpose.xlu0.b32.cont [8/16] %v33, 128
    %115 = vxpose.xlu0.b32.cont [9/16] %v34, 128
    %116 = vxpose.xlu0.b32.cont [10/16] %v35, 128
    %117 = vxpose.xlu0.b32.cont [11/16] %v36, 128
    %118 = vxpose.xlu0.b32.cont [12/16] %v37, 128
    %119 = vxpose.xlu0.b32.cont [13/16] %v38, 128
    %120 = vxpose.xlu0.b32.cont [14/16] %v39, 128
    %121 = vxpose.xlu0.b32.cont [15/16] %v40, 128
    %122 = vxpose.xlu0.b32.end [16/16] %v41, 128
    %v123 = vpop.trf.xlu0
    %v124 = vpop.trf.xlu0
    %v125 = vpop.trf.xlu0
    %v126 = vpop.trf.xlu0
    %v127 = vpop.trf.xlu0
    %v128 = vpop.trf.xlu0
    %v129 = vpop.trf.xlu0
    %v130 = vpop.trf.xlu0
    %v131 = vpop.trf.xlu0
    %v132 = vpop.trf.xlu0
    %v133 = vpop.trf.xlu0
    %v134 = vpop.trf.xlu0
    %v135 = vpop.trf.xlu0
    %v136 = vpop.trf.xlu0
    %v137 = vpop.trf.xlu0
    %v138 = vpop.trf.xlu0
    %v139 = vadd.f32 %v26, %v123
    %v140 = vadd.f32 %v27, %v124
    %v141 = vadd.f32 %v28, %v125
    %v142 = vadd.f32 %v29, %v126
    %v143 = vadd.f32 %v30, %v127
    %v144 = vadd.f32 %v31, %v128
    %v145 = vadd.f32 %v32, %v129
    %v146 = vadd.f32 %v33, %v130
    %v147 = vadd.f32 %v34, %v131
    %v148 = vadd.f32 %v35, %v132
    %v149 = vadd.f32 %v36, %v133
    %v150 = vadd.f32 %v37, %v134
    %v151 = vadd.f32 %v38, %v135
    %v152 = vadd.f32 %v39, %v136
    %v153 = vadd.f32 %v40, %v137
    %v154 = vadd.f32 %v41, %v138
    %155 = vxpose.xlu0.b32.start [1/16] %v43, 128
    %156 = vxpose.xlu0.b32.cont [2/16] %v44, 128
    %157 = vxpose.xlu0.b32.cont [3/16] %v45, 128
    %158 = vxpose.xlu0.b32.cont [4/16] %v46, 128
    %159 = vxpose.xlu0.b32.cont [5/16] %v47, 128
    %160 = vxpose.xlu0.b32.cont [6/16] %v48, 128
    %161 = vxpose.xlu0.b32.cont [7/16] %v49, 128
    %162 = vxpose.xlu0.b32.cont [8/16] %v50, 128
    %163 = vxpose.xlu0.b32.cont [9/16] %v51, 128
    %164 = vxpose.xlu0.b32.cont [10/16] %v52, 128
    %165 = vxpose.xlu0.b32.cont [11/16] %v53, 128
    %166 = vxpose.xlu0.b32.cont [12/16] %v54, 128
    %167 = vxpose.xlu0.b32.cont [13/16] %v55, 128
    %168 = vxpose.xlu0.b32.cont [14/16] %v56, 128
    %169 = vxpose.xlu0.b32.cont [15/16] %v57, 128
    %170 = vxpose.xlu0.b32.end [16/16] %v58, 128
    %v171 = vpop.trf.xlu0
    %v172 = vpop.trf.xlu0
    %v173 = vpop.trf.xlu0
    %v174 = vpop.trf.xlu0
    %v175 = vpop.trf.xlu0
    %v176 = vpop.trf.xlu0
    %v177 = vpop.trf.xlu0
    %v178 = vpop.trf.xlu0
    %v179 = vpop.trf.xlu0
    %v180 = vpop.trf.xlu0
    %v181 = vpop.trf.xlu0
    %v182 = vpop.trf.xlu0
    %v183 = vpop.trf.xlu0
    %v184 = vpop.trf.xlu0
    %v185 = vpop.trf.xlu0
    %v186 = vpop.trf.xlu0
    %v187 = vand.u32 2147483647, %v91
    %v188 = vand.u32 2147483647, %v92
    %v189 = vand.u32 2147483647, %v93
    %v190 = vand.u32 2147483647, %v94
    %v191 = vand.u32 2147483647, %v95
    %v192 = vand.u32 2147483647, %v96
    %v193 = vand.u32 2147483647, %v97
    %v194 = vand.u32 2147483647, %v98
    %v195 = vand.u32 2147483647, %v99
    %v196 = vand.u32 2147483647, %v100
    %v197 = vand.u32 2147483647, %v101
    %v198 = vand.u32 2147483647, %v102
    %v199 = vand.u32 2147483647, %v103
    %v200 = vand.u32 2147483647, %v104
    %v201 = vand.u32 2147483647, %v105
    %v202 = vand.u32 2147483647, %v106
    %v203 = vadd.f32 %v187, %v188
    %v204 = vadd.f32 %v203, %v189
    %v205 = vadd.f32 %v204, %v190
    %v206 = vadd.f32 %v205, %v191
    %v207 = vadd.f32 %v206, %v192
    %v208 = vadd.f32 %v207, %v193
    %v209 = vadd.f32 %v208, %v194
    %v210 = vadd.f32 %v209, %v195
    %v211 = vadd.f32 %v210, %v196
    %v212 = vadd.f32 %v211, %v197
    %v213 = vadd.f32 %v212, %v198
    %v214 = vadd.f32 %v213, %v199
    %v215 = vadd.f32 %v214, %v200
    %v216 = vadd.f32 %v215, %v201
    %v217 = vadd.f32 %v216, %v202
    %v218 = vrot.slane %v217, 4
    %v219 = vadd.f32 %v217, %v218
    %v220 = vrot.slane %v219, 2
    %v221 = vadd.f32 %v219, %v220
    %v222 = vrot.slane %v221, 1
    %v223 = vadd.f32 %v221, %v222
    %v224 = vand.u32 2147483647, %v43
    %v225 = vand.u32 2147483647, %v44
    %v226 = vand.u32 2147483647, %v45
    %v227 = vand.u32 2147483647, %v46
    %v228 = vand.u32 2147483647, %v47
    %v229 = vand.u32 2147483647, %v48
    %v230 = vand.u32 2147483647, %v49
    %v231 = vand.u32 2147483647, %v50
    %v232 = vand.u32 2147483647, %v51
    %v233 = vand.u32 2147483647, %v52
    %v234 = vand.u32 2147483647, %v53
    %v235 = vand.u32 2147483647, %v54
    %v236 = vand.u32 2147483647, %v55
    %v237 = vand.u32 2147483647, %v56
    %v238 = vand.u32 2147483647, %v57
    %v239 = vand.u32 2147483647, %v58
    %v240 = vadd.f32 %v224, %v225
    %v241 = vadd.f32 %v240, %v226
    %v242 = vadd.f32 %v241, %v227
    %v243 = vadd.f32 %v242, %v228
    %v244 = vadd.f32 %v243, %v229
    %v245 = vadd.f32 %v244, %v230
    %v246 = vadd.f32 %v245, %v231
    %v247 = vadd.f32 %v246, %v232
    %v248 = vadd.f32 %v247, %v233
    %v249 = vadd.f32 %v248, %v234
    %v250 = vadd.f32 %v249, %v235
    %v251 = vadd.f32 %v250, %v236
    %v252 = vadd.f32 %v251, %v237
    %v253 = vadd.f32 %v252, %v238
    %v254 = vadd.f32 %v253, %v239
    %v255 = vrot.slane %v254, 4
    %v256 = vadd.f32 %v254, %v255
    %v257 = vrot.slane %v256, 2
    %v258 = vadd.f32 %v256, %v257
    %v259 = vrot.slane %v258, 1
    %v260 = vadd.f32 %v258, %v259
    %v261 = vadd.f32 %v223, %v260
    %v262 = vand.u32 2147483647, %v171
    %v263 = vand.u32 2147483647, %v172
    %v264 = vand.u32 2147483647, %v173
    %v265 = vand.u32 2147483647, %v174
    %v266 = vand.u32 2147483647, %v175
    %v267 = vand.u32 2147483647, %v176
    %v268 = vand.u32 2147483647, %v177
    %v269 = vand.u32 2147483647, %v178
    %v270 = vand.u32 2147483647, %v179
    %v271 = vand.u32 2147483647, %v180
    %v272 = vand.u32 2147483647, %v181
    %v273 = vand.u32 2147483647, %v182
    %v274 = vand.u32 2147483647, %v183
    %v275 = vand.u32 2147483647, %v184
    %v276 = vand.u32 2147483647, %v185
    %v277 = vand.u32 2147483647, %v186
    %v278 = vadd.f32 %v262, %v263
    %v279 = vadd.f32 %v278, %v264
    %v280 = vadd.f32 %v279, %v265
    %v281 = vadd.f32 %v280, %v266
    %v282 = vadd.f32 %v281, %v267
    %v283 = vadd.f32 %v282, %v268
    %v284 = vadd.f32 %v283, %v269
    %v285 = vadd.f32 %v284, %v270
    %v286 = vadd.f32 %v285, %v271
    %v287 = vadd.f32 %v286, %v272
    %v288 = vadd.f32 %v287, %v273
    %v289 = vadd.f32 %v288, %v274
    %v290 = vadd.f32 %v289, %v275
    %v291 = vadd.f32 %v290, %v276
    %v292 = vadd.f32 %v291, %v277
    %v293 = vrot.slane %v292, 4
    %v294 = vadd.f32 %v292, %v293
    %v295 = vrot.slane %v294, 2
    %v296 = vadd.f32 %v294, %v295
    %v297 = vrot.slane %v296, 1
    %v298 = vadd.f32 %v296, %v297
    %v299 = vand.u32 2147483647, %v139
    %v300 = vand.u32 2147483647, %v140
    %v301 = vand.u32 2147483647, %v141
    %v302 = vand.u32 2147483647, %v142
    %v303 = vand.u32 2147483647, %v143
    %v304 = vand.u32 2147483647, %v144
    %v305 = vand.u32 2147483647, %v145
    %v306 = vand.u32 2147483647, %v146
    %v307 = vand.u32 2147483647, %v147
    %v308 = vand.u32 2147483647, %v148
    %v309 = vand.u32 2147483647, %v149
    %v310 = vand.u32 2147483647, %v150
    %v311 = vand.u32 2147483647, %v151
    %v312 = vand.u32 2147483647, %v152
    %v313 = vand.u32 2147483647, %v153
    %v314 = vand.u32 2147483647, %v154
    %v315 = vadd.f32 %v299, %v300
    %v316 = vadd.f32 %v315, %v301
    %v317 = vadd.f32 %v316, %v302
    %v318 = vadd.f32 %v317, %v303
    %v319 = vadd.f32 %v318, %v304
    %v320 = vadd.f32 %v319, %v305
    %v321 = vadd.f32 %v320, %v306
    %v322 = vadd.f32 %v321, %v307
    %v323 = vadd.f32 %v322, %v308
    %v324 = vadd.f32 %v323, %v309
    %v325 = vadd.f32 %v324, %v310
    %v326 = vadd.f32 %v325, %v311
    %v327 = vadd.f32 %v326, %v312
    %v328 = vadd.f32 %v327, %v313
    %v329 = vadd.f32 %v328, %v314
    %v330 = vrot.slane %v329, 4
    %v331 = vadd.f32 %v329, %v330
    %v332 = vrot.slane %v331, 2
    %v333 = vadd.f32 %v331, %v332
    %v334 = vrot.slane %v333, 1
    %v335 = vadd.f32 %v333, %v334
    %v336 = vadd.f32 %v298, %v335
    %v337 = vmax.f32 %v261, 1e-12
    %v338 = vrcp.pop %v337
    %v339 = vmul.f32 1.0, %v338
    %v340 = vmax.f32 %v336, 1e-12
    %v341 = vrcp.pop %v340
    %v342 = vmul.f32 1.0, %v341
    %v343 = vmul.f32 %v91, %v339
    %v344 = vmul.f32 %v92, %v339
    %v345 = vmul.f32 %v93, %v339
    %v346 = vmul.f32 %v94, %v339
    %v347 = vmul.f32 %v95, %v339
    %v348 = vmul.f32 %v96, %v339
    %v349 = vmul.f32 %v97, %v339
    %v350 = vmul.f32 %v98, %v339
    %v351 = vmul.f32 %v99, %v339
    %v352 = vmul.f32 %v100, %v339
    %v353 = vmul.f32 %v101, %v339
    %v354 = vmul.f32 %v102, %v339
    %v355 = vmul.f32 %v103, %v339
    %v356 = vmul.f32 %v104, %v339
    %v357 = vmul.f32 %v105, %v339
    %v358 = vmul.f32 %v106, %v339
    %359 = vst [vmem:[#allocation2] sm:$0xff] %v343
    %360 = vst [vmem:[#allocation2 + $0x10] sm:$0xff] %v344
    %361 = vst [vmem:[#allocation2 + $0x20] sm:$0xff] %v345
    %362 = vst [vmem:[#allocation2 + $0x30] sm:$0xff] %v346
    %363 = vst [vmem:[#allocation2 + $0x40] sm:$0xff] %v347
    %364 = vst [vmem:[#allocation2 + $0x50] sm:$0xff] %v348
    %365 = vst [vmem:[#allocation2 + $0x60] sm:$0xff] %v349
    %366 = vst [vmem:[#allocation2 + $0x70] sm:$0xff] %v350
    %367 = vst [vmem:[#allocation2 + $0x80] sm:$0xff] %v351
    %368 = vst [vmem:[#allocation2 + $0x90] sm:$0xff] %v352
    %369 = vst [vmem:[#allocation2 + $0xa0] sm:$0xff] %v353
    %370 = vst [vmem:[#allocation2 + $0xb0] sm:$0xff] %v354
    %371 = vst [vmem:[#allocation2 + $0xc0] sm:$0xff] %v355
    %372 = vst [vmem:[#allocation2 + $0xd0] sm:$0xff] %v356
    %373 = vst [vmem:[#allocation2 + $0xe0] sm:$0xff] %v357
    %374 = vst [vmem:[#allocation2 + $0xf0] sm:$0xff] %v358
    %v375 = vmul.f32 %v43, %v339
    %v376 = vmul.f32 %v44, %v339
    %v377 = vmul.f32 %v45, %v339
    %v378 = vmul.f32 %v46, %v339
    %v379 = vmul.f32 %v47, %v339
    %v380 = vmul.f32 %v48, %v339
    %v381 = vmul.f32 %v49, %v339
    %v382 = vmul.f32 %v50, %v339
    %v383 = vmul.f32 %v51, %v339
    %v384 = vmul.f32 %v52, %v339
    %v385 = vmul.f32 %v53, %v339
    %v386 = vmul.f32 %v54, %v339
    %v387 = vmul.f32 %v55, %v339
    %v388 = vmul.f32 %v56, %v339
    %v389 = vmul.f32 %v57, %v339
    %v390 = vmul.f32 %v58, %v339
    %391 = vst [vmem:[#allocation2 + $0x100] sm:$0xff] %v375
    %392 = vst [vmem:[#allocation2 + $0x110] sm:$0xff] %v376
    %393 = vst [vmem:[#allocation2 + $0x120] sm:$0xff] %v377
    %394 = vst [vmem:[#allocation2 + $0x130] sm:$0xff] %v378
    %395 = vst [vmem:[#allocation2 + $0x140] sm:$0xff] %v379
    %396 = vst [vmem:[#allocation2 + $0x150] sm:$0xff] %v380
    %397 = vst [vmem:[#allocation2 + $0x160] sm:$0xff] %v381
    %398 = vst [vmem:[#allocation2 + $0x170] sm:$0xff] %v382
    %399 = vst [vmem:[#allocation2 + $0x180] sm:$0xff] %v383
    %400 = vst [vmem:[#allocation2 + $0x190] sm:$0xff] %v384
    %401 = vst [vmem:[#allocation2 + $0x1a0] sm:$0xff] %v385
    %402 = vst [vmem:[#allocation2 + $0x1b0] sm:$0xff] %v386
    %403 = vst [vmem:[#allocation2 + $0x1c0] sm:$0xff] %v387
    %404 = vst [vmem:[#allocation2 + $0x1d0] sm:$0xff] %v388
    %405 = vst [vmem:[#allocation2 + $0x1e0] sm:$0xff] %v389
    %406 = vst [vmem:[#allocation2 + $0x1f0] sm:$0xff] %v390
    %v407 = vmul.f32 %v171, %v342
    %v408 = vmul.f32 %v172, %v342
    %v409 = vmul.f32 %v173, %v342
    %v410 = vmul.f32 %v174, %v342
    %v411 = vmul.f32 %v175, %v342
    %v412 = vmul.f32 %v176, %v342
    %v413 = vmul.f32 %v177, %v342
    %v414 = vmul.f32 %v178, %v342
    %v415 = vmul.f32 %v179, %v342
    %v416 = vmul.f32 %v180, %v342
    %v417 = vmul.f32 %v181, %v342
    %v418 = vmul.f32 %v182, %v342
    %v419 = vmul.f32 %v183, %v342
    %v420 = vmul.f32 %v184, %v342
    %v421 = vmul.f32 %v185, %v342
    %v422 = vmul.f32 %v186, %v342
    %423 = vst [vmem:[#allocation2 + $0x8] sm:$0xff] %v407
    %424 = vst [vmem:[#allocation2 + $0x18] sm:$0xff] %v408
    %425 = vst [vmem:[#allocation2 + $0x28] sm:$0xff] %v409
    %426 = vst [vmem:[#allocation2 + $0x38] sm:$0xff] %v410
    %427 = vst [vmem:[#allocation2 + $0x48] sm:$0xff] %v411
    %428 = vst [vmem:[#allocation2 + $0x58] sm:$0xff] %v412
    %429 = vst [vmem:[#allocation2 + $0x68] sm:$0xff] %v413
    %430 = vst [vmem:[#allocation2 + $0x78] sm:$0xff] %v414
    %431 = vst [vmem:[#allocation2 + $0x88] sm:$0xff] %v415
    %432 = vst [vmem:[#allocation2 + $0x98] sm:$0xff] %v416
    %433 = vst [vmem:[#allocation2 + $0xa8] sm:$0xff] %v417
    %434 = vst [vmem:[#allocation2 + $0xb8] sm:$0xff] %v418
    %435 = vst [vmem:[#allocation2 + $0xc8] sm:$0xff] %v419
    %436 = vst [vmem:[#allocation2 + $0xd8] sm:$0xff] %v420
    %437 = vst [vmem:[#allocation2 + $0xe8] sm:$0xff] %v421
    %438 = vst [vmem:[#allocation2 + $0xf8] sm:$0xff] %v422
    %v439 = vmul.f32 %v139, %v342
    %v440 = vmul.f32 %v140, %v342
    %v441 = vmul.f32 %v141, %v342
    %v442 = vmul.f32 %v142, %v342
    %v443 = vmul.f32 %v143, %v342
    %v444 = vmul.f32 %v144, %v342
    %v445 = vmul.f32 %v145, %v342
    %v446 = vmul.f32 %v146, %v342
    %v447 = vmul.f32 %v147, %v342
    %v448 = vmul.f32 %v148, %v342
    %v449 = vmul.f32 %v149, %v342
    %v450 = vmul.f32 %v150, %v342
    %v451 = vmul.f32 %v151, %v342
    %v452 = vmul.f32 %v152, %v342
    %v453 = vmul.f32 %v153, %v342
    %v454 = vmul.f32 %v154, %v342
    %455 = vst [vmem:[#allocation2 + $0x108] sm:$0xff] %v439
    %456 = vst [vmem:[#allocation2 + $0x118] sm:$0xff] %v440
    %457 = vst [vmem:[#allocation2 + $0x128] sm:$0xff] %v441
    %458 = vst [vmem:[#allocation2 + $0x138] sm:$0xff] %v442
    %459 = vst [vmem:[#allocation2 + $0x148] sm:$0xff] %v443
    %460 = vst [vmem:[#allocation2 + $0x158] sm:$0xff] %v444
    %461 = vst [vmem:[#allocation2 + $0x168] sm:$0xff] %v445
    %462 = vst [vmem:[#allocation2 + $0x178] sm:$0xff] %v446
    %463 = vst [vmem:[#allocation2 + $0x188] sm:$0xff] %v447
    %464 = vst [vmem:[#allocation2 + $0x198] sm:$0xff] %v448
    %465 = vst [vmem:[#allocation2 + $0x1a8] sm:$0xff] %v449
    %466 = vst [vmem:[#allocation2 + $0x1b8] sm:$0xff] %v450
    %467 = vst [vmem:[#allocation2 + $0x1c8] sm:$0xff] %v451
    %468 = vst [vmem:[#allocation2 + $0x1d8] sm:$0xff] %v452
    %469 = vst [vmem:[#allocation2 + $0x1e8] sm:$0xff] %v453
    %470 = vst [vmem:[#allocation2 + $0x1f8] sm:$0xff] %v454
    // Predicated region
    $region6: #{dhgslm_forward.3} parent=1 // pred_check
      _
    $region7: #{dhgslm_forward.3} parent=1 // pred_check_branch
      %472 = sbr.rel (0) target = $region9
    $region8: #{dhgslm_forward.3} parent=1 // pred_region
      %s474 = ssub.s32 8192, 8192
      %475 = vsyncadd [#allocation3], %s474
      %s476 = sshll.u32 [#allocation2], 4
      %s477 = int_to_ptr.vmem [resolvable:$true] %s476
      %482 = dma.vmem_to_hbm [thread:$0]  %s477, 8192, %s1, [#allocation3], 256, 256, 16
    $region9: #{dhgslm_forward.3} parent=1 // pred_fallthru
      _
    // Predicated region
    $region10: #{dhgslm_forward.3} parent=1 // pred_check
      _
    $region11: #{dhgslm_forward.3} parent=1 // pred_check_branch
      %484 = sbr.rel (0) target = $region13
    $region12: #{dhgslm_forward.3} parent=1 // pred_region
      %485 = dma.done [#allocation3], 8192
    $region13: #{dhgslm_forward.3} parent=1 // pred_fallthru
      _
    %486 = vsyncpa [#allocation3], 1

// kernel: dhgslm_forward.2
$region0: #{dhgslm_forward.2}
  #allocation0 [shape = 'u32[]', space=smem, size = 0x4, offset = 0x4, fixed_abs, tag = 'smem constant byte address 0x4 - core index']
  #allocation1 [shape = 'u32[144,128]{1,0:T(1,128)}', space=vmem, size = 0x12000, scoped, tag = 'internal scratch']
  #allocation2 [shape = 'bf16[128,256]{1,0:T(16,128)(2,1)}', space=vmem, size = 0x10000, scoped, tag = 'scratch operand']
  #allocation3 [shape = 's32[1]{0}', space=sflag, size = 0x4, scoped, tag = 'scoped memory for dhgslm_forward.2']
  #allocation4 [shape = 'u8[512]{0}', space=smem, size = 0x200, scoped, tag = 'prefetched SMEM operand 0']
  #allocation5 [shape = 'u8[512]{0}', space=smem, size = 0x200, scoped, tag = 'prefetched SMEM operand 1']
  %s0 = inlined_call_operand.vmem [shape: s32[3], index: 0, kind: input, shape index: {}]
  %s1 = inlined_call_operand.vmem [shape: s32[3], index: 1, kind: input, shape index: {}]
  %s2 = inlined_call_operand.hbm [shape: f32[256,128], index: 2, kind: input, shape index: {}, may-alias: {2,3}]
  %s3 = inlined_call_operand.hbm [shape: f32[256,128], index: 3, kind: input, shape index: {}, may-alias: {2,3}]
  %s4 = inlined_call_operand.hbm [shape: f32[2,128,128], index: 4, kind: input, shape index: {}, may-alias: {4,6}]
  %s5 = inlined_call_operand.vmem [shape: f32[2,1,128], index: 5, kind: input, shape index: {}, may-alias: {5,7}]
  %s6 = inlined_call_operand.hbm [shape: f32[2,128,128], index: 6, kind: input, shape index: {}, may-alias: {4,6}]
  %s7 = inlined_call_operand.vmem [shape: f32[2,1,128], index: 7, kind: input, shape index: {}, may-alias: {5,7}]
  %s8 = inlined_call_operand.hbm [shape: f32[256,256], index: 8, kind: input, shape index: {}]
  %s9 = inlined_call_operand.vmem [shape: f32[3,2,128], index: 9, kind: input, shape index: {}]
  %s10 = inlined_call_operand.vmem [shape: f32[3,2,128], index: 10, kind: input, shape index: {}]
  %s11 = inlined_call_operand.vmem [shape: f32[3,2,128], index: 11, kind: input, shape index: {}]
  %s12 = inlined_call_operand.vmem [shape: f32[3,4], index: 12, kind: input, shape index: {}]
  %s13 = inlined_call_operand.vmem [shape: f32[3,128,128], index: 13, kind: output, shape index: {}]
  %s14 = sld [smem:[#allocation0]]
  $region105: #{dhgslm_forward.2} parent=0
    _
  %s16 = ssub.s32 1, %s14
  %s17 = scalar_select 0, %s16, %s14
  %s18 = sshll.u32 %s0, 4
  %s19 = int_to_ptr.vmem [resolvable:$true] %s18
  %21 = dma.vmem_to_smem %s19, 16, [#allocation4], [#allocation3]
  %s22 = sshll.u32 %s1, 4
  %s23 = int_to_ptr.vmem [resolvable:$true] %s22
  %25 = dma.vmem_to_smem %s23, 16, [#allocation5], [#allocation3]
  %26 = dma.done [#allocation3], 32
  %27 = sfence
  $region1: #{dhgslm_forward.2} parent=0
    #allocation6 [shape = 'u8[131072]{0}', space=vmem, size = 0x20000, scoped, tag = 'input window, operand 2']
    #allocation7 [shape = 's32[2]{0}', space=sflag, size = 0x8, scoped, tag = 'scoped memory for dhgslm_forward.2']
    #allocation8 [shape = 's32[2]{0}', space=sflag, size = 0x8, scoped, tag = 'scoped memory for dhgslm_forward.2']
    #allocation9 [shape = 'u8[131072]{0}', space=vmem, size = 0x20000, scoped, tag = 'input window, operand 3']
    #allocation10 [shape = 's32[2]{0}', space=sflag, size = 0x8, scoped, tag = 'scoped memory for dhgslm_forward.2']
    #allocation11 [shape = 'u8[131072]{0}', space=vmem, size = 0x20000, scoped, tag = 'input window, operand 4']
    #allocation12 [shape = 'u8[131072]{0}', space=vmem, size = 0x20000, scoped, tag = 'input window, operand 6']
    #allocation13 [shape = 's32[2]{0}', space=sflag, size = 0x8, scoped, tag = 'scoped memory for dhgslm_forward.2']
    #allocation14 [shape = 'u8[131072]{0}', space=vmem, size = 0x20000, scoped, tag = 'input window, operand 8']
    #allocation15 [shape = 'u8[2048]{0}', space=smem, size = 0x800, scoped, tag = 'input window, operand 12, single buffered']
    %28 = vsyncpa [#allocation7], 0
    %s29 = scalar_lea.sflag [#allocation7], 1
    %30 = vsyncpa %s29, 0
    %31 = vsyncpa [#allocation10], 0
    %s32 = scalar_lea.sflag [#allocation10], 1
    %33 = vsyncpa %s32, 0
    %34 = vsyncpa [#allocation13], 0
    %s35 = scalar_lea.sflag [#allocation13], 1
    %36 = vsyncpa %s35, 0
    %37 = vsyncpa [#allocation8], 0
    loop: start=0, step=1, limit=5
    $region2: #{dhgslm_forward.2} parent=1 // loop_pre_header
      _
    $region3: #{dhgslm_forward.2} parent=1 // loop_header
      %s39 = sphi 0, %s43
      %p40 = scmp.ge.s32.totalorder %s39, 5
      %s51 = sphi 0, %s53
      %s54 = sphi 0, %s51
      %s55 = sphi 0, %s54
      %s71 = sphi 0, %s55
      %s79 = sphi 0, %s81
      %s82 = sphi 0, %s79
      %s83 = sphi 0, %s82
      %s99 = sphi 0, %s83
      %s107 = sphi 0, %s109
      %s110 = sphi 0, %s107
      %s111 = sphi 0, %s110
      %s127 = sphi 0, %s111
      %s135 = sphi 0, %s137
      %s138 = sphi 0, %s135
      %s139 = sphi 0, %s138
      %s155 = sphi 0, %s139
      %s163 = sphi 0, %s165
      %s166 = sphi 0, %s163
      %s167 = sphi 0, %s166
      %s183 = sphi 0, %s167
      %s191 = sphi 0, %s193
      %s194 = sphi 0, %s191
      %s195 = sphi 0, %s194
      %s211 = sphi 0, %s195
      %s223 = sphi 0, %s225
      %s226 = sphi 0, %s223
      %s227 = sphi 0, %s226
      %s243 = sphi 0, %s227
      %s249 = sphi 0, %s251
      %s252 = sphi 0, %s249
      %s253 = sphi 0, %s252
      %s269 = sphi 0, %s253
      %s275 = sphi 0, %s277
      %s278 = sphi 0, %s275
      %s279 = sphi 0, %s278
      %s295 = sphi 0, %s279
      %s301 = sphi 0, %s303
      %s304 = sphi 0, %s301
      %s305 = sphi 0, %s304
      %s321 = sphi 0, %s305
      %s325 = sphi 0, %s325
      %s327 = sphi 0, %s325
      %s328 = sphi 0, %s327
      %s342 = sphi 0, %s328
      %s348 = sphi 0, %s350
      %s351 = sphi 0, %s348
      %s352 = sphi 0, %s351
      %s368 = sphi 0, %s352
    $region4: #{dhgslm_forward.2} parent=1 // loop_header_branch
      %42 = sbr.rel (%p40) target = $region8
    $region5: #{dhgslm_forward.2} parent=1 // loop_body
      %s44 = ssub.s32 %s39, 1
      %s45 = ssub.s32 %s39, 2
      %s46 = sadd.s32 %s39, 1
      %s47 = sld [smem:[#allocation4 + %s39]]
      %s48 = sld [smem:[#allocation4 + %s46]]
      %s49 = ssub.s32 %s47, %s48
      %p50 = scmp.eq.s32.totalorder %s49, 0
      %s52 = sadd.s32 %s51, 1
      %s53 = scalar_select %p50, %s51, %s52
      %p56 = pneg %p50
      %p57 = scmp.eq.s32.totalorder %s39, 2
      %p58 = por %p56, %p57
      %p59 = scmp.ne.s32.totalorder %s51, %s54
      %p60 = scmp.eq.s32.totalorder %s39, 0
      %p61 = por %p59, %p60
      %p62 = scmp.ne.s32.totalorder %s51, %s54
      %p63 = scmp.eq.s32.totalorder %s44, 2
      %p64 = por %p62, %p63
      %p65 = scmp.ne.s32.totalorder %s54, %s55
      %p66 = scmp.eq.s32.totalorder %s44, 0
      %p67 = por %p65, %p66
      %p68 = scmp.ne.s32.totalorder %s54, %s55
      %p69 = scmp.eq.s32.totalorder %s45, 2
      %p70 = por %p68, %p69
      %p72 = scmp.ne.s32.totalorder %s55, %s71
      %p73 = scmp.eq.s32.totalorder %s45, 0
      %p74 = por %p72, %p73
      %s75 = sld [smem:[#allocation5 + %s39]]
      %s76 = sld [smem:[#allocation5 + %s46]]
      %s77 = ssub.s32 %s75, %s76
      %p78 = scmp.eq.s32.totalorder %s77, 0
      %s80 = sadd.s32 %s79, 1
      %s81 = scalar_select %p78, %s79, %s80
      %p84 = pneg %p78
      %p85 = scmp.eq.s32.totalorder %s39, 2
      %p86 = por %p84, %p85
      %p87 = scmp.ne.s32.totalorder %s79, %s82
      %p88 = scmp.eq.s32.totalorder %s39, 0
      %p89 = por %p87, %p88
      %p90 = scmp.ne.s32.totalorder %s79, %s82
      %p91 = scmp.eq.s32.totalorder %s44, 2
      %p92 = por %p90, %p91
      %p93 = scmp.ne.s32.totalorder %s82, %s83
      %p94 = scmp.eq.s32.totalorder %s44, 0
      %p95 = por %p93, %p94
      %p96 = scmp.ne.s32.totalorder %s82, %s83
      %p97 = scmp.eq.s32.totalorder %s45, 2
      %p98 = por %p96, %p97
      %p100 = scmp.ne.s32.totalorder %s83, %s99
      %p101 = scmp.eq.s32.totalorder %s45, 0
      %p102 = por %p100, %p101
      %s103 = sld [smem:[#allocation4 + %s39]]
      %s104 = sld [smem:[#allocation4 + %s46]]
      %s105 = ssub.s32 %s103, %s104
      %p106 = scmp.eq.s32.totalorder %s105, 0
      %s108 = sadd.s32 %s107, 1
      %s109 = scalar_select %p106, %s107, %s108
      %p112 = pneg %p106
      %p113 = scmp.eq.s32.totalorder %s39, 2
      %p114 = por %p112, %p113
      %p115 = scmp.ne.s32.totalorder %s107, %s110
      %p116 = scmp.eq.s32.totalorder %s39, 0
      %p117 = por %p115, %p116
      %p118 = scmp.ne.s32.totalorder %s107, %s110
      %p119 = scmp.eq.s32.totalorder %s44, 2
      %p120 = por %p118, %p119
      %p121 = scmp.ne.s32.totalorder %s110, %s111
      %p122 = scmp.eq.s32.totalorder %s44, 0
      %p123 = por %p121, %p122
      %p124 = scmp.ne.s32.totalorder %s110, %s111
      %p125 = scmp.eq.s32.totalorder %s45, 2
      %p126 = por %p124, %p125
      %p128 = scmp.ne.s32.totalorder %s111, %s127
      %p129 = scmp.eq.s32.totalorder %s45, 0
      %p130 = por %p128, %p129
      %s131 = sld [smem:[#allocation4 + %s39]]
      %s132 = sld [smem:[#allocation4 + %s46]]
      %s133 = ssub.s32 %s131, %s132
      %p134 = scmp.eq.s32.totalorder %s133, 0
      %s136 = sadd.s32 %s135, 1
      %s137 = scalar_select %p134, %s135, %s136
      %p140 = pneg %p134
      %p141 = scmp.eq.s32.totalorder %s39, 2
      %p142 = por %p140, %p141
      %p143 = scmp.ne.s32.totalorder %s135, %s138
      %p144 = scmp.eq.s32.totalorder %s39, 0
      %p145 = por %p143, %p144
      %p146 = scmp.ne.s32.totalorder %s135, %s138
      %p147 = scmp.eq.s32.totalorder %s44, 2
      %p148 = por %p146, %p147
      %p149 = scmp.ne.s32.totalorder %s138, %s139
      %p150 = scmp.eq.s32.totalorder %s44, 0
      %p151 = por %p149, %p150
      %p152 = scmp.ne.s32.totalorder %s138, %s139
      %p153 = scmp.eq.s32.totalorder %s45, 2
      %p154 = por %p152, %p153
      %p156 = scmp.ne.s32.totalorder %s139, %s155
      %p157 = scmp.eq.s32.totalorder %s45, 0
      %p158 = por %p156, %p157
      %s159 = sld [smem:[#allocation5 + %s39]]
      %s160 = sld [smem:[#allocation5 + %s46]]
      %s161 = ssub.s32 %s159, %s160
      %p162 = scmp.eq.s32.totalorder %s161, 0
      %s164 = sadd.s32 %s163, 1
      %s165 = scalar_select %p162, %s163, %s164
      %p168 = pneg %p162
      %p169 = scmp.eq.s32.totalorder %s39, 2
      %p170 = por %p168, %p169
      %p171 = scmp.ne.s32.totalorder %s163, %s166
      %p172 = scmp.eq.s32.totalorder %s39, 0
      %p173 = por %p171, %p172
      %p174 = scmp.ne.s32.totalorder %s163, %s166
      %p175 = scmp.eq.s32.totalorder %s44, 2
      %p176 = por %p174, %p175
      %p177 = scmp.ne.s32.totalorder %s166, %s167
      %p178 = scmp.eq.s32.totalorder %s44, 0
      %p179 = por %p177, %p178
      %p180 = scmp.ne.s32.totalorder %s166, %s167
      %p181 = scmp.eq.s32.totalorder %s45, 2
      %p182 = por %p180, %p181
      %p184 = scmp.ne.s32.totalorder %s167, %s183
      %p185 = scmp.eq.s32.totalorder %s45, 0
      %p186 = por %p184, %p185
      %s187 = sld [smem:[#allocation5 + %s39]]
      %s188 = sld [smem:[#allocation5 + %s46]]
      %s189 = ssub.s32 %s187, %s188
      %p190 = scmp.eq.s32.totalorder %s189, 0
      %s192 = sadd.s32 %s191, 1
      %s193 = scalar_select %p190, %s191, %s192
      %p196 = pneg %p190
      %p197 = scmp.eq.s32.totalorder %s39, 2
      %p198 = por %p196, %p197
      %p199 = scmp.ne.s32.totalorder %s191, %s194
      %p200 = scmp.eq.s32.totalorder %s39, 0
      %p201 = por %p199, %p200
      %p202 = scmp.ne.s32.totalorder %s191, %s194
      %p203 = scmp.eq.s32.totalorder %s44, 2
      %p204 = por %p202, %p203
      %p205 = scmp.ne.s32.totalorder %s194, %s195
      %p206 = scmp.eq.s32.totalorder %s44, 0
      %p207 = por %p205, %p206
      %p208 = scmp.ne.s32.totalorder %s194, %s195
      %p209 = scmp.eq.s32.totalorder %s45, 2
      %p210 = por %p208, %p209
      %p212 = scmp.ne.s32.totalorder %s195, %s211
      %p213 = scmp.eq.s32.totalorder %s45, 0
      %p214 = por %p212, %p213
      %s215 = sld [smem:[#allocation5 + %s39]]
      %s216 = sld [smem:[#allocation4 + %s39]]
      %s217 = sld [smem:[#allocation5 + %s46]]
      %s218 = sld [smem:[#allocation4 + %s46]]
      %s219 = ssub.s32 %s215, %s217
      %s220 = ssub.s32 %s216, %s218
      %s221 = sor.u32 %s219, %s220
      %p222 = scmp.eq.s32.totalorder %s221, 0
      %s224 = sadd.s32 %s223, 1
      %s225 = scalar_select %p222, %s223, %s224
      %p228 = pneg %p222
      %p229 = scmp.eq.s32.totalorder %s39, 2
      %p230 = por %p228, %p229
      %p231 = scmp.ne.s32.totalorder %s223, %s226
      %p232 = scmp.eq.s32.totalorder %s39, 0
      %p233 = por %p231, %p232
      %p234 = scmp.ne.s32.totalorder %s223, %s226
      %p235 = scmp.eq.s32.totalorder %s44, 2
      %p236 = por %p234, %p235
      %p237 = scmp.ne.s32.totalorder %s226, %s227
      %p238 = scmp.eq.s32.totalorder %s44, 0
      %p239 = por %p237, %p238
      %p240 = scmp.ne.s32.totalorder %s226, %s227
      %p241 = scmp.eq.s32.totalorder %s45, 2
      %p242 = por %p240, %p241
      %p244 = scmp.ne.s32.totalorder %s227, %s243
      %p245 = scmp.eq.s32.totalorder %s45, 0
      %p246 = por %p244, %p245
      %s247 = ssub.s32 %s39, %s46
      %p248 = scmp.eq.s32.totalorder %s247, 0
      %s250 = sadd.s32 %s249, 1
      %s251 = scalar_select %p248, %s249, %s250
      %p254 = pneg %p248
      %p255 = scmp.eq.s32.totalorder %s39, 2
      %p256 = por %p254, %p255
      %p257 = scmp.ne.s32.totalorder %s249, %s252
      %p258 = scmp.eq.s32.totalorder %s39, 0
      %p259 = por %p257, %p258
      %p260 = scmp.ne.s32.totalorder %s249, %s252
      %p261 = scmp.eq.s32.totalorder %s44, 2
      %p262 = por %p260, %p261
      %p263 = scmp.ne.s32.totalorder %s252, %s253
      %p264 = scmp.eq.s32.totalorder %s44, 0
      %p265 = por %p263, %p264
      %p266 = scmp.ne.s32.totalorder %s252, %s253
      %p267 = scmp.eq.s32.totalorder %s45, 2
      %p268 = por %p266, %p267
      %p270 = scmp.ne.s32.totalorder %s253, %s269
      %p271 = scmp.eq.s32.totalorder %s45, 0
      %p272 = por %p270, %p271
      %s273 = ssub.s32 %s39, %s46
      %p274 = scmp.eq.s32.totalorder %s273, 0
      %s276 = sadd.s32 %s275, 1
      %s277 = scalar_select %p274, %s275, %s276
      %p280 = pneg %p274
      %p281 = scmp.eq.s32.totalorder %s39, 2
      %p282 = por %p280, %p281
      %p283 = scmp.ne.s32.totalorder %s275, %s278
      %p284 = scmp.eq.s32.totalorder %s39, 0
      %p285 = por %p283, %p284
      %p286 = scmp.ne.s32.totalorder %s275, %s278
      %p287 = scmp.eq.s32.totalorder %s44, 2
      %p288 = por %p286, %p287
      %p289 = scmp.ne.s32.totalorder %s278, %s279
      %p290 = scmp.eq.s32.totalorder %s44, 0
      %p291 = por %p289, %p290
      %p292 = scmp.ne.s32.totalorder %s278, %s279
      %p293 = scmp.eq.s32.totalorder %s45, 2
      %p294 = por %p292, %p293
      %p296 = scmp.ne.s32.totalorder %s279, %s295
      %p297 = scmp.eq.s32.totalorder %s45, 0
      %p298 = por %p296, %p297
      %s299 = ssub.s32 %s39, %s46
      %p300 = scmp.eq.s32.totalorder %s299, 0
      %s302 = sadd.s32 %s301, 1
      %s303 = scalar_select %p300, %s301, %s302
      %p306 = pneg %p300
      %p307 = scmp.eq.s32.totalorder %s39, 2
      %p308 = por %p306, %p307
      %p309 = scmp.ne.s32.totalorder %s301, %s304
      %p310 = scmp.eq.s32.totalorder %s39, 0
      %p311 = por %p309, %p310
      %p312 = scmp.ne.s32.totalorder %s301, %s304
      %p313 = scmp.eq.s32.totalorder %s44, 2
      %p314 = por %p312, %p313
      %p315 = scmp.ne.s32.totalorder %s304, %s305
      %p316 = scmp.eq.s32.totalorder %s44, 0
      %p317 = por %p315, %p316
      %p318 = scmp.ne.s32.totalorder %s304, %s305
      %p319 = scmp.eq.s32.totalorder %s45, 2
      %p320 = por %p318, %p319
      %p322 = scmp.ne.s32.totalorder %s305, %s321
      %p323 = scmp.eq.s32.totalorder %s45, 0
      %p324 = por %p322, %p323
      %s326 = sadd.s32 %s325, 1
      %p329 = scmp.eq.s32.totalorder %s39, 2
      %p330 = scmp.ne.s32.totalorder %s325, %s327
      %p331 = scmp.eq.s32.totalorder %s39, 0
      %p332 = por %p330, %p331
      %p333 = scmp.ne.s32.totalorder %s325, %s327
      %p334 = scmp.eq.s32.totalorder %s44, 2
      %p335 = por %p333, %p334
      %p336 = scmp.ne.s32.totalorder %s327, %s328
      %p337 = scmp.eq.s32.totalorder %s44, 0
      %p338 = por %p336, %p337
      %p339 = scmp.ne.s32.totalorder %s327, %s328
      %p340 = scmp.eq.s32.totalorder %s45, 2
      %p341 = por %p339, %p340
      %p343 = scmp.ne.s32.totalorder %s328, %s342
      %p344 = scmp.eq.s32.totalorder %s45, 0
      %p345 = por %p343, %p344
      %s346 = ssub.s32 %s39, %s46
      %p347 = scmp.eq.s32.totalorder %s346, 0
      %s349 = sadd.s32 %s348, 1
      %s350 = scalar_select %p347, %s348, %s349
      %p353 = pneg %p347
      %p354 = scmp.eq.s32.totalorder %s39, 2
      %p355 = por %p353, %p354
      %p356 = scmp.ne.s32.totalorder %s348, %s351
      %p357 = scmp.eq.s32.totalorder %s39, 0
      %p358 = por %p356, %p357
      %p359 = scmp.ne.s32.totalorder %s348, %s351
      %p360 = scmp.eq.s32.totalorder %s44, 2
      %p361 = por %p359, %p360
      %p362 = scmp.ne.s32.totalorder %s351, %s352
      %p363 = scmp.eq.s32.totalorder %s44, 0
      %p364 = por %p362, %p363
      %p365 = scmp.ne.s32.totalorder %s351, %s352
      %p366 = scmp.eq.s32.totalorder %s45, 2
      %p367 = por %p365, %p366
      %p369 = scmp.ne.s32.totalorder %s352, %s368
      %p370 = scmp.eq.s32.totalorder %s45, 0
      %p371 = por %p369, %p370
      %p372 = scmp.le.s32.totalorder 1, %s39
      %p373 = scmp.lt.s32.totalorder %s39, 4
      %p374 = pnand %p372, %p373
      %p375 = pneg %p374
      // Predicated region
      $region9: #{dhgslm_forward.2} parent=5 // pred_check
        _
      $region10: #{dhgslm_forward.2} parent=5 // pred_check_branch
        %377 = sbr.rel (%p374) target = $region12
      $region11: #{dhgslm_forward.2} parent=5 // pred_region
        %s378 = ssub.s32 %s39, 1
        // Predicated region
        $region13: #{dhgslm_forward.2} parent=11 // pred_check
          %p379 = pneg %p338
        $region14: #{dhgslm_forward.2} parent=11 // pred_check_branch
          %381 = sbr.rel (%p379) target = $region16
        $region15: #{dhgslm_forward.2} parent=11 // pred_region
          %s383 = ssub.s32 64, 64
          %384 = vsyncadd [#allocation8], %s383
          %s386 = sshll.u32 %s12, 4
          %s387 = int_to_ptr.vmem [resolvable:$true] %s386
          %389 = dma.vmem_to_smem %s387, 64, [#allocation15], [#allocation8]
        $region16: #{dhgslm_forward.2} parent=11 // pred_fallthru
          _
      $region12: #{dhgslm_forward.2} parent=5 // pred_fallthru
        _
      %p390 = scmp.lt.s32.totalorder %s39, 3
      // Predicated region
      $region17: #{dhgslm_forward.2} parent=5 // pred_check
        %p391 = pneg %p390
      $region18: #{dhgslm_forward.2} parent=5 // pred_check_branch
        %393 = sbr.rel (%p391) target = $region20
      $region19: #{dhgslm_forward.2} parent=5 // pred_region
        // Predicated region
        $region21: #{dhgslm_forward.2} parent=19 // pred_check
          %p394 = pneg %p61
        $region22: #{dhgslm_forward.2} parent=19 // pred_check_branch
          %396 = sbr.rel (%p394) target = $region24
        $region23: #{dhgslm_forward.2} parent=19 // pred_region
          %s397 = sand.u32 %s51, 1
          %s398 = scalar_lea.sflag [#allocation7], %s397
          %s399 = sand.u32 %s51, 1
          %s400 = smul.addr %s399, 128
          %s401 = scalar_lea.vmem [#allocation6], %s400
          %s402 = sld [smem:[#allocation4 + %s39]]
          %s403 = smul.u32 16, %s402
          %s405 = ssub.s32 2048, 2048
          %406 = vsyncadd %s398, %s405
          %s407 = smul.addr %s403, 128
          %s408 = scalar_lea.hbm %s2, %s407
          %s409 = sshll.u32 %s401, 4
          %s410 = int_to_ptr.vmem [resolvable:$true] %s409
          %415 = dma.hbm_to_vmem [thread:$0]  %s408, 2048, %s410, %s398, 128, 128, 8
        $region24: #{dhgslm_forward.2} parent=19 // pred_fallthru
          _
        // Predicated region
        $region25: #{dhgslm_forward.2} parent=19 // pred_check
          %p416 = pneg %p89
        $region26: #{dhgslm_forward.2} parent=19 // pred_check_branch
          %418 = sbr.rel (%p416) target = $region28
        $region27: #{dhgslm_forward.2} parent=19 // pred_region
          %s419 = sand.u32 %s39, 1
          %s420 = scalar_lea.sflag [#allocation10], %s419
          %s421 = sand.u32 %s79, 1
          %s422 = smul.addr %s421, 128
          %s423 = scalar_lea.vmem [#allocation9], %s422
          %s424 = sld [smem:[#allocation5 + %s39]]
          %s425 = smul.u32 16, %s424
          %s427 = ssub.s32 2048, 2048
          %428 = vsyncadd %s420, %s427
          %s429 = smul.addr %s425, 128
          %s430 = scalar_lea.hbm %s3, %s429
          %s431 = sshll.u32 %s423, 4
          %s432 = int_to_ptr.vmem [resolvable:$true] %s431
          %437 = dma.hbm_to_vmem [thread:$0]  %s430, 2048, %s432, %s420, 128, 128, 8
        $region28: #{dhgslm_forward.2} parent=19 // pred_fallthru
          _
        // Predicated region
        $region29: #{dhgslm_forward.2} parent=19 // pred_check
          %p438 = pneg %p117
        $region30: #{dhgslm_forward.2} parent=19 // pred_check_branch
          %440 = sbr.rel (%p438) target = $region32
        $region31: #{dhgslm_forward.2} parent=19 // pred_region
          %s441 = sand.u32 %s39, 1
          %s442 = scalar_lea.sflag [#allocation10], %s441
          %s443 = sand.u32 %s107, 1
          %s444 = smul.addr %s443, 128
          %s445 = scalar_lea.vmem [#allocation11], %s444
          %s446 = sld [smem:[#allocation4 + %s39]]
          %s448 = ssub.s32 2048, 2048
          %449 = vsyncadd %s442, %s448
          %s450 = smul.addr %s446, 16
          %s451 = smul.addr %s450, 128
          %s452 = scalar_lea.hbm %s4, %s451
          %s453 = sshll.u32 %s445, 4
          %s454 = int_to_ptr.vmem [resolvable:$true] %s453
          %459 = dma.hbm_to_vmem [thread:$0]  %s452, 2048, %s454, %s442, 128, 128, 8
        $region32: #{dhgslm_forward.2} parent=19 // pred_fallthru
          _
        // Predicated region
        $region33: #{dhgslm_forward.2} parent=19 // pred_check
          %p460 = pneg %p145
        $region34: #{dhgslm_forward.2} parent=19 // pred_check_branch
          %462 = sbr.rel (%p460) target = $region36
        $region35: #{dhgslm_forward.2} parent=19 // pred_region
          %s463 = sld [smem:[#allocation4 + %s39]]
          %p464 = scmp.lt.s32.totalorder %s463, 1
          %s465 = scalar_select %p464, %s463, 1
          %s466 = scalar_lea.vmem %s5, %s465
          %s467 = sld [smem:[#allocation4 + %s39]]
        $region36: #{dhgslm_forward.2} parent=19 // pred_fallthru
          _
        // Predicated region
        $region37: #{dhgslm_forward.2} parent=19 // pred_check
          %p468 = pneg %p173
        $region38: #{dhgslm_forward.2} parent=19 // pred_check_branch
          %470 = sbr.rel (%p468) target = $region40
        $region39: #{dhgslm_forward.2} parent=19 // pred_region
          %s471 = sand.u32 %s39, 1
          %s472 = scalar_lea.sflag [#allocation13], %s471
          %s473 = sand.u32 %s163, 1
          %s474 = smul.addr %s473, 128
          %s475 = scalar_lea.vmem [#allocation12], %s474
          %s476 = sld [smem:[#allocation5 + %s39]]
          %s478 = ssub.s32 2048, 2048
          %479 = vsyncadd %s472, %s478
          %s480 = smul.addr %s476, 16
          %s481 = smul.addr %s480, 128
          %s482 = scalar_lea.hbm %s6, %s481
          %s483 = sshll.u32 %s475, 4
          %s484 = int_to_ptr.vmem [resolvable:$true] %s483
          %489 = dma.hbm_to_vmem [thread:$0]  %s482, 2048, %s484, %s472, 128, 128, 8
        $region40: #{dhgslm_forward.2} parent=19 // pred_fallthru
          _
        // Predicated region
        $region41: #{dhgslm_forward.2} parent=19 // pred_check
          %p490 = pneg %p201
        $region42: #{dhgslm_forward.2} parent=19 // pred_check_branch
          %492 = sbr.rel (%p490) target = $region44
        $region43: #{dhgslm_forward.2} parent=19 // pred_region
          %s493 = sld [smem:[#allocation5 + %s39]]
          %p494 = scmp.lt.s32.totalorder %s493, 1
          %s495 = scalar_select %p494, %s493, 1
          %s496 = scalar_lea.vmem %s7, %s495
          %s497 = sld [smem:[#allocation5 + %s39]]
        $region44: #{dhgslm_forward.2} parent=19 // pred_fallthru
          _
        // Predicated region
        $region45: #{dhgslm_forward.2} parent=19 // pred_check
          %p498 = pneg %p233
        $region46: #{dhgslm_forward.2} parent=19 // pred_check_branch
          %500 = sbr.rel (%p498) target = $region48
        $region47: #{dhgslm_forward.2} parent=19 // pred_region
          %s501 = sand.u32 %s39, 1
          %s502 = scalar_lea.sflag [#allocation13], %s501
          %s503 = sand.u32 %s223, 1
          %s504 = smul.addr %s503, 128
          %s505 = scalar_lea.vmem [#allocation14], %s504
          %s506 = sld [smem:[#allocation5 + %s39]]
          %s507 = sld [smem:[#allocation4 + %s39]]
          %s508 = smul.u32 16, %s506
          %s510 = ssub.s32 2048, 2048
          %511 = vsyncadd %s502, %s510
          %s512 = smul.addr %s508, 2
          %s513 = sadd.s32 %s507, %s512
          %s514 = smul.addr %s513, 128
          %s515 = scalar_lea.hbm %s8, %s514
          %s516 = sshll.u32 %s505, 4
          %s517 = int_to_ptr.vmem [resolvable:$true] %s516
          %522 = dma.hbm_to_vmem [thread:$0]  %s515, 2048, %s517, %s502, 256, 128, 8
        $region48: #{dhgslm_forward.2} parent=19 // pred_fallthru
          _
        // Predicated region
        $region49: #{dhgslm_forward.2} parent=19 // pred_check
          %p523 = pneg %p259
        $region50: #{dhgslm_forward.2} parent=19 // pred_check_branch
          %525 = sbr.rel (%p523) target = $region52
        $region51: #{dhgslm_forward.2} parent=19 // pred_region
          %p526 = scmp.lt.s32.totalorder %s39, 2
          %s527 = scalar_select %p526, %s39, 2
          %s528 = smul.addr %s527, 2
          %s529 = scalar_lea.vmem %s9, %s528
        $region52: #{dhgslm_forward.2} parent=19 // pred_fallthru
          _
        // Predicated region
        $region53: #{dhgslm_forward.2} parent=19 // pred_check
          %p530 = pneg %p285
        $region54: #{dhgslm_forward.2} parent=19 // pred_check_branch
          %532 = sbr.rel (%p530) target = $region56
        $region55: #{dhgslm_forward.2} parent=19 // pred_region
          %p533 = scmp.lt.s32.totalorder %s39, 2
          %s534 = scalar_select %p533, %s39, 2
          %s535 = smul.addr %s534, 2
          %s536 = scalar_lea.vmem %s10, %s535
        $region56: #{dhgslm_forward.2} parent=19 // pred_fallthru
          _
        // Predicated region
        $region57: #{dhgslm_forward.2} parent=19 // pred_check
          %p537 = pneg %p311
        $region58: #{dhgslm_forward.2} parent=19 // pred_check_branch
          %539 = sbr.rel (%p537) target = $region60
        $region59: #{dhgslm_forward.2} parent=19 // pred_region
          %p540 = scmp.lt.s32.totalorder %s39, 2
          %s541 = scalar_select %p540, %s39, 2
          %s542 = smul.addr %s541, 2
          %s543 = scalar_lea.vmem %s11, %s542
        $region60: #{dhgslm_forward.2} parent=19 // pred_fallthru
          _
      $region20: #{dhgslm_forward.2} parent=5 // pred_fallthru
        _
      %p544 = scmp.le.s32.totalorder 1, %s39
      %p545 = scmp.lt.s32.totalorder %s39, 4
      %p546 = pnand %p544, %p545
      %p547 = pneg %p546
      // Predicated region
      $region61: #{dhgslm_forward.2} parent=5 // pred_check
        _
      $region62: #{dhgslm_forward.2} parent=5 // pred_check_branch
        %549 = sbr.rel (%p546) target = $region64
      $region63: #{dhgslm_forward.2} parent=5 // pred_region
        %s550 = ssub.s32 %s39, 1
        %s551 = sand.u32 %s54, 1
        %s552 = scalar_lea.sflag [#allocation7], %s551
        %s553 = sand.u32 %s54, 1
        %s554 = smul.addr %s553, 128
        %s555 = scalar_lea.vmem [#allocation6], %s554
        // Predicated region
        $region65: #{dhgslm_forward.2} parent=63 // pred_check
          %p556 = pneg %p67
        $region66: #{dhgslm_forward.2} parent=63 // pred_check_branch
          %558 = sbr.rel (%p556) target = $region68
        $region67: #{dhgslm_forward.2} parent=63 // pred_region
          %559 = dma.done %s552, 2048
        $region68: #{dhgslm_forward.2} parent=63 // pred_fallthru
          _
        %s560 = sand.u32 %s44, 1
        %s561 = scalar_lea.sflag [#allocation10], %s560
        %s562 = sand.u32 %s82, 1
        %s563 = smul.addr %s562, 128
        %s564 = scalar_lea.vmem [#allocation9], %s563
        // Predicated region
        $region69: #{dhgslm_forward.2} parent=63 // pred_check
          %p565 = pneg %p95
        $region70: #{dhgslm_forward.2} parent=63 // pred_check_branch
          %567 = sbr.rel (%p565) target = $region72
        $region71: #{dhgslm_forward.2} parent=63 // pred_region
          %568 = dma.done %s561, 2048
        $region72: #{dhgslm_forward.2} parent=63 // pred_fallthru
          _
        %s569 = sand.u32 %s44, 1
        %s570 = scalar_lea.sflag [#allocation10], %s569
        %s571 = sand.u32 %s110, 1
        %s572 = smul.addr %s571, 128
        %s573 = scalar_lea.vmem [#allocation11], %s572
        // Predicated region
        $region73: #{dhgslm_forward.2} parent=63 // pred_check
          %p574 = pneg %p123
        $region74: #{dhgslm_forward.2} parent=63 // pred_check_branch
          %576 = sbr.rel (%p574) target = $region76
        $region75: #{dhgslm_forward.2} parent=63 // pred_region
          %577 = dma.done %s570, 2048
        $region76: #{dhgslm_forward.2} parent=63 // pred_fallthru
          _
        %s578 = sand.u32 %s44, 1
        %s579 = scalar_lea.sflag [#allocation13], %s578
        %s580 = sand.u32 %s166, 1
        %s581 = smul.addr %s580, 128
        %s582 = scalar_lea.vmem [#allocation12], %s581
        // Predicated region
        $region77: #{dhgslm_forward.2} parent=63 // pred_check
          %p583 = pneg %p179
        $region78: #{dhgslm_forward.2} parent=63 // pred_check_branch
          %585 = sbr.rel (%p583) target = $region80
        $region79: #{dhgslm_forward.2} parent=63 // pred_region
          %586 = dma.done %s579, 2048
        $region80: #{dhgslm_forward.2} parent=63 // pred_fallthru
          _
        %s587 = sand.u32 %s44, 1
        %s588 = scalar_lea.sflag [#allocation13], %s587
        %s589 = sand.u32 %s226, 1
        %s590 = smul.addr %s589, 128
        %s591 = scalar_lea.vmem [#allocation14], %s590
        // Predicated region
        $region81: #{dhgslm_forward.2} parent=63 // pred_check
          %p592 = pneg %p239
        $region82: #{dhgslm_forward.2} parent=63 // pred_check_branch
          %594 = sbr.rel (%p592) target = $region84
        $region83: #{dhgslm_forward.2} parent=63 // pred_region
          %595 = dma.done %s588, 2048
        $region84: #{dhgslm_forward.2} parent=63 // pred_fallthru
          _
        // Predicated region
        $region85: #{dhgslm_forward.2} parent=63 // pred_check
          %p596 = pneg %p338
        $region86: #{dhgslm_forward.2} parent=63 // pred_check_branch
          %598 = sbr.rel (%p596) target = $region88
        $region87: #{dhgslm_forward.2} parent=63 // pred_region
          %599 = dma.done [#allocation8], 64
        $region88: #{dhgslm_forward.2} parent=63 // pred_fallthru
          _
        %600 = sfence
        %s601 = sand.u32 %s54, 1
        %s602 = scalar_lea.sflag [#allocation7], %s601
        %s603 = sand.u32 %s54, 1
        %s604 = smul.addr %s603, 128
        %s605 = scalar_lea.vmem [#allocation6], %s604
        %p606 = pneg %p67
        %p607 = pneg %p64
        %s608 = sand.u32 %s44, 1
        %s609 = scalar_lea.sflag [#allocation10], %s608
        %s610 = sand.u32 %s82, 1
        %s611 = smul.addr %s610, 128
        %s612 = scalar_lea.vmem [#allocation9], %s611
        %p613 = pneg %p95
        %p614 = pneg %p92
        %s615 = sand.u32 %s44, 1
        %s616 = scalar_lea.sflag [#allocation10], %s615
        %s617 = sand.u32 %s110, 1
        %s618 = smul.addr %s617, 128
        %s619 = scalar_lea.vmem [#allocation11], %s618
        %p620 = pneg %p123
        %p621 = pneg %p120
        %s622 = sld [smem:[#allocation4 + %s44]]
        %p623 = scmp.lt.s32.totalorder %s622, 1
        %s624 = scalar_select %p623, %s622, 1
        %s625 = scalar_lea.vmem %s5, %s624
        %p626 = pneg %p151
        %p627 = pneg %p148
        %s628 = sand.u32 %s44, 1
        %s629 = scalar_lea.sflag [#allocation13], %s628
        %s630 = sand.u32 %s166, 1
        %s631 = smul.addr %s630, 128
        %s632 = scalar_lea.vmem [#allocation12], %s631
        %p633 = pneg %p179
        %p634 = pneg %p176
        %s635 = sld [smem:[#allocation5 + %s44]]
        %p636 = scmp.lt.s32.totalorder %s635, 1
        %s637 = scalar_select %p636, %s635, 1
        %s638 = scalar_lea.vmem %s7, %s637
        %p639 = pneg %p207
        %p640 = pneg %p204
        %s641 = sand.u32 %s44, 1
        %s642 = scalar_lea.sflag [#allocation13], %s641
        %s643 = sand.u32 %s226, 1
        %s644 = smul.addr %s643, 128
        %s645 = scalar_lea.vmem [#allocation14], %s644
        %p646 = pneg %p239
        %p647 = pneg %p236
        %p648 = scmp.lt.s32.totalorder %s44, 2
        %s649 = scalar_select %p648, %s44, 2
        %s650 = smul.addr %s649, 2
        %s651 = scalar_lea.vmem %s9, %s650
        %p652 = pneg %p265
        %p653 = pneg %p262
        %p654 = scmp.lt.s32.totalorder %s44, 2
        %s655 = scalar_select %p654, %s44, 2
        %s656 = smul.addr %s655, 2
        %s657 = scalar_lea.vmem %s10, %s656
        %p658 = pneg %p291
        %p659 = pneg %p288
        %p660 = scmp.lt.s32.totalorder %s44, 2
        %s661 = scalar_select %p660, %s44, 2
        %s662 = smul.addr %s661, 2
        %s663 = scalar_lea.vmem %s11, %s662
        %p664 = pneg %p317
        %p665 = pneg %p314
        %p666 = pneg %p338
        %p667 = pneg %p335
        %p668 = pneg %p364
        %p669 = pneg %p361
        %p670 = scmp.lt.s32.totalorder %s44, 2
        %s671 = scalar_select %p670, %s44, 2
        %s672 = smul.addr %s671, 16
        %s673 = smul.addr %s672, 8
        %s674 = scalar_lea.vmem %s13, %s673
        %s675 = sld [smem:[#allocation4 + %s44]]
        %s676 = smul.u32 16, %s675
        %s677 = sld [smem:[#allocation5 + %s44]]
        %s678 = smul.u32 16, %s677
        %s679 = sld [smem:[#allocation4 + %s44]]
        %s680 = sld [smem:[#allocation4 + %s44]]
        %p681 = scmp.lt.s32.totalorder %s680, 1
        %s682 = scalar_select %p681, %s680, 1
        %s683 = scalar_lea.vmem %s5, %s682
        %s684 = sld [smem:[#allocation4 + %s44]]
        %s685 = sld [smem:[#allocation5 + %s44]]
        %s686 = sld [smem:[#allocation5 + %s44]]
        %p687 = scmp.lt.s32.totalorder %s686, 1
        %s688 = scalar_select %p687, %s686, 1
        %s689 = scalar_lea.vmem %s7, %s688
        %s690 = sld [smem:[#allocation5 + %s44]]
        %s691 = sld [smem:[#allocation5 + %s44]]
        %s692 = sld [smem:[#allocation4 + %s44]]
        %s693 = smul.u32 16, %s691
        %p694 = scmp.lt.s32.totalorder %s44, 2
        %s695 = scalar_select %p694, %s44, 2
        %s696 = smul.addr %s695, 2
        %s697 = scalar_lea.vmem %s9, %s696
        %p698 = scmp.lt.s32.totalorder %s44, 2
        %s699 = scalar_select %p698, %s44, 2
        %s700 = smul.addr %s699, 2
        %s701 = scalar_lea.vmem %s10, %s700
        %p702 = scmp.lt.s32.totalorder %s44, 2
        %s703 = scalar_select %p702, %s44, 2
        %s704 = smul.addr %s703, 2
        %s705 = scalar_lea.vmem %s11, %s704
        %p706 = scmp.lt.s32.totalorder %s44, 2
        %s707 = scalar_select %p706, %s44, 2
        %s708 = smul.addr %s707, 16
        %s709 = smul.addr %s708, 8
        %s710 = scalar_lea.vmem %s13, %s709
        %v712 = vld [vmem:[%s591] sm:$0xff]
        %v713 = vld [vmem:[%s591 + $0x8] sm:$0xff]
        %v714 = vld [vmem:[%s591 + $0x10] sm:$0xff]
        %v715 = vld [vmem:[%s591 + $0x18] sm:$0xff]
        %v716 = vld [vmem:[%s591 + $0x20] sm:$0xff]
        %v717 = vld [vmem:[%s591 + $0x28] sm:$0xff]
        %v718 = vld [vmem:[%s591 + $0x30] sm:$0xff]
        %v719 = vld [vmem:[%s591 + $0x38] sm:$0xff]
        %v720 = vld [vmem:[%s591 + $0x40] sm:$0xff]
        %v721 = vld [vmem:[%s591 + $0x48] sm:$0xff]
        %v722 = vld [vmem:[%s591 + $0x50] sm:$0xff]
        %v723 = vld [vmem:[%s591 + $0x58] sm:$0xff]
        %v724 = vld [vmem:[%s591 + $0x60] sm:$0xff]
        %v725 = vld [vmem:[%s591 + $0x68] sm:$0xff]
        %v726 = vld [vmem:[%s591 + $0x70] sm:$0xff]
        %v727 = vld [vmem:[%s591 + $0x78] sm:$0xff]
        %v728 = vpack.c.bf16 %v713, %v712
        %v729 = vpack.c.bf16 %v715, %v714
        %v730 = vpack.c.bf16 %v717, %v716
        %v731 = vpack.c.bf16 %v719, %v718
        %v732 = vpack.c.bf16 %v721, %v720
        %v733 = vpack.c.bf16 %v723, %v722
        %v734 = vpack.c.bf16 %v725, %v724
        %v735 = vpack.c.bf16 %v727, %v726
        %v736 = vld [vmem:[%s555] sm:$0xff]
        %v737 = vld [vmem:[%s555 + $0x8] sm:$0xff]
        %v738 = vld [vmem:[%s555 + $0x10] sm:$0xff]
        %v739 = vld [vmem:[%s555 + $0x18] sm:$0xff]
        %v740 = vld [vmem:[%s555 + $0x20] sm:$0xff]
        %v741 = vld [vmem:[%s555 + $0x28] sm:$0xff]
        %v742 = vld [vmem:[%s555 + $0x30] sm:$0xff]
        %v743 = vld [vmem:[%s555 + $0x38] sm:$0xff]
        %v744 = vld [vmem:[%s555 + $0x40] sm:$0xff]
        %v745 = vld [vmem:[%s555 + $0x48] sm:$0xff]
        %v746 = vld [vmem:[%s555 + $0x50] sm:$0xff]
        %v747 = vld [vmem:[%s555 + $0x58] sm:$0xff]
        %v748 = vld [vmem:[%s555 + $0x60] sm:$0xff]
        %v749 = vld [vmem:[%s555 + $0x68] sm:$0xff]
        %v750 = vld [vmem:[%s555 + $0x70] sm:$0xff]
        %v751 = vld [vmem:[%s555 + $0x78] sm:$0xff]
        %v752 = vld [vmem:[%s701] sm:$0x3]
        %v753 = vadd.f32 %v736, %v737
        %v754 = vadd.f32 %v753, %v738
        %v755 = vadd.f32 %v754, %v739
        %v756 = vadd.f32 %v755, %v740
        %v757 = vadd.f32 %v756, %v741
        %v758 = vadd.f32 %v757, %v742
        %v759 = vadd.f32 %v758, %v743
        %v760 = vadd.f32 %v759, %v744
        %v761 = vadd.f32 %v760, %v745
        %v762 = vadd.f32 %v761, %v746
        %v763 = vadd.f32 %v762, %v747
        %v764 = vadd.f32 %v763, %v748
        %v765 = vadd.f32 %v764, %v749
        %v766 = vadd.f32 %v765, %v750
        %v767 = vadd.f32 %v766, %v751
        %768 = vadd.xlane.f32.xlu0 %v767
        %v769 = vpop.xlane.xlu0 %768
        %v770 = vrot.slane %v769, 4
        %v771 = vadd.f32 %v769, %v770
        %v772 = vrot.slane %v771, 2
        %v773 = vadd.f32 %v771, %v772
        %v774 = vrot.slane %v773, 1
        %v775 = vadd.f32 %v773, %v774
        %s776 = vtos %v775
        %p777 = scmp.eq.f32.partialorder %s776, 0.0
        %s778 = scalar_select %p777, 0.0, 1.0
        %779 = vadd.xlane.f32.xlu0 %v736
        %v780 = vpop.xlane.xlu0 %779
        %781 = vadd.xlane.f32.xlu0 %v737
        %v782 = vpop.xlane.xlu0 %781
        %783 = vadd.xlane.f32.xlu0 %v738
        %v784 = vpop.xlane.xlu0 %783
        %785 = vadd.xlane.f32.xlu0 %v739
        %v786 = vpop.xlane.xlu0 %785
        %787 = vadd.xlane.f32.xlu0 %v740
        %v788 = vpop.xlane.xlu0 %787
        %789 = vadd.xlane.f32.xlu0 %v741
        %v790 = vpop.xlane.xlu0 %789
        %791 = vadd.xlane.f32.xlu0 %v742
        %v792 = vpop.xlane.xlu0 %791
        %793 = vadd.xlane.f32.xlu0 %v743
        %v794 = vpop.xlane.xlu0 %793
        %795 = vadd.xlane.f32.xlu0 %v744
        %v796 = vpop.xlane.xlu0 %795
        %797 = vadd.xlane.f32.xlu0 %v745
        %v798 = vpop.xlane.xlu0 %797
        %799 = vadd.xlane.f32.xlu0 %v746
        %v800 = vpop.xlane.xlu0 %799
        %801 = vadd.xlane.f32.xlu0 %v747
        %v802 = vpop.xlane.xlu0 %801
        %803 = vadd.xlane.f32.xlu0 %v748
        %v804 = vpop.xlane.xlu0 %803
        %805 = vadd.xlane.f32.xlu0 %v749
        %v806 = vpop.xlane.xlu0 %805
        %807 = vadd.xlane.f32.xlu0 %v750
        %v808 = vpop.xlane.xlu0 %807
        %809 = vadd.xlane.f32.xlu0 %v751
        %v810 = vpop.xlane.xlu0 %809
        %vm811 = vcmp.eq.f32.partialorder %v780, 0.0
        %vm812 = vcmp.eq.f32.partialorder %v782, 0.0
        %vm813 = vcmp.eq.f32.partialorder %v784, 0.0
        %vm814 = vcmp.eq.f32.partialorder %v786, 0.0
        %vm815 = vcmp.eq.f32.partialorder %v788, 0.0
        %vm816 = vcmp.eq.f32.partialorder %v790, 0.0
        %vm817 = vcmp.eq.f32.partialorder %v792, 0.0
        %vm818 = vcmp.eq.f32.partialorder %v794, 0.0
        %vm819 = vcmp.eq.f32.partialorder %v796, 0.0
        %vm820 = vcmp.eq.f32.partialorder %v798, 0.0
        %vm821 = vcmp.eq.f32.partialorder %v800, 0.0
        %vm822 = vcmp.eq.f32.partialorder %v802, 0.0
        %vm823 = vcmp.eq.f32.partialorder %v804, 0.0
        %vm824 = vcmp.eq.f32.partialorder %v806, 0.0
        %vm825 = vcmp.eq.f32.partialorder %v808, 0.0
        %vm826 = vcmp.eq.f32.partialorder %v810, 0.0
        %v827 = vadd.f32 %v736, 1e-08
        %v828 = vadd.f32 %v737, 1e-08
        %v829 = vadd.f32 %v738, 1e-08
        %v830 = vadd.f32 %v739, 1e-08
        %v831 = vadd.f32 %v740, 1e-08
        %v832 = vadd.f32 %v741, 1e-08
        %v833 = vadd.f32 %v742, 1e-08
        %v834 = vadd.f32 %v743, 1e-08
        %v835 = vadd.f32 %v744, 1e-08
        %v836 = vadd.f32 %v745, 1e-08
        %v837 = vadd.f32 %v746, 1e-08
        %v838 = vadd.f32 %v747, 1e-08
        %v839 = vadd.f32 %v748, 1e-08
        %v840 = vadd.f32 %v749, 1e-08
        %v841 = vadd.f32 %v750, 1e-08
        %v842 = vadd.f32 %v751, 1e-08
        %v843 = vsel %vm811, 1, 0
        %v844 = vsel %vm812, 1, 0
        %v845 = vsel %vm813, 1, 0
        %v846 = vsel %vm814, 1, 0
        %v847 = vsel %vm815, 1, 0
        %v848 = vsel %vm816, 1, 0
        %v849 = vsel %vm817, 1, 0
        %v850 = vsel %vm818, 1, 0
        %v851 = vsel %vm819, 1, 0
        %v852 = vsel %vm820, 1, 0
        %v853 = vsel %vm821, 1, 0
        %v854 = vsel %vm822, 1, 0
        %v855 = vsel %vm823, 1, 0
        %v856 = vsel %vm824, 1, 0
        %v857 = vsel %vm825, 1, 0
        %v858 = vsel %vm826, 1, 0
        %vm859 = vcmp.eq.s32.totalorder %v843, 1
        %vm860 = vcmp.eq.s32.totalorder %v844, 1
        %vm861 = vcmp.eq.s32.totalorder %v845, 1
        %vm862 = vcmp.eq.s32.totalorder %v846, 1
        %vm863 = vcmp.eq.s32.totalorder %v847, 1
        %vm864 = vcmp.eq.s32.totalorder %v848, 1
        %vm865 = vcmp.eq.s32.totalorder %v849, 1
        %vm866 = vcmp.eq.s32.totalorder %v850, 1
        %vm867 = vcmp.eq.s32.totalorder %v851, 1
        %vm868 = vcmp.eq.s32.totalorder %v852, 1
        %vm869 = vcmp.eq.s32.totalorder %v853, 1
        %vm870 = vcmp.eq.s32.totalorder %v854, 1
        %vm871 = vcmp.eq.s32.totalorder %v855, 1
        %vm872 = vcmp.eq.s32.totalorder %v856, 1
        %vm873 = vcmp.eq.s32.totalorder %v857, 1
        %vm874 = vcmp.eq.s32.totalorder %v858, 1
        %v875 = vsel %vm859, %v827, %v736
        %v876 = vsel %vm860, %v828, %v737
        %v877 = vsel %vm861, %v829, %v738
        %v878 = vsel %vm862, %v830, %v739
        %v879 = vsel %vm863, %v831, %v740
        %v880 = vsel %vm864, %v832, %v741
        %v881 = vsel %vm865, %v833, %v742
        %v882 = vsel %vm866, %v834, %v743
        %v883 = vsel %vm867, %v835, %v744
        %v884 = vsel %vm868, %v836, %v745
        %v885 = vsel %vm869, %v837, %v746
        %v886 = vsel %vm870, %v838, %v747
        %v887 = vsel %vm871, %v839, %v748
        %v888 = vsel %vm872, %v840, %v749
        %v889 = vsel %vm873, %v841, %v750
        %v890 = vsel %vm874, %v842, %v751
        %v891 = vlaneseq
        %v892 = vshrl.u32 %v891, 7
        %v893 = vsub.s32 0, %v892
        %v894 = vrot.slane %v752, %v893
        %v895 = vmul.f32 %v875, %v894
        %v896 = vmul.f32 %v876, %v894
        %v897 = vmul.f32 %v877, %v894
        %v898 = vmul.f32 %v878, %v894
        %v899 = vmul.f32 %v879, %v894
        %v900 = vmul.f32 %v880, %v894
        %v901 = vmul.f32 %v881, %v894
        %v902 = vmul.f32 %v882, %v894
        %v903 = vmul.f32 %v883, %v894
        %v904 = vmul.f32 %v884, %v894
        %v905 = vmul.f32 %v885, %v894
        %v906 = vmul.f32 %v886, %v894
        %v907 = vmul.f32 %v887, %v894
        %v908 = vmul.f32 %v888, %v894
        %v909 = vmul.f32 %v889, %v894
        %v910 = vmul.f32 %v890, %v894
        %v911 = vmul.f32 %v895, %v895
        %v912 = vmul.f32 %v896, %v896
        %v913 = vmul.f32 %v897, %v897
        %v914 = vmul.f32 %v898, %v898
        %v915 = vmul.f32 %v899, %v899
        %v916 = vmul.f32 %v900, %v900
        %v917 = vmul.f32 %v901, %v901
        %v918 = vmul.f32 %v902, %v902
        %v919 = vmul.f32 %v903, %v903
        %v920 = vmul.f32 %v904, %v904
        %v921 = vmul.f32 %v905, %v905
        %v922 = vmul.f32 %v906, %v906
        %v923 = vmul.f32 %v907, %v907
        %v924 = vmul.f32 %v908, %v908
        %v925 = vmul.f32 %v909, %v909
        %v926 = vmul.f32 %v910, %v910
        %927 = vadd.xlane.f32.xlu0 %v911
        %v928 = vpop.xlane.xlu0 %927
        %929 = vadd.xlane.f32.xlu0 %v912
        %v930 = vpop.xlane.xlu0 %929
        %931 = vadd.xlane.f32.xlu0 %v913
        %v932 = vpop.xlane.xlu0 %931
        %933 = vadd.xlane.f32.xlu0 %v914
        %v934 = vpop.xlane.xlu0 %933
        %935 = vadd.xlane.f32.xlu0 %v915
        %v936 = vpop.xlane.xlu0 %935
        %937 = vadd.xlane.f32.xlu0 %v916
        %v938 = vpop.xlane.xlu0 %937
        %939 = vadd.xlane.f32.xlu0 %v917
        %v940 = vpop.xlane.xlu0 %939
        %941 = vadd.xlane.f32.xlu0 %v918
        %v942 = vpop.xlane.xlu0 %941
        %943 = vadd.xlane.f32.xlu0 %v919
        %v944 = vpop.xlane.xlu0 %943
        %945 = vadd.xlane.f32.xlu0 %v920
        %v946 = vpop.xlane.xlu0 %945
        %947 = vadd.xlane.f32.xlu0 %v921
        %v948 = vpop.xlane.xlu0 %947
        %949 = vadd.xlane.f32.xlu0 %v922
        %v950 = vpop.xlane.xlu0 %949
        %951 = vadd.xlane.f32.xlu0 %v923
        %v952 = vpop.xlane.xlu0 %951
        %953 = vadd.xlane.f32.xlu0 %v924
        %v954 = vpop.xlane.xlu0 %953
        %955 = vadd.xlane.f32.xlu0 %v925
        %v956 = vpop.xlane.xlu0 %955
        %957 = vadd.xlane.f32.xlu0 %v926
        %v958 = vpop.xlane.xlu0 %957
        %vm959 = vcmp.lt.f32.partialorder %v928, 1e-16
        %vm960 = vcmp.lt.f32.partialorder %v930, 1e-16
        %vm961 = vcmp.lt.f32.partialorder %v932, 1e-16
        %vm962 = vcmp.lt.f32.partialorder %v934, 1e-16
        %vm963 = vcmp.lt.f32.partialorder %v936, 1e-16
        %vm964 = vcmp.lt.f32.partialorder %v938, 1e-16
        %vm965 = vcmp.lt.f32.partialorder %v940, 1e-16
        %vm966 = vcmp.lt.f32.partialorder %v942, 1e-16
        %vm967 = vcmp.lt.f32.partialorder %v944, 1e-16
        %vm968 = vcmp.lt.f32.partialorder %v946, 1e-16
        %vm969 = vcmp.lt.f32.partialorder %v948, 1e-16
        %vm970 = vcmp.lt.f32.partialorder %v950, 1e-16
        %vm971 = vcmp.lt.f32.partialorder %v952, 1e-16
        %vm972 = vcmp.lt.f32.partialorder %v954, 1e-16
        %vm973 = vcmp.lt.f32.partialorder %v956, 1e-16
        %vm974 = vcmp.lt.f32.partialorder %v958, 1e-16
        %v975 = vrsqrt.pop %v928
        %v976 = vrsqrt.pop %v930
        %v977 = vrsqrt.pop %v932
        %v978 = vrsqrt.pop %v934
        %v979 = vrsqrt.pop %v936
        %v980 = vrsqrt.pop %v938
        %v981 = vrsqrt.pop %v940
        %v982 = vrsqrt.pop %v942
        %v983 = vrsqrt.pop %v944
        %v984 = vrsqrt.pop %v946
        %v985 = vrsqrt.pop %v948
        %v986 = vrsqrt.pop %v950
        %v987 = vrsqrt.pop %v952
        %v988 = vrsqrt.pop %v954
        %v989 = vrsqrt.pop %v956
        %v990 = vrsqrt.pop %v958
        %v991 = vsel %vm959, 1e+08, %v975
        %v992 = vsel %vm960, 1e+08, %v976
        %v993 = vsel %vm961, 1e+08, %v977
        %v994 = vsel %vm962, 1e+08, %v978
        %v995 = vsel %vm963, 1e+08, %v979
        %v996 = vsel %vm964, 1e+08, %v980
        %v997 = vsel %vm965, 1e+08, %v981
        %v998 = vsel %vm966, 1e+08, %v982
        %v999 = vsel %vm967, 1e+08, %v983
        %v1000 = vsel %vm968, 1e+08, %v984
        %v1001 = vsel %vm969, 1e+08, %v985
        %v1002 = vsel %vm970, 1e+08, %v986
        %v1003 = vsel %vm971, 1e+08, %v987
        %v1004 = vsel %vm972, 1e+08, %v988
        %v1005 = vsel %vm973, 1e+08, %v989
        %v1006 = vsel %vm974, 1e+08, %v990
        %v1007 = vmul.f32 %v895, %v991
        %v1008 = vmul.f32 %v896, %v992
        %v1009 = vmul.f32 %v897, %v993
        %v1010 = vmul.f32 %v898, %v994
        %v1011 = vmul.f32 %v899, %v995
        %v1012 = vmul.f32 %v900, %v996
        %v1013 = vmul.f32 %v901, %v997
        %v1014 = vmul.f32 %v902, %v998
        %v1015 = vmul.f32 %v903, %v999
        %v1016 = vmul.f32 %v904, %v1000
        %v1017 = vmul.f32 %v905, %v1001
        %v1018 = vmul.f32 %v906, %v1002
        %v1019 = vmul.f32 %v907, %v1003
        %v1020 = vmul.f32 %v908, %v1004
        %v1021 = vmul.f32 %v909, %v1005
        %v1022 = vmul.f32 %v910, %v1006
        %v1023 = vlaneseq
        %v1024 = vshrl.u32 %v1023, 7
        %v1025 = vsub.s32 1, %v1024
        %v1026 = vrot.slane %v752, %v1025
        %v1027 = vmul.f32 %v875, %v1026
        %v1028 = vmul.f32 %v876, %v1026
        %v1029 = vmul.f32 %v877, %v1026
        %v1030 = vmul.f32 %v878, %v1026
        %v1031 = vmul.f32 %v879, %v1026
        %v1032 = vmul.f32 %v880, %v1026
        %v1033 = vmul.f32 %v881, %v1026
        %v1034 = vmul.f32 %v882, %v1026
        %v1035 = vmul.f32 %v883, %v1026
        %v1036 = vmul.f32 %v884, %v1026
        %v1037 = vmul.f32 %v885, %v1026
        %v1038 = vmul.f32 %v886, %v1026
        %v1039 = vmul.f32 %v887, %v1026
        %v1040 = vmul.f32 %v888, %v1026
        %v1041 = vmul.f32 %v889, %v1026
        %v1042 = vmul.f32 %v890, %v1026
        %v1043 = vmul.f32 %v1027, %v1027
        %v1044 = vmul.f32 %v1028, %v1028
        %v1045 = vmul.f32 %v1029, %v1029
        %v1046 = vmul.f32 %v1030, %v1030
        %v1047 = vmul.f32 %v1031, %v1031
        %v1048 = vmul.f32 %v1032, %v1032
        %v1049 = vmul.f32 %v1033, %v1033
        %v1050 = vmul.f32 %v1034, %v1034
        %v1051 = vmul.f32 %v1035, %v1035
        %v1052 = vmul.f32 %v1036, %v1036
        %v1053 = vmul.f32 %v1037, %v1037
        %v1054 = vmul.f32 %v1038, %v1038
        %v1055 = vmul.f32 %v1039, %v1039
        %v1056 = vmul.f32 %v1040, %v1040
        %v1057 = vmul.f32 %v1041, %v1041
        %v1058 = vmul.f32 %v1042, %v1042
        %1059 = vadd.xlane.f32.xlu0 %v1043
        %v1060 = vpop.xlane.xlu0 %1059
        %1061 = vadd.xlane.f32.xlu0 %v1044
        %v1062 = vpop.xlane.xlu0 %1061
        %1063 = vadd.xlane.f32.xlu0 %v1045
        %v1064 = vpop.xlane.xlu0 %1063
        %1065 = vadd.xlane.f32.xlu0 %v1046
        %v1066 = vpop.xlane.xlu0 %1065
        %1067 = vadd.xlane.f32.xlu0 %v1047
        %v1068 = vpop.xlane.xlu0 %1067
        %1069 = vadd.xlane.f32.xlu0 %v1048
        %v1070 = vpop.xlane.xlu0 %1069
        %1071 = vadd.xlane.f32.xlu0 %v1049
        %v1072 = vpop.xlane.xlu0 %1071
        %1073 = vadd.xlane.f32.xlu0 %v1050
        %v1074 = vpop.xlane.xlu0 %1073
        %1075 = vadd.xlane.f32.xlu0 %v1051
        %v1076 = vpop.xlane.xlu0 %1075
        %1077 = vadd.xlane.f32.xlu0 %v1052
        %v1078 = vpop.xlane.xlu0 %1077
        %1079 = vadd.xlane.f32.xlu0 %v1053
        %v1080 = vpop.xlane.xlu0 %1079
        %1081 = vadd.xlane.f32.xlu0 %v1054
        %v1082 = vpop.xlane.xlu0 %1081
        %1083 = vadd.xlane.f32.xlu0 %v1055
        %v1084 = vpop.xlane.xlu0 %1083
        %1085 = vadd.xlane.f32.xlu0 %v1056
        %v1086 = vpop.xlane.xlu0 %1085
        %1087 = vadd.xlane.f32.xlu0 %v1057
        %v1088 = vpop.xlane.xlu0 %1087
        %1089 = vadd.xlane.f32.xlu0 %v1058
        %v1090 = vpop.xlane.xlu0 %1089
        %vm1091 = vcmp.lt.f32.partialorder %v1060, 1e-16
        %vm1092 = vcmp.lt.f32.partialorder %v1062, 1e-16
        %vm1093 = vcmp.lt.f32.partialorder %v1064, 1e-16
        %vm1094 = vcmp.lt.f32.partialorder %v1066, 1e-16
        %vm1095 = vcmp.lt.f32.partialorder %v1068, 1e-16
        %vm1096 = vcmp.lt.f32.partialorder %v1070, 1e-16
        %vm1097 = vcmp.lt.f32.partialorder %v1072, 1e-16
        %vm1098 = vcmp.lt.f32.partialorder %v1074, 1e-16
        %vm1099 = vcmp.lt.f32.partialorder %v1076, 1e-16
        %vm1100 = vcmp.lt.f32.partialorder %v1078, 1e-16
        %vm1101 = vcmp.lt.f32.partialorder %v1080, 1e-16
        %vm1102 = vcmp.lt.f32.partialorder %v1082, 1e-16
        %vm1103 = vcmp.lt.f32.partialorder %v1084, 1e-16
        %vm1104 = vcmp.lt.f32.partialorder %v1086, 1e-16
        %vm1105 = vcmp.lt.f32.partialorder %v1088, 1e-16
        %vm1106 = vcmp.lt.f32.partialorder %v1090, 1e-16
        %v1107 = vrsqrt.pop %v1060
        %v1108 = vrsqrt.pop %v1062
        %v1109 = vrsqrt.pop %v1064
        %v1110 = vrsqrt.pop %v1066
        %v1111 = vrsqrt.pop %v1068
        %v1112 = vrsqrt.pop %v1070
        %v1113 = vrsqrt.pop %v1072
        %v1114 = vrsqrt.pop %v1074
        %v1115 = vrsqrt.pop %v1076
        %v1116 = vrsqrt.pop %v1078
        %v1117 = vrsqrt.pop %v1080
        %v1118 = vrsqrt.pop %v1082
        %v1119 = vrsqrt.pop %v1084
        %v1120 = vrsqrt.pop %v1086
        %v1121 = vrsqrt.pop %v1088
        %v1122 = vrsqrt.pop %v1090
        %v1123 = vsel %vm1091, 1e+08, %v1107
        %v1124 = vsel %vm1092, 1e+08, %v1108
        %v1125 = vsel %vm1093, 1e+08, %v1109
        %v1126 = vsel %vm1094, 1e+08, %v1110
        %v1127 = vsel %vm1095, 1e+08, %v1111
        %v1128 = vsel %vm1096, 1e+08, %v1112
        %v1129 = vsel %vm1097, 1e+08, %v1113
        %v1130 = vsel %vm1098, 1e+08, %v1114
        %v1131 = vsel %vm1099, 1e+08, %v1115
        %v1132 = vsel %vm1100, 1e+08, %v1116
        %v1133 = vsel %vm1101, 1e+08, %v1117
        %v1134 = vsel %vm1102, 1e+08, %v1118
        %v1135 = vsel %vm1103, 1e+08, %v1119
        %v1136 = vsel %vm1104, 1e+08, %v1120
        %v1137 = vsel %vm1105, 1e+08, %v1121
        %v1138 = vsel %vm1106, 1e+08, %v1122
        %v1139 = vmul.f32 %v1027, %v1123
        %v1140 = vmul.f32 %v1028, %v1124
        %v1141 = vmul.f32 %v1029, %v1125
        %v1142 = vmul.f32 %v1030, %v1126
        %v1143 = vmul.f32 %v1031, %v1127
        %v1144 = vmul.f32 %v1032, %v1128
        %v1145 = vmul.f32 %v1033, %v1129
        %v1146 = vmul.f32 %v1034, %v1130
        %v1147 = vmul.f32 %v1035, %v1131
        %v1148 = vmul.f32 %v1036, %v1132
        %v1149 = vmul.f32 %v1037, %v1133
        %v1150 = vmul.f32 %v1038, %v1134
        %v1151 = vmul.f32 %v1039, %v1135
        %v1152 = vmul.f32 %v1040, %v1136
        %v1153 = vmul.f32 %v1041, %v1137
        %v1154 = vmul.f32 %v1042, %v1138
        %v1155 = vpack.c.bf16 %v1008, %v1007
        %v1156 = vpack.c.bf16 %v1140, %v1139
        %v1157 = vpack.c.bf16 %v1010, %v1009
        %v1158 = vpack.c.bf16 %v1142, %v1141
        %v1159 = vpack.c.bf16 %v1012, %v1011
        %v1160 = vpack.c.bf16 %v1144, %v1143
        %v1161 = vpack.c.bf16 %v1014, %v1013
        %v1162 = vpack.c.bf16 %v1146, %v1145
        %v1163 = vpack.c.bf16 %v1016, %v1015
        %v1164 = vpack.c.bf16 %v1148, %v1147
        %v1165 = vpack.c.bf16 %v1018, %v1017
        %v1166 = vpack.c.bf16 %v1150, %v1149
        %v1167 = vpack.c.bf16 %v1020, %v1019
        %v1168 = vpack.c.bf16 %v1152, %v1151
        %v1169 = vpack.c.bf16 %v1022, %v1021
        %v1170 = vpack.c.bf16 %v1154, %v1153
        %1171 = vmatprep.subr.bf16.mxu0 %v1156
        %1172 = vmatpush1.bf16.xpose.msra.mxu0 %v1155
        %1173 = vmatprep.subr.bf16.mxu0 %v1158
        %1174 = vmatpush1.bf16.xpose.msra.mxu0 %v1157
        %1175 = vmatprep.subr.bf16.mxu0 %v1160
        %1176 = vmatpush1.bf16.xpose.msra.mxu0 %v1159
        %1177 = vmatprep.subr.bf16.mxu0 %v1162
        %1178 = vmatpush1.bf16.xpose.msra.mxu0 %v1161
        %1179 = vmatprep.subr.bf16.mxu0 %v1164
        %1180 = vmatpush1.bf16.xpose.msra.mxu0 %v1163
        %1181 = vmatprep.subr.bf16.mxu0 %v1166
        %1182 = vmatpush1.bf16.xpose.msra.mxu0 %v1165
        %1183 = vmatprep.subr.bf16.mxu0 %v1168
        %1184 = vmatpush1.bf16.xpose.msra.mxu0 %v1167
        %1185 = vmatprep.subr.bf16.mxu0 %v1170
        %1186 = vmatpush1.bf16.xpose.msra.mxu0 %v1169
        %1187 = vmatprep.subr.bf16.mxu0 0
        %1188 = vmatpush1.bf16.xpose.msra.mxu0 0
        %1189 = vmatprep.subr.bf16.mxu0 0
        %1190 = vmatpush1.bf16.xpose.msra.mxu0 0
        %1191 = vmatprep.subr.bf16.mxu0 0
        %1192 = vmatpush1.bf16.xpose.msra.mxu0 0
        %1193 = vmatprep.subr.bf16.mxu0 0
        %1194 = vmatpush1.bf16.xpose.msra.mxu0 0
        %1195 = vmatprep.subr.bf16.mxu0 0
        %1196 = vmatpush1.bf16.xpose.msra.mxu0 0
        %1197 = vmatprep.subr.bf16.mxu0 0
        %1198 = vmatpush1.bf16.xpose.msra.mxu0 0
        %1199 = vmatprep.subr.bf16.mxu0 0
        %1200 = vmatpush1.bf16.xpose.msra.mxu0 0
        %1201 = vmatprep.subr.bf16.mxu0 0
        %1202 = vmatpush1.bf16.xpose.msra.mxu0 0
        %1203 = vmatprep.mubr.bf16.mxu0 %v1156
        %1204 = vmatmul.mubr.bf16.gmra.mrb[0].mxu0 %v1155
        %v1205 = vpop.f32.mrb[0].mxu0
        %v1206 = vadd.f32 0.0, %v1205
        %v1207 = vpop.f32.mrb[0].mxu0
        %v1208 = vpop.f32.mrb[0].mxu0
        %v1209 = vadd.f32 0.0, %v1208
        %v1210 = vpop.f32.mrb[0].mxu0
        %1211 = vmatprep.mubr.bf16.mxu0 %v1158
        %1212 = vmatmul.mubr.bf16.gmra.mrb[0].mxu0 %v1157
        %v1213 = vpop.f32.mrb[0].mxu0
        %v1214 = vadd.f32 0.0, %v1213
        %v1215 = vpop.f32.mrb[0].mxu0
        %v1216 = vpop.f32.mrb[0].mxu0
        %v1217 = vadd.f32 0.0, %v1216
        %v1218 = vpop.f32.mrb[0].mxu0
        %1219 = vmatprep.mubr.bf16.mxu0 %v1160
        %1220 = vmatmul.mubr.bf16.gmra.mrb[0].mxu0 %v1159
        %v1221 = vpop.f32.mrb[0].mxu0
        %v1222 = vadd.f32 0.0, %v1221
        %v1223 = vpop.f32.mrb[0].mxu0
        %v1224 = vpop.f32.mrb[0].mxu0
        %v1225 = vadd.f32 0.0, %v1224
        %v1226 = vpop.f32.mrb[0].mxu0
        %1227 = vmatprep.mubr.bf16.mxu0 %v1162
        %1228 = vmatmul.mubr.bf16.gmra.mrb[0].mxu0 %v1161
        %v1229 = vpop.f32.mrb[0].mxu0
        %v1230 = vadd.f32 0.0, %v1229
        %v1231 = vpop.f32.mrb[0].mxu0
        %v1232 = vpop.f32.mrb[0].mxu0
        %v1233 = vadd.f32 0.0, %v1232
        %v1234 = vpop.f32.mrb[0].mxu0
        %1235 = vmatprep.mubr.bf16.mxu0 %v1164
        %1236 = vmatmul.mubr.bf16.gmra.mrb[0].mxu0 %v1163
        %v1237 = vpop.f32.mrb[0].mxu0
        %v1238 = vadd.f32 0.0, %v1237
        %v1239 = vpop.f32.mrb[0].mxu0
        %v1240 = vpop.f32.mrb[0].mxu0
        %v1241 = vadd.f32 0.0, %v1240
        %v1242 = vpop.f32.mrb[0].mxu0
        %1243 = vmatprep.mubr.bf16.mxu0 %v1166
        %1244 = vmatmul.mubr.bf16.gmra.mrb[0].mxu0 %v1165
        %v1245 = vpop.f32.mrb[0].mxu0
        %v1246 = vadd.f32 0.0, %v1245
        %v1247 = vpop.f32.mrb[0].mxu0
        %v1248 = vpop.f32.mrb[0].mxu0
        %v1249 = vadd.f32 0.0, %v1248
        %v1250 = vpop.f32.mrb[0].mxu0
        %1251 = vmatprep.mubr.bf16.mxu0 %v1168
        %1252 = vmatmul.mubr.bf16.gmra.mrb[0].mxu0 %v1167
        %v1253 = vpop.f32.mrb[0].mxu0
        %v1254 = vadd.f32 0.0, %v1253
        %v1255 = vpop.f32.mrb[0].mxu0
        %v1256 = vpop.f32.mrb[0].mxu0
        %v1257 = vadd.f32 0.0, %v1256
        %v1258 = vpop.f32.mrb[0].mxu0
        %1259 = vmatprep.mubr.bf16.mxu0 %v1170
        %1260 = vmatmul.mubr.bf16.gmra.mrb[0].mxu0 %v1169
        %v1261 = vpop.f32.mrb[0].mxu0
        %v1262 = vadd.f32 0.0, %v1261
        %v1263 = vpop.f32.mrb[0].mxu0
        %v1264 = vpop.f32.mrb[0].mxu0
        %v1265 = vadd.f32 0.0, %v1264
        %v1266 = vpop.f32.mrb[0].mxu0
        %1267 = vdwg.mxu0
        %v1268 = vrcp.pop 2.0
        %s1269 = vtos %v1268
        %s1270 = smul.f32 %s778, %s1269
        %v1271 = vstv %s1270
        %v1272 = vmul.f32 %v1206, %v1271
        %v1273 = vmul.f32 %v1209, %v1271
        %v1274 = vmul.f32 %v1214, %v1271
        %v1275 = vmul.f32 %v1217, %v1271
        %v1276 = vmul.f32 %v1222, %v1271
        %v1277 = vmul.f32 %v1225, %v1271
        %v1278 = vmul.f32 %v1230, %v1271
        %v1279 = vmul.f32 %v1233, %v1271
        %v1280 = vmul.f32 %v1238, %v1271
        %v1281 = vmul.f32 %v1241, %v1271
        %v1282 = vmul.f32 %v1246, %v1271
        %v1283 = vmul.f32 %v1249, %v1271
        %v1284 = vmul.f32 %v1254, %v1271
        %v1285 = vmul.f32 %v1257, %v1271
        %v1286 = vmul.f32 %v1262, %v1271
        %v1287 = vmul.f32 %v1265, %v1271
        %vm1288 = vcmp.lt.f32.partialorder %v1272, 0.1
        %vm1289 = vcmp.lt.f32.partialorder %v1273, 0.1
        %vm1290 = vcmp.lt.f32.partialorder %v1274, 0.1
        %vm1291 = vcmp.lt.f32.partialorder %v1275, 0.1
        %vm1292 = vcmp.lt.f32.partialorder %v1276, 0.1
        %vm1293 = vcmp.lt.f32.partialorder %v1277, 0.1
        %vm1294 = vcmp.lt.f32.partialorder %v1278, 0.1
        %vm1295 = vcmp.lt.f32.partialorder %v1279, 0.1
        %vm1296 = vcmp.lt.f32.partialorder %v1280, 0.1
        %vm1297 = vcmp.lt.f32.partialorder %v1281, 0.1
        %vm1298 = vcmp.lt.f32.partialorder %v1282, 0.1
        %vm1299 = vcmp.lt.f32.partialorder %v1283, 0.1
        %vm1300 = vcmp.lt.f32.partialorder %v1284, 0.1
        %vm1301 = vcmp.lt.f32.partialorder %v1285, 0.1
        %vm1302 = vcmp.lt.f32.partialorder %v1286, 0.1
        %vm1303 = vcmp.lt.f32.partialorder %v1287, 0.1
        %v1304 = vsel %vm1288, 0.0, %v1272
        %v1305 = vsel %vm1289, 0.0, %v1273
        %v1306 = vsel %vm1290, 0.0, %v1274
        %v1307 = vsel %vm1291, 0.0, %v1275
        %v1308 = vsel %vm1292, 0.0, %v1276
        %v1309 = vsel %vm1293, 0.0, %v1277
        %v1310 = vsel %vm1294, 0.0, %v1278
        %v1311 = vsel %vm1295, 0.0, %v1279
        %v1312 = vsel %vm1296, 0.0, %v1280
        %v1313 = vsel %vm1297, 0.0, %v1281
        %v1314 = vsel %vm1298, 0.0, %v1282
        %v1315 = vsel %vm1299, 0.0, %v1283
        %v1316 = vsel %vm1300, 0.0, %v1284
        %v1317 = vsel %vm1301, 0.0, %v1285
        %v1318 = vsel %vm1302, 0.0, %v1286
        %v1319 = vsel %vm1303, 0.0, %v1287
        %v1320 = vpack.c.bf16 %v1305, %v1304
        %v1321 = vpack.c.bf16 %v1307, %v1306
        %v1322 = vpack.c.bf16 %v1309, %v1308
        %v1323 = vpack.c.bf16 %v1311, %v1310
        %v1324 = vpack.c.bf16 %v1313, %v1312
        %v1325 = vpack.c.bf16 %v1315, %v1314
        %v1326 = vpack.c.bf16 %v1317, %v1316
        %v1327 = vpack.c.bf16 %v1319, %v1318
        %1328 = vmatprep.subr.bf16.mxu0 0
        %1329 = vmatpush1.bf16.msra.mxu0 %v728
        %1330 = vmatprep.subr.bf16.mxu0 0
        %1331 = vmatpush1.bf16.msra.mxu0 %v729
        %1332 = vmatprep.subr.bf16.mxu0 0
        %1333 = vmatpush1.bf16.msra.mxu0 %v730
        %1334 = vmatprep.subr.bf16.mxu0 0
        %1335 = vmatpush1.bf16.msra.mxu0 %v731
        %1336 = vmatprep.subr.bf16.mxu0 0
        %1337 = vmatpush1.bf16.msra.mxu0 %v732
        %1338 = vmatprep.subr.bf16.mxu0 0
        %1339 = vmatpush1.bf16.msra.mxu0 %v733
        %1340 = vmatprep.subr.bf16.mxu0 0
        %1341 = vmatpush1.bf16.msra.mxu0 %v734
        %1342 = vmatprep.subr.bf16.mxu0 0
        %1343 = vmatpush1.bf16.msra.mxu0 %v735
        %1344 = vmatprep.subr.bf16.mxu0 0
        %1345 = vmatpush1.bf16.msra.mxu0 0
        %1346 = vmatprep.subr.bf16.mxu0 0
        %1347 = vmatpush1.bf16.msra.mxu0 0
        %1348 = vmatprep.subr.bf16.mxu0 0
        %1349 = vmatpush1.bf16.msra.mxu0 0
        %1350 = vmatprep.subr.bf16.mxu0 0
        %1351 = vmatpush1.bf16.msra.mxu0 0
        %1352 = vmatprep.subr.bf16.mxu0 0
        %1353 = vmatpush1.bf16.msra.mxu0 0
        %1354 = vmatprep.subr.bf16.mxu0 0
        %1355 = vmatpush1.bf16.msra.mxu0 0
        %1356 = vmatprep.subr.bf16.mxu0 0
        %1357 = vmatpush1.bf16.msra.mxu0 0
        %1358 = vmatprep.subr.bf16.mxu0 0
        %1359 = vmatpush1.bf16.msra.mxu0 0
        %1360 = vmatprep.mubr.bf16.mxu0 0
        %1361 = vmatmul.mubr.bf16.gmra.mrb[0].mxu0 %v1320
        %v1362 = vpop.f32.mrb[0].mxu0
        %v1363 = vadd.f32 0.0, %v1362
        %v1364 = vpop.f32.mrb[0].mxu0
        %v1365 = vpop.f32.mrb[0].mxu0
        %v1366 = vadd.f32 0.0, %v1365
        %v1367 = vpop.f32.mrb[0].mxu0
        %1368 = vmatprep.mubr.bf16.mxu0 0
        %1369 = vmatmul.mubr.bf16.gmra.mrb[0].mxu0 %v1321
        %v1370 = vpop.f32.mrb[0].mxu0
        %v1371 = vadd.f32 0.0, %v1370
        %v1372 = vpop.f32.mrb[0].mxu0
        %v1373 = vpop.f32.mrb[0].mxu0
        %v1374 = vadd.f32 0.0, %v1373
        %v1375 = vpop.f32.mrb[0].mxu0
        %1376 = vmatprep.mubr.bf16.mxu0 0
        %1377 = vmatmul.mubr.bf16.gmra.mrb[0].mxu0 %v1322
        %v1378 = vpop.f32.mrb[0].mxu0
        %v1379 = vadd.f32 0.0, %v1378
        %v1380 = vpop.f32.mrb[0].mxu0
        %v1381 = vpop.f32.mrb[0].mxu0
        %v1382 = vadd.f32 0.0, %v1381
        %v1383 = vpop.f32.mrb[0].mxu0
        %1384 = vmatprep.mubr.bf16.mxu0 0
        %1385 = vmatmul.mubr.bf16.gmra.mrb[0].mxu0 %v1323
        %v1386 = vpop.f32.mrb[0].mxu0
        %v1387 = vadd.f32 0.0, %v1386
        %v1388 = vpop.f32.mrb[0].mxu0
        %v1389 = vpop.f32.mrb[0].mxu0
        %v1390 = vadd.f32 0.0, %v1389
        %v1391 = vpop.f32.mrb[0].mxu0
        %1392 = vmatprep.mubr.bf16.mxu0 0
        %1393 = vmatmul.mubr.bf16.gmra.mrb[0].mxu0 %v1324
        %v1394 = vpop.f32.mrb[0].mxu0
        %v1395 = vadd.f32 0.0, %v1394
        %v1396 = vpop.f32.mrb[0].mxu0
        %v1397 = vpop.f32.mrb[0].mxu0
        %v1398 = vadd.f32 0.0, %v1397
        %v1399 = vpop.f32.mrb[0].mxu0
        %1400 = vmatprep.mubr.bf16.mxu0 0
        %1401 = vmatmul.mubr.bf16.gmra.mrb[0].mxu0 %v1325
        %v1402 = vpop.f32.mrb[0].mxu0
        %v1403 = vadd.f32 0.0, %v1402
        %v1404 = vpop.f32.mrb[0].mxu0
        %v1405 = vpop.f32.mrb[0].mxu0
        %v1406 = vadd.f32 0.0, %v1405
        %v1407 = vpop.f32.mrb[0].mxu0
        %1408 = vmatprep.mubr.bf16.mxu0 0
        %1409 = vmatmul.mubr.bf16.gmra.mrb[0].mxu0 %v1326
        %v1410 = vpop.f32.mrb[0].mxu0
        %v1411 = vadd.f32 0.0, %v1410
        %v1412 = vpop.f32.mrb[0].mxu0
        %v1413 = vpop.f32.mrb[0].mxu0
        %v1414 = vadd.f32 0.0, %v1413
        %v1415 = vpop.f32.mrb[0].mxu0
        %1416 = vmatprep.mubr.bf16.mxu0 0
        %1417 = vmatmul.mubr.bf16.gmra.mrb[0].mxu0 %v1327
        %v1418 = vpop.f32.mrb[0].mxu0
        %v1419 = vadd.f32 0.0, %v1418
        %v1420 = vpop.f32.mrb[0].mxu0
        %v1421 = vpop.f32.mrb[0].mxu0
        %v1422 = vadd.f32 0.0, %v1421
        %v1423 = vpop.f32.mrb[0].mxu0
        %1424 = vdwg.mxu0
        %v1425 = vand.u32 2147483647, %v1363
        %v1426 = vand.u32 2147483647, %v1366
        %v1427 = vand.u32 2147483647, %v1371
        %v1428 = vand.u32 2147483647, %v1374
        %v1429 = vand.u32 2147483647, %v1379
        %v1430 = vand.u32 2147483647, %v1382
        %v1431 = vand.u32 2147483647, %v1387
        %v1432 = vand.u32 2147483647, %v1390
        %v1433 = vand.u32 2147483647, %v1395
        %v1434 = vand.u32 2147483647, %v1398
        %v1435 = vand.u32 2147483647, %v1403
        %v1436 = vand.u32 2147483647, %v1406
        %v1437 = vand.u32 2147483647, %v1411
        %v1438 = vand.u32 2147483647, %v1414
        %v1439 = vand.u32 2147483647, %v1419
        %v1440 = vand.u32 2147483647, %v1422
        %v1441 = vadd.f32 %v1425, %v1426
        %v1442 = vadd.f32 %v1441, %v1427
        %v1443 = vadd.f32 %v1442, %v1428
        %v1444 = vadd.f32 %v1443, %v1429
        %v1445 = vadd.f32 %v1444, %v1430
        %v1446 = vadd.f32 %v1445, %v1431
        %v1447 = vadd.f32 %v1446, %v1432
        %v1448 = vadd.f32 %v1447, %v1433
        %v1449 = vadd.f32 %v1448, %v1434
        %v1450 = vadd.f32 %v1449, %v1435
        %v1451 = vadd.f32 %v1450, %v1436
        %v1452 = vadd.f32 %v1451, %v1437
        %v1453 = vadd.f32 %v1452, %v1438
        %v1454 = vadd.f32 %v1453, %v1439
        %v1455 = vadd.f32 %v1454, %v1440
        %v1456 = vrot.slane %v1455, 4
        %v1457 = vadd.f32 %v1455, %v1456
        %v1458 = vrot.slane %v1457, 2
        %v1459 = vadd.f32 %v1457, %v1458
        %v1460 = vrot.slane %v1459, 1
        %v1461 = vadd.f32 %v1459, %v1460
        %v1462 = vmax.f32 %v1461, 1e-12
        %v1463 = vrcp.pop %v1462
        %v1464 = vmul.f32 1.0, %v1463
        %s1465 = smul.u32 %s44, 128
        %s1466 = sadd.s32 %s1465, 1
        %s1467 = sld [smem:[#allocation15 + %s1466]]
        %v1468 = vstv %s1467
        %v1469 = vmul.f32 %v1464, %v1468
        %v1470 = vmul.f32 %v1363, %v1469
        %v1471 = vmul.f32 %v1366, %v1469
        %v1472 = vmul.f32 %v1371, %v1469
        %v1473 = vmul.f32 %v1374, %v1469
        %v1474 = vmul.f32 %v1379, %v1469
        %v1475 = vmul.f32 %v1382, %v1469
        %v1476 = vmul.f32 %v1387, %v1469
        %v1477 = vmul.f32 %v1390, %v1469
        %v1478 = vmul.f32 %v1395, %v1469
        %v1479 = vmul.f32 %v1398, %v1469
        %v1480 = vmul.f32 %v1403, %v1469
        %v1481 = vmul.f32 %v1406, %v1469
        %v1482 = vmul.f32 %v1411, %v1469
        %v1483 = vmul.f32 %v1414, %v1469
        %v1484 = vmul.f32 %v1419, %v1469
        %v1485 = vmul.f32 %v1422, %v1469
        %v1486 = vld [vmem:[%s564] sm:$0xff]
        %v1487 = vld [vmem:[%s564 + $0x8] sm:$0xff]
        %v1488 = vld [vmem:[%s564 + $0x10] sm:$0xff]
        %v1489 = vld [vmem:[%s564 + $0x18] sm:$0xff]
        %v1490 = vld [vmem:[%s564 + $0x20] sm:$0xff]
        %v1491 = vld [vmem:[%s564 + $0x28] sm:$0xff]
        %v1492 = vld [vmem:[%s564 + $0x30] sm:$0xff]
        %v1493 = vld [vmem:[%s564 + $0x38] sm:$0xff]
        %v1494 = vld [vmem:[%s564 + $0x40] sm:$0xff]
        %v1495 = vld [vmem:[%s564 + $0x48] sm:$0xff]
        %v1496 = vld [vmem:[%s564 + $0x50] sm:$0xff]
        %v1497 = vld [vmem:[%s564 + $0x58] sm:$0xff]
        %v1498 = vld [vmem:[%s564 + $0x60] sm:$0xff]
        %v1499 = vld [vmem:[%s564 + $0x68] sm:$0xff]
        %v1500 = vld [vmem:[%s564 + $0x70] sm:$0xff]
        %v1501 = vld [vmem:[%s564 + $0x78] sm:$0xff]
        %v1502 = vld [vmem:[%s705] sm:$0x3]
        %v1503 = vadd.f32 %v1486, %v1487
        %v1504 = vadd.f32 %v1503, %v1488
        %v1505 = vadd.f32 %v1504, %v1489
        %v1506 = vadd.f32 %v1505, %v1490
        %v1507 = vadd.f32 %v1506, %v1491
        %v1508 = vadd.f32 %v1507, %v1492
        %v1509 = vadd.f32 %v1508, %v1493
        %v1510 = vadd.f32 %v1509, %v1494
        %v1511 = vadd.f32 %v1510, %v1495
        %v1512 = vadd.f32 %v1511, %v1496
        %v1513 = vadd.f32 %v1512, %v1497
        %v1514 = vadd.f32 %v1513, %v1498
        %v1515 = vadd.f32 %v1514, %v1499
        %v1516 = vadd.f32 %v1515, %v1500
        %v1517 = vadd.f32 %v1516, %v1501
        %1518 = vadd.xlane.f32.xlu0 %v1517
        %v1519 = vpop.xlane.xlu0 %1518
        %v1520 = vrot.slane %v1519, 4
        %v1521 = vadd.f32 %v1519, %v1520
        %v1522 = vrot.slane %v1521, 2
        %v1523 = vadd.f32 %v1521, %v1522
        %v1524 = vrot.slane %v1523, 1
        %v1525 = vadd.f32 %v1523, %v1524
        %s1526 = vtos %v1525
        %p1527 = scmp.eq.f32.partialorder %s1526, 0.0
        %s1528 = scalar_select %p1527, 0.0, 1.0
        %1529 = vadd.xlane.f32.xlu0 %v1486
        %v1530 = vpop.xlane.xlu0 %1529
        %1531 = vadd.xlane.f32.xlu0 %v1487
        %v1532 = vpop.xlane.xlu0 %1531
        %1533 = vadd.xlane.f32.xlu0 %v1488
        %v1534 = vpop.xlane.xlu0 %1533
        %1535 = vadd.xlane.f32.xlu0 %v1489
        %v1536 = vpop.xlane.xlu0 %1535
        %1537 = vadd.xlane.f32.xlu0 %v1490
        %v1538 = vpop.xlane.xlu0 %1537
        %1539 = vadd.xlane.f32.xlu0 %v1491
        %v1540 = vpop.xlane.xlu0 %1539
        %1541 = vadd.xlane.f32.xlu0 %v1492
        %v1542 = vpop.xlane.xlu0 %1541
        %1543 = vadd.xlane.f32.xlu0 %v1493
        %v1544 = vpop.xlane.xlu0 %1543
        %1545 = vadd.xlane.f32.xlu0 %v1494
        %v1546 = vpop.xlane.xlu0 %1545
        %1547 = vadd.xlane.f32.xlu0 %v1495
        %v1548 = vpop.xlane.xlu0 %1547
        %1549 = vadd.xlane.f32.xlu0 %v1496
        %v1550 = vpop.xlane.xlu0 %1549
        %1551 = vadd.xlane.f32.xlu0 %v1497
        %v1552 = vpop.xlane.xlu0 %1551
        %1553 = vadd.xlane.f32.xlu0 %v1498
        %v1554 = vpop.xlane.xlu0 %1553
        %1555 = vadd.xlane.f32.xlu0 %v1499
        %v1556 = vpop.xlane.xlu0 %1555
        %1557 = vadd.xlane.f32.xlu0 %v1500
        %v1558 = vpop.xlane.xlu0 %1557
        %1559 = vadd.xlane.f32.xlu0 %v1501
        %v1560 = vpop.xlane.xlu0 %1559
        %vm1561 = vcmp.eq.f32.partialorder %v1530, 0.0
        %vm1562 = vcmp.eq.f32.partialorder %v1532, 0.0
        %vm1563 = vcmp.eq.f32.partialorder %v1534, 0.0
        %vm1564 = vcmp.eq.f32.partialorder %v1536, 0.0
        %vm1565 = vcmp.eq.f32.partialorder %v1538, 0.0
        %vm1566 = vcmp.eq.f32.partialorder %v1540, 0.0
        %vm1567 = vcmp.eq.f32.partialorder %v1542, 0.0
        %vm1568 = vcmp.eq.f32.partialorder %v1544, 0.0
        %vm1569 = vcmp.eq.f32.partialorder %v1546, 0.0
        %vm1570 = vcmp.eq.f32.partialorder %v1548, 0.0
        %vm1571 = vcmp.eq.f32.partialorder %v1550, 0.0
        %vm1572 = vcmp.eq.f32.partialorder %v1552, 0.0
        %vm1573 = vcmp.eq.f32.partialorder %v1554, 0.0
        %vm1574 = vcmp.eq.f32.partialorder %v1556, 0.0
        %vm1575 = vcmp.eq.f32.partialorder %v1558, 0.0
        %vm1576 = vcmp.eq.f32.partialorder %v1560, 0.0
        %v1577 = vadd.f32 %v1486, 1e-08
        %v1578 = vadd.f32 %v1487, 1e-08
        %v1579 = vadd.f32 %v1488, 1e-08
        %v1580 = vadd.f32 %v1489, 1e-08
        %v1581 = vadd.f32 %v1490, 1e-08
        %v1582 = vadd.f32 %v1491, 1e-08
        %v1583 = vadd.f32 %v1492, 1e-08
        %v1584 = vadd.f32 %v1493, 1e-08
        %v1585 = vadd.f32 %v1494, 1e-08
        %v1586 = vadd.f32 %v1495, 1e-08
        %v1587 = vadd.f32 %v1496, 1e-08
        %v1588 = vadd.f32 %v1497, 1e-08
        %v1589 = vadd.f32 %v1498, 1e-08
        %v1590 = vadd.f32 %v1499, 1e-08
        %v1591 = vadd.f32 %v1500, 1e-08
        %v1592 = vadd.f32 %v1501, 1e-08
        %v1593 = vsel %vm1561, 1, 0
        %v1594 = vsel %vm1562, 1, 0
        %v1595 = vsel %vm1563, 1, 0
        %v1596 = vsel %vm1564, 1, 0
        %v1597 = vsel %vm1565, 1, 0
        %v1598 = vsel %vm1566, 1, 0
        %v1599 = vsel %vm1567, 1, 0
        %v1600 = vsel %vm1568, 1, 0
        %v1601 = vsel %vm1569, 1, 0
        %v1602 = vsel %vm1570, 1, 0
        %v1603 = vsel %vm1571, 1, 0
        %v1604 = vsel %vm1572, 1, 0
        %v1605 = vsel %vm1573, 1, 0
        %v1606 = vsel %vm1574, 1, 0
        %v1607 = vsel %vm1575, 1, 0
        %v1608 = vsel %vm1576, 1, 0
        %vm1609 = vcmp.eq.s32.totalorder %v1593, 1
        %vm1610 = vcmp.eq.s32.totalorder %v1594, 1
        %vm1611 = vcmp.eq.s32.totalorder %v1595, 1
        %vm1612 = vcmp.eq.s32.totalorder %v1596, 1
        %vm1613 = vcmp.eq.s32.totalorder %v1597, 1
        %vm1614 = vcmp.eq.s32.totalorder %v1598, 1
        %vm1615 = vcmp.eq.s32.totalorder %v1599, 1
        %vm1616 = vcmp.eq.s32.totalorder %v1600, 1
        %vm1617 = vcmp.eq.s32.totalorder %v1601, 1
        %vm1618 = vcmp.eq.s32.totalorder %v1602, 1
        %vm1619 = vcmp.eq.s32.totalorder %v1603, 1
        %vm1620 = vcmp.eq.s32.totalorder %v1604, 1
        %vm1621 = vcmp.eq.s32.totalorder %v1605, 1
        %vm1622 = vcmp.eq.s32.totalorder %v1606, 1
        %vm1623 = vcmp.eq.s32.totalorder %v1607, 1
        %vm1624 = vcmp.eq.s32.totalorder %v1608, 1
        %v1625 = vsel %vm1609, %v1577, %v1486
        %v1626 = vsel %vm1610, %v1578, %v1487
        %v1627 = vsel %vm1611, %v1579, %v1488
        %v1628 = vsel %vm1612, %v1580, %v1489
        %v1629 = vsel %vm1613, %v1581, %v1490
        %v1630 = vsel %vm1614, %v1582, %v1491
        %v1631 = vsel %vm1615, %v1583, %v1492
        %v1632 = vsel %vm1616, %v1584, %v1493
        %v1633 = vsel %vm1617, %v1585, %v1494
        %v1634 = vsel %vm1618, %v1586, %v1495
        %v1635 = vsel %vm1619, %v1587, %v1496
        %v1636 = vsel %vm1620, %v1588, %v1497
        %v1637 = vsel %vm1621, %v1589, %v1498
        %v1638 = vsel %vm1622, %v1590, %v1499
        %v1639 = vsel %vm1623, %v1591, %v1500
        %v1640 = vsel %vm1624, %v1592, %v1501
        %v1641 = vlaneseq
        %v1642 = vshrl.u32 %v1641, 7
        %v1643 = vsub.s32 0, %v1642
        %v1644 = vrot.slane %v1502, %v1643
        %v1645 = vmul.f32 %v1625, %v1644
        %v1646 = vmul.f32 %v1626, %v1644
        %v1647 = vmul.f32 %v1627, %v1644
        %v1648 = vmul.f32 %v1628, %v1644
        %v1649 = vmul.f32 %v1629, %v1644
        %v1650 = vmul.f32 %v1630, %v1644
        %v1651 = vmul.f32 %v1631, %v1644
        %v1652 = vmul.f32 %v1632, %v1644
        %v1653 = vmul.f32 %v1633, %v1644
        %v1654 = vmul.f32 %v1634, %v1644
        %v1655 = vmul.f32 %v1635, %v1644
        %v1656 = vmul.f32 %v1636, %v1644
        %v1657 = vmul.f32 %v1637, %v1644
        %v1658 = vmul.f32 %v1638, %v1644
        %v1659 = vmul.f32 %v1639, %v1644
        %v1660 = vmul.f32 %v1640, %v1644
        %v1661 = vmul.f32 %v1645, %v1645
        %v1662 = vmul.f32 %v1646, %v1646
        %v1663 = vmul.f32 %v1647, %v1647
        %v1664 = vmul.f32 %v1648, %v1648
        %v1665 = vmul.f32 %v1649, %v1649
        %v1666 = vmul.f32 %v1650, %v1650
        %v1667 = vmul.f32 %v1651, %v1651
        %v1668 = vmul.f32 %v1652, %v1652
        %v1669 = vmul.f32 %v1653, %v1653
        %v1670 = vmul.f32 %v1654, %v1654
        %v1671 = vmul.f32 %v1655, %v1655
        %v1672 = vmul.f32 %v1656, %v1656
        %v1673 = vmul.f32 %v1657, %v1657
        %v1674 = vmul.f32 %v1658, %v1658
        %v1675 = vmul.f32 %v1659, %v1659
        %v1676 = vmul.f32 %v1660, %v1660
        %1677 = vadd.xlane.f32.xlu0 %v1661
        %v1678 = vpop.xlane.xlu0 %1677
        %1679 = vadd.xlane.f32.xlu0 %v1662
        %v1680 = vpop.xlane.xlu0 %1679
        %1681 = vadd.xlane.f32.xlu0 %v1663
        %v1682 = vpop.xlane.xlu0 %1681
        %1683 = vadd.xlane.f32.xlu0 %v1664
        %v1684 = vpop.xlane.xlu0 %1683
        %1685 = vadd.xlane.f32.xlu0 %v1665
        %v1686 = vpop.xlane.xlu0 %1685
        %1687 = vadd.xlane.f32.xlu0 %v1666
        %v1688 = vpop.xlane.xlu0 %1687
        %1689 = vadd.xlane.f32.xlu0 %v1667
        %v1690 = vpop.xlane.xlu0 %1689
        %1691 = vadd.xlane.f32.xlu0 %v1668
        %v1692 = vpop.xlane.xlu0 %1691
        %1693 = vadd.xlane.f32.xlu0 %v1669
        %v1694 = vpop.xlane.xlu0 %1693
        %1695 = vadd.xlane.f32.xlu0 %v1670
        %v1696 = vpop.xlane.xlu0 %1695
        %1697 = vadd.xlane.f32.xlu0 %v1671
        %v1698 = vpop.xlane.xlu0 %1697
        %1699 = vadd.xlane.f32.xlu0 %v1672
        %v1700 = vpop.xlane.xlu0 %1699
        %1701 = vadd.xlane.f32.xlu0 %v1673
        %v1702 = vpop.xlane.xlu0 %1701
        %1703 = vadd.xlane.f32.xlu0 %v1674
        %v1704 = vpop.xlane.xlu0 %1703
        %1705 = vadd.xlane.f32.xlu0 %v1675
        %v1706 = vpop.xlane.xlu0 %1705
        %1707 = vadd.xlane.f32.xlu0 %v1676
        %v1708 = vpop.xlane.xlu0 %1707
        %vm1709 = vcmp.lt.f32.partialorder %v1678, 1e-16
        %vm1710 = vcmp.lt.f32.partialorder %v1680, 1e-16
        %vm1711 = vcmp.lt.f32.partialorder %v1682, 1e-16
        %vm1712 = vcmp.lt.f32.partialorder %v1684, 1e-16
        %vm1713 = vcmp.lt.f32.partialorder %v1686, 1e-16
        %vm1714 = vcmp.lt.f32.partialorder %v1688, 1e-16
        %vm1715 = vcmp.lt.f32.partialorder %v1690, 1e-16
        %vm1716 = vcmp.lt.f32.partialorder %v1692, 1e-16
        %vm1717 = vcmp.lt.f32.partialorder %v1694, 1e-16
        %vm1718 = vcmp.lt.f32.partialorder %v1696, 1e-16
        %vm1719 = vcmp.lt.f32.partialorder %v1698, 1e-16
        %vm1720 = vcmp.lt.f32.partialorder %v1700, 1e-16
        %vm1721 = vcmp.lt.f32.partialorder %v1702, 1e-16
        %vm1722 = vcmp.lt.f32.partialorder %v1704, 1e-16
        %vm1723 = vcmp.lt.f32.partialorder %v1706, 1e-16
        %vm1724 = vcmp.lt.f32.partialorder %v1708, 1e-16
        %v1725 = vrsqrt.pop %v1678
        %v1726 = vrsqrt.pop %v1680
        %v1727 = vrsqrt.pop %v1682
        %v1728 = vrsqrt.pop %v1684
        %v1729 = vrsqrt.pop %v1686
        %v1730 = vrsqrt.pop %v1688
        %v1731 = vrsqrt.pop %v1690
        %v1732 = vrsqrt.pop %v1692
        %v1733 = vrsqrt.pop %v1694
        %v1734 = vrsqrt.pop %v1696
        %v1735 = vrsqrt.pop %v1698
        %v1736 = vrsqrt.pop %v1700
        %v1737 = vrsqrt.pop %v1702
        %v1738 = vrsqrt.pop %v1704
        %v1739 = vrsqrt.pop %v1706
        %v1740 = vrsqrt.pop %v1708
        %v1741 = vsel %vm1709, 1e+08, %v1725
        %v1742 = vsel %vm1710, 1e+08, %v1726
        %v1743 = vsel %vm1711, 1e+08, %v1727
        %v1744 = vsel %vm1712, 1e+08, %v1728
        %v1745 = vsel %vm1713, 1e+08, %v1729
        %v1746 = vsel %vm1714, 1e+08, %v1730
        %v1747 = vsel %vm1715, 1e+08, %v1731
        %v1748 = vsel %vm1716, 1e+08, %v1732
        %v1749 = vsel %vm1717, 1e+08, %v1733
        %v1750 = vsel %vm1718, 1e+08, %v1734
        %v1751 = vsel %vm1719, 1e+08, %v1735
        %v1752 = vsel %vm1720, 1e+08, %v1736
        %v1753 = vsel %vm1721, 1e+08, %v1737
        %v1754 = vsel %vm1722, 1e+08, %v1738
        %v1755 = vsel %vm1723, 1e+08, %v1739
        %v1756 = vsel %vm1724, 1e+08, %v1740
        %v1757 = vmul.f32 %v1645, %v1741
        %v1758 = vmul.f32 %v1646, %v1742
        %v1759 = vmul.f32 %v1647, %v1743
        %v1760 = vmul.f32 %v1648, %v1744
        %v1761 = vmul.f32 %v1649, %v1745
        %v1762 = vmul.f32 %v1650, %v1746
        %v1763 = vmul.f32 %v1651, %v1747
        %v1764 = vmul.f32 %v1652, %v1748
        %v1765 = vmul.f32 %v1653, %v1749
        %v1766 = vmul.f32 %v1654, %v1750
        %v1767 = vmul.f32 %v1655, %v1751
        %v1768 = vmul.f32 %v1656, %v1752
        %v1769 = vmul.f32 %v1657, %v1753
        %v1770 = vmul.f32 %v1658, %v1754
        %v1771 = vmul.f32 %v1659, %v1755
        %v1772 = vmul.f32 %v1660, %v1756
        %v1773 = vlaneseq
        %v1774 = vshrl.u32 %v1773, 7
        %v1775 = vsub.s32 1, %v1774
        %v1776 = vrot.slane %v1502, %v1775
        %v1777 = vmul.f32 %v1625, %v1776
        %v1778 = vmul.f32 %v1626, %v1776
        %v1779 = vmul.f32 %v1627, %v1776
        %v1780 = vmul.f32 %v1628, %v1776
        %v1781 = vmul.f32 %v1629, %v1776
        %v1782 = vmul.f32 %v1630, %v1776
        %v1783 = vmul.f32 %v1631, %v1776
        %v1784 = vmul.f32 %v1632, %v1776
        %v1785 = vmul.f32 %v1633, %v1776
        %v1786 = vmul.f32 %v1634, %v1776
        %v1787 = vmul.f32 %v1635, %v1776
        %v1788 = vmul.f32 %v1636, %v1776
        %v1789 = vmul.f32 %v1637, %v1776
        %v1790 = vmul.f32 %v1638, %v1776
        %v1791 = vmul.f32 %v1639, %v1776
        %v1792 = vmul.f32 %v1640, %v1776
        %v1793 = vmul.f32 %v1777, %v1777
        %v1794 = vmul.f32 %v1778, %v1778
        %v1795 = vmul.f32 %v1779, %v1779
        %v1796 = vmul.f32 %v1780, %v1780
        %v1797 = vmul.f32 %v1781, %v1781
        %v1798 = vmul.f32 %v1782, %v1782
        %v1799 = vmul.f32 %v1783, %v1783
        %v1800 = vmul.f32 %v1784, %v1784
        %v1801 = vmul.f32 %v1785, %v1785
        %v1802 = vmul.f32 %v1786, %v1786
        %v1803 = vmul.f32 %v1787, %v1787
        %v1804 = vmul.f32 %v1788, %v1788
        %v1805 = vmul.f32 %v1789, %v1789
        %v1806 = vmul.f32 %v1790, %v1790
        %v1807 = vmul.f32 %v1791, %v1791
        %v1808 = vmul.f32 %v1792, %v1792
        %1809 = vadd.xlane.f32.xlu0 %v1793
        %v1810 = vpop.xlane.xlu0 %1809
        %1811 = vadd.xlane.f32.xlu0 %v1794
        %v1812 = vpop.xlane.xlu0 %1811
        %1813 = vadd.xlane.f32.xlu0 %v1795
        %v1814 = vpop.xlane.xlu0 %1813
        %1815 = vadd.xlane.f32.xlu0 %v1796
        %v1816 = vpop.xlane.xlu0 %1815
        %1817 = vadd.xlane.f32.xlu0 %v1797
        %v1818 = vpop.xlane.xlu0 %1817
        %1819 = vadd.xlane.f32.xlu0 %v1798
        %v1820 = vpop.xlane.xlu0 %1819
        %1821 = vadd.xlane.f32.xlu0 %v1799
        %v1822 = vpop.xlane.xlu0 %1821
        %1823 = vadd.xlane.f32.xlu0 %v1800
        %v1824 = vpop.xlane.xlu0 %1823
        %1825 = vadd.xlane.f32.xlu0 %v1801
        %v1826 = vpop.xlane.xlu0 %1825
        %1827 = vadd.xlane.f32.xlu0 %v1802
        %v1828 = vpop.xlane.xlu0 %1827
        %1829 = vadd.xlane.f32.xlu0 %v1803
        %v1830 = vpop.xlane.xlu0 %1829
        %1831 = vadd.xlane.f32.xlu0 %v1804
        %v1832 = vpop.xlane.xlu0 %1831
        %1833 = vadd.xlane.f32.xlu0 %v1805
        %v1834 = vpop.xlane.xlu0 %1833
        %1835 = vadd.xlane.f32.xlu0 %v1806
        %v1836 = vpop.xlane.xlu0 %1835
        %1837 = vadd.xlane.f32.xlu0 %v1807
        %v1838 = vpop.xlane.xlu0 %1837
        %1839 = vadd.xlane.f32.xlu0 %v1808
        %v1840 = vpop.xlane.xlu0 %1839
        %vm1841 = vcmp.lt.f32.partialorder %v1810, 1e-16
        %vm1842 = vcmp.lt.f32.partialorder %v1812, 1e-16
        %vm1843 = vcmp.lt.f32.partialorder %v1814, 1e-16
        %vm1844 = vcmp.lt.f32.partialorder %v1816, 1e-16
        %vm1845 = vcmp.lt.f32.partialorder %v1818, 1e-16
        %vm1846 = vcmp.lt.f32.partialorder %v1820, 1e-16
        %vm1847 = vcmp.lt.f32.partialorder %v1822, 1e-16
        %vm1848 = vcmp.lt.f32.partialorder %v1824, 1e-16
        %vm1849 = vcmp.lt.f32.partialorder %v1826, 1e-16
        %vm1850 = vcmp.lt.f32.partialorder %v1828, 1e-16
        %vm1851 = vcmp.lt.f32.partialorder %v1830, 1e-16
        %vm1852 = vcmp.lt.f32.partialorder %v1832, 1e-16
        %vm1853 = vcmp.lt.f32.partialorder %v1834, 1e-16
        %vm1854 = vcmp.lt.f32.partialorder %v1836, 1e-16
        %vm1855 = vcmp.lt.f32.partialorder %v1838, 1e-16
        %vm1856 = vcmp.lt.f32.partialorder %v1840, 1e-16
        %v1857 = vrsqrt.pop %v1810
        %v1858 = vrsqrt.pop %v1812
        %v1859 = vrsqrt.pop %v1814
        %v1860 = vrsqrt.pop %v1816
        %v1861 = vrsqrt.pop %v1818
        %v1862 = vrsqrt.pop %v1820
        %v1863 = vrsqrt.pop %v1822
        %v1864 = vrsqrt.pop %v1824
        %v1865 = vrsqrt.pop %v1826
        %v1866 = vrsqrt.pop %v1828
        %v1867 = vrsqrt.pop %v1830
        %v1868 = vrsqrt.pop %v1832
        %v1869 = vrsqrt.pop %v1834
        %v1870 = vrsqrt.pop %v1836
        %v1871 = vrsqrt.pop %v1838
        %v1872 = vrsqrt.pop %v1840
        %v1873 = vsel %vm1841, 1e+08, %v1857
        %v1874 = vsel %vm1842, 1e+08, %v1858
        %v1875 = vsel %vm1843, 1e+08, %v1859
        %v1876 = vsel %vm1844, 1e+08, %v1860
        %v1877 = vsel %vm1845, 1e+08, %v1861
        %v1878 = vsel %vm1846, 1e+08, %v1862
        %v1879 = vsel %vm1847, 1e+08, %v1863
        %v1880 = vsel %vm1848, 1e+08, %v1864
        %v1881 = vsel %vm1849, 1e+08, %v1865
        %v1882 = vsel %vm1850, 1e+08, %v1866
        %v1883 = vsel %vm1851, 1e+08, %v1867
        %v1884 = vsel %vm1852, 1e+08, %v1868
        %v1885 = vsel %vm1853, 1e+08, %v1869
        %v1886 = vsel %vm1854, 1e+08, %v1870
        %v1887 = vsel %vm1855, 1e+08, %v1871
        %v1888 = vsel %vm1856, 1e+08, %v1872
        %v1889 = vmul.f32 %v1777, %v1873
        %v1890 = vmul.f32 %v1778, %v1874
        %v1891 = vmul.f32 %v1779, %v1875
        %v1892 = vmul.f32 %v1780, %v1876
        %v1893 = vmul.f32 %v1781, %v1877
        %v1894 = vmul.f32 %v1782, %v1878
        %v1895 = vmul.f32 %v1783, %v1879
        %v1896 = vmul.f32 %v1784, %v1880
        %v1897 = vmul.f32 %v1785, %v1881
        %v1898 = vmul.f32 %v1786, %v1882
        %v1899 = vmul.f32 %v1787, %v1883
        %v1900 = vmul.f32 %v1788, %v1884
        %v1901 = vmul.f32 %v1789, %v1885
        %v1902 = vmul.f32 %v1790, %v1886
        %v1903 = vmul.f32 %v1791, %v1887
        %v1904 = vmul.f32 %v1792, %v1888
        %v1905 = vpack.c.bf16 %v1758, %v1757
        %v1906 = vpack.c.bf16 %v1890, %v1889
        %v1907 = vpack.c.bf16 %v1760, %v1759
        %v1908 = vpack.c.bf16 %v1892, %v1891
        %v1909 = vpack.c.bf16 %v1762, %v1761
        %v1910 = vpack.c.bf16 %v1894, %v1893
        %v1911 = vpack.c.bf16 %v1764, %v1763
        %v1912 = vpack.c.bf16 %v1896, %v1895
        %v1913 = vpack.c.bf16 %v1766, %v1765
        %v1914 = vpack.c.bf16 %v1898, %v1897
        %v1915 = vpack.c.bf16 %v1768, %v1767
        %v1916 = vpack.c.bf16 %v1900, %v1899
        %v1917 = vpack.c.bf16 %v1770, %v1769
        %v1918 = vpack.c.bf16 %v1902, %v1901
        %v1919 = vpack.c.bf16 %v1772, %v1771
        %v1920 = vpack.c.bf16 %v1904, %v1903
        %1921 = vmatprep.subr.bf16.mxu0 %v1906
        %1922 = vmatpush1.bf16.xpose.msra.mxu0 %v1905
        %1923 = vmatprep.subr.bf16.mxu0 %v1908
        %1924 = vmatpush1.bf16.xpose.msra.mxu0 %v1907
        %1925 = vmatprep.subr.bf16.mxu0 %v1910
        %1926 = vmatpush1.bf16.xpose.msra.mxu0 %v1909
        %1927 = vmatprep.subr.bf16.mxu0 %v1912
        %1928 = vmatpush1.bf16.xpose.msra.mxu0 %v1911
        %1929 = vmatprep.subr.bf16.mxu0 %v1914
        %1930 = vmatpush1.bf16.xpose.msra.mxu0 %v1913
        %1931 = vmatprep.subr.bf16.mxu0 %v1916
        %1932 = vmatpush1.bf16.xpose.msra.mxu0 %v1915
        %1933 = vmatprep.subr.bf16.mxu0 %v1918
        %1934 = vmatpush1.bf16.xpose.msra.mxu0 %v1917
        %1935 = vmatprep.subr.bf16.mxu0 %v1920
        %1936 = vmatpush1.bf16.xpose.msra.mxu0 %v1919
        %1937 = vmatprep.subr.bf16.mxu0 0
        %1938 = vmatpush1.bf16.xpose.msra.mxu0 0
        %1939 = vmatprep.subr.bf16.mxu0 0
        %1940 = vmatpush1.bf16.xpose.msra.mxu0 0
        %1941 = vmatprep.subr.bf16.mxu0 0
        %1942 = vmatpush1.bf16.xpose.msra.mxu0 0
        %1943 = vmatprep.subr.bf16.mxu0 0
        %1944 = vmatpush1.bf16.xpose.msra.mxu0 0
        %1945 = vmatprep.subr.bf16.mxu0 0
        %1946 = vmatpush1.bf16.xpose.msra.mxu0 0
        %1947 = vmatprep.subr.bf16.mxu0 0
        %1948 = vmatpush1.bf16.xpose.msra.mxu0 0
        %1949 = vmatprep.subr.bf16.mxu0 0
        %1950 = vmatpush1.bf16.xpose.msra.mxu0 0
        %1951 = vmatprep.subr.bf16.mxu0 0
        %1952 = vmatpush1.bf16.xpose.msra.mxu0 0
        %1953 = vmatprep.mubr.bf16.mxu0 %v1906
        %1954 = vmatmul.mubr.bf16.gmra.mrb[0].mxu0 %v1905
        %v1955 = vpop.f32.mrb[0].mxu0
        %v1956 = vadd.f32 0.0, %v1955
        %v1957 = vpop.f32.mrb[0].mxu0
        %v1958 = vpop.f32.mrb[0].mxu0
        %v1959 = vadd.f32 0.0, %v1958
        %v1960 = vpop.f32.mrb[0].mxu0
        %1961 = vmatprep.mubr.bf16.mxu0 %v1908
        %1962 = vmatmul.mubr.bf16.gmra.mrb[0].mxu0 %v1907
        %v1963 = vpop.f32.mrb[0].mxu0
        %v1964 = vadd.f32 0.0, %v1963
        %v1965 = vpop.f32.mrb[0].mxu0
        %v1966 = vpop.f32.mrb[0].mxu0
        %v1967 = vadd.f32 0.0, %v1966
        %v1968 = vpop.f32.mrb[0].mxu0
        %1969 = vmatprep.mubr.bf16.mxu0 %v1910
        %1970 = vmatmul.mubr.bf16.gmra.mrb[0].mxu0 %v1909
        %v1971 = vpop.f32.mrb[0].mxu0
        %v1972 = vadd.f32 0.0, %v1971
        %v1973 = vpop.f32.mrb[0].mxu0
        %v1974 = vpop.f32.mrb[0].mxu0
        %v1975 = vadd.f32 0.0, %v1974
        %v1976 = vpop.f32.mrb[0].mxu0
        %1977 = vmatprep.mubr.bf16.mxu0 %v1912
        %1978 = vmatmul.mubr.bf16.gmra.mrb[0].mxu0 %v1911
        %v1979 = vpop.f32.mrb[0].mxu0
        %v1980 = vadd.f32 0.0, %v1979
        %v1981 = vpop.f32.mrb[0].mxu0
        %v1982 = vpop.f32.mrb[0].mxu0
        %v1983 = vadd.f32 0.0, %v1982
        %v1984 = vpop.f32.mrb[0].mxu0
        %1985 = vmatprep.mubr.bf16.mxu0 %v1914
        %1986 = vmatmul.mubr.bf16.gmra.mrb[0].mxu0 %v1913
        %v1987 = vpop.f32.mrb[0].mxu0
        %v1988 = vadd.f32 0.0, %v1987
        %v1989 = vpop.f32.mrb[0].mxu0
        %v1990 = vpop.f32.mrb[0].mxu0
        %v1991 = vadd.f32 0.0, %v1990
        %v1992 = vpop.f32.mrb[0].mxu0
        %1993 = vmatprep.mubr.bf16.mxu0 %v1916
        %1994 = vmatmul.mubr.bf16.gmra.mrb[0].mxu0 %v1915
        %v1995 = vpop.f32.mrb[0].mxu0
        %v1996 = vadd.f32 0.0, %v1995
        %v1997 = vpop.f32.mrb[0].mxu0
        %v1998 = vpop.f32.mrb[0].mxu0
        %v1999 = vadd.f32 0.0, %v1998
        %v2000 = vpop.f32.mrb[0].mxu0
        %2001 = vmatprep.mubr.bf16.mxu0 %v1918
        %2002 = vmatmul.mubr.bf16.gmra.mrb[0].mxu0 %v1917
        %v2003 = vpop.f32.mrb[0].mxu0
        %v2004 = vadd.f32 0.0, %v2003
        %v2005 = vpop.f32.mrb[0].mxu0
        %v2006 = vpop.f32.mrb[0].mxu0
        %v2007 = vadd.f32 0.0, %v2006
        %v2008 = vpop.f32.mrb[0].mxu0
        %2009 = vmatprep.mubr.bf16.mxu0 %v1920
        %2010 = vmatmul.mubr.bf16.gmra.mrb[0].mxu0 %v1919
        %v2011 = vpop.f32.mrb[0].mxu0
        %v2012 = vadd.f32 0.0, %v2011
        %v2013 = vpop.f32.mrb[0].mxu0
        %v2014 = vpop.f32.mrb[0].mxu0
        %v2015 = vadd.f32 0.0, %v2014
        %v2016 = vpop.f32.mrb[0].mxu0
        %2017 = vdwg.mxu0
        %v2018 = vrcp.pop 2.0
        %s2019 = vtos %v2018
        %s2020 = smul.f32 %s1528, %s2019
        %v2021 = vstv %s2020
        %v2022 = vmul.f32 %v1956, %v2021
        %v2023 = vmul.f32 %v1959, %v2021
        %v2024 = vmul.f32 %v1964, %v2021
        %v2025 = vmul.f32 %v1967, %v2021
        %v2026 = vmul.f32 %v1972, %v2021
        %v2027 = vmul.f32 %v1975, %v2021
        %v2028 = vmul.f32 %v1980, %v2021
        %v2029 = vmul.f32 %v1983, %v2021
        %v2030 = vmul.f32 %v1988, %v2021
        %v2031 = vmul.f32 %v1991, %v2021
        %v2032 = vmul.f32 %v1996, %v2021
        %v2033 = vmul.f32 %v1999, %v2021
        %v2034 = vmul.f32 %v2004, %v2021
        %v2035 = vmul.f32 %v2007, %v2021
        %v2036 = vmul.f32 %v2012, %v2021
        %v2037 = vmul.f32 %v2015, %v2021
        %vm2038 = vcmp.lt.f32.partialorder %v2022, 0.1
        %vm2039 = vcmp.lt.f32.partialorder %v2023, 0.1
        %vm2040 = vcmp.lt.f32.partialorder %v2024, 0.1
        %vm2041 = vcmp.lt.f32.partialorder %v2025, 0.1
        %vm2042 = vcmp.lt.f32.partialorder %v2026, 0.1
        %vm2043 = vcmp.lt.f32.partialorder %v2027, 0.1
        %vm2044 = vcmp.lt.f32.partialorder %v2028, 0.1
        %vm2045 = vcmp.lt.f32.partialorder %v2029, 0.1
        %vm2046 = vcmp.lt.f32.partialorder %v2030, 0.1
        %vm2047 = vcmp.lt.f32.partialorder %v2031, 0.1
        %vm2048 = vcmp.lt.f32.partialorder %v2032, 0.1
        %vm2049 = vcmp.lt.f32.partialorder %v2033, 0.1
        %vm2050 = vcmp.lt.f32.partialorder %v2034, 0.1
        %vm2051 = vcmp.lt.f32.partialorder %v2035, 0.1
        %vm2052 = vcmp.lt.f32.partialorder %v2036, 0.1
        %vm2053 = vcmp.lt.f32.partialorder %v2037, 0.1
        %v2054 = vsel %vm2038, 0.0, %v2022
        %v2055 = vsel %vm2039, 0.0, %v2023
        %v2056 = vsel %vm2040, 0.0, %v2024
        %v2057 = vsel %vm2041, 0.0, %v2025
        %v2058 = vsel %vm2042, 0.0, %v2026
        %v2059 = vsel %vm2043, 0.0, %v2027
        %v2060 = vsel %vm2044, 0.0, %v2028
        %v2061 = vsel %vm2045, 0.0, %v2029
        %v2062 = vsel %vm2046, 0.0, %v2030
        %v2063 = vsel %vm2047, 0.0, %v2031
        %v2064 = vsel %vm2048, 0.0, %v2032
        %v2065 = vsel %vm2049, 0.0, %v2033
        %v2066 = vsel %vm2050, 0.0, %v2034
        %v2067 = vsel %vm2051, 0.0, %v2035
        %v2068 = vsel %vm2052, 0.0, %v2036
        %v2069 = vsel %vm2053, 0.0, %v2037
        %v2070 = vpack.c.bf16 %v2055, %v2054
        %v2071 = vpack.c.bf16 %v2057, %v2056
        %v2072 = vpack.c.bf16 %v2059, %v2058
        %v2073 = vpack.c.bf16 %v2061, %v2060
        %v2074 = vpack.c.bf16 %v2063, %v2062
        %v2075 = vpack.c.bf16 %v2065, %v2064
        %v2076 = vpack.c.bf16 %v2067, %v2066
        %v2077 = vpack.c.bf16 %v2069, %v2068
        %2078 = vmatprep.subr.bf16.mxu0 0
        %2079 = vmatpush1.bf16.msra.mxu0 %v2070
        %2080 = vmatprep.subr.bf16.mxu0 0
        %2081 = vmatpush1.bf16.msra.mxu0 %v2071
        %2082 = vmatprep.subr.bf16.mxu0 0
        %2083 = vmatpush1.bf16.msra.mxu0 %v2072
        %2084 = vmatprep.subr.bf16.mxu0 0
        %2085 = vmatpush1.bf16.msra.mxu0 %v2073
        %2086 = vmatprep.subr.bf16.mxu0 0
        %2087 = vmatpush1.bf16.msra.mxu0 %v2074
        %2088 = vmatprep.subr.bf16.mxu0 0
        %2089 = vmatpush1.bf16.msra.mxu0 %v2075
        %2090 = vmatprep.subr.bf16.mxu0 0
        %2091 = vmatpush1.bf16.msra.mxu0 %v2076
        %2092 = vmatprep.subr.bf16.mxu0 0
        %2093 = vmatpush1.bf16.msra.mxu0 %v2077
        %2094 = vmatprep.subr.bf16.mxu0 0
        %2095 = vmatpush1.bf16.msra.mxu0 0
        %2096 = vmatprep.subr.bf16.mxu0 0
        %2097 = vmatpush1.bf16.msra.mxu0 0
        %2098 = vmatprep.subr.bf16.mxu0 0
        %2099 = vmatpush1.bf16.msra.mxu0 0
        %2100 = vmatprep.subr.bf16.mxu0 0
        %2101 = vmatpush1.bf16.msra.mxu0 0
        %2102 = vmatprep.subr.bf16.mxu0 0
        %2103 = vmatpush1.bf16.msra.mxu0 0
        %2104 = vmatprep.subr.bf16.mxu0 0
        %2105 = vmatpush1.bf16.msra.mxu0 0
        %2106 = vmatprep.subr.bf16.mxu0 0
        %2107 = vmatpush1.bf16.msra.mxu0 0
        %2108 = vmatprep.subr.bf16.mxu0 0
        %2109 = vmatpush1.bf16.msra.mxu0 0
        %2110 = vmatprep.mubr.bf16.mxu0 0
        %2111 = vmatmul.mubr.bf16.gmra.mrb[0].mxu0 %v728
        %v2112 = vpop.f32.mrb[0].mxu0
        %v2113 = vadd.f32 0.0, %v2112
        %v2114 = vpop.f32.mrb[0].mxu0
        %v2115 = vpop.f32.mrb[0].mxu0
        %v2116 = vadd.f32 0.0, %v2115
        %v2117 = vpop.f32.mrb[0].mxu0
        %2118 = vmatprep.mubr.bf16.mxu0 0
        %2119 = vmatmul.mubr.bf16.gmra.mrb[0].mxu0 %v729
        %v2120 = vpop.f32.mrb[0].mxu0
        %v2121 = vadd.f32 0.0, %v2120
        %v2122 = vpop.f32.mrb[0].mxu0
        %v2123 = vpop.f32.mrb[0].mxu0
        %v2124 = vadd.f32 0.0, %v2123
        %v2125 = vpop.f32.mrb[0].mxu0
        %2126 = vmatprep.mubr.bf16.mxu0 0
        %2127 = vmatmul.mubr.bf16.gmra.mrb[0].mxu0 %v730
        %v2128 = vpop.f32.mrb[0].mxu0
        %v2129 = vadd.f32 0.0, %v2128
        %v2130 = vpop.f32.mrb[0].mxu0
        %v2131 = vpop.f32.mrb[0].mxu0
        %v2132 = vadd.f32 0.0, %v2131
        %v2133 = vpop.f32.mrb[0].mxu0
        %2134 = vmatprep.mubr.bf16.mxu0 0
        %2135 = vmatmul.mubr.bf16.gmra.mrb[0].mxu0 %v731
        %v2136 = vpop.f32.mrb[0].mxu0
        %v2137 = vadd.f32 0.0, %v2136
        %v2138 = vpop.f32.mrb[0].mxu0
        %v2139 = vpop.f32.mrb[0].mxu0
        %v2140 = vadd.f32 0.0, %v2139
        %v2141 = vpop.f32.mrb[0].mxu0
        %2142 = vmatprep.mubr.bf16.mxu0 0
        %2143 = vmatmul.mubr.bf16.gmra.mrb[0].mxu0 %v732
        %v2144 = vpop.f32.mrb[0].mxu0
        %v2145 = vadd.f32 0.0, %v2144
        %v2146 = vpop.f32.mrb[0].mxu0
        %v2147 = vpop.f32.mrb[0].mxu0
        %v2148 = vadd.f32 0.0, %v2147
        %v2149 = vpop.f32.mrb[0].mxu0
        %2150 = vmatprep.mubr.bf16.mxu0 0
        %2151 = vmatmul.mubr.bf16.gmra.mrb[0].mxu0 %v733
        %v2152 = vpop.f32.mrb[0].mxu0
        %v2153 = vadd.f32 0.0, %v2152
        %v2154 = vpop.f32.mrb[0].mxu0
        %v2155 = vpop.f32.mrb[0].mxu0
        %v2156 = vadd.f32 0.0, %v2155
        %v2157 = vpop.f32.mrb[0].mxu0
        %2158 = vmatprep.mubr.bf16.mxu0 0
        %2159 = vmatmul.mubr.bf16.gmra.mrb[0].mxu0 %v734
        %v2160 = vpop.f32.mrb[0].mxu0
        %v2161 = vadd.f32 0.0, %v2160
        %v2162 = vpop.f32.mrb[0].mxu0
        %v2163 = vpop.f32.mrb[0].mxu0
        %v2164 = vadd.f32 0.0, %v2163
        %v2165 = vpop.f32.mrb[0].mxu0
        %2166 = vmatprep.mubr.bf16.mxu0 0
        %2167 = vmatmul.mubr.bf16.gmra.mrb[0].mxu0 %v735
        %v2168 = vpop.f32.mrb[0].mxu0
        %v2169 = vadd.f32 0.0, %v2168
        %v2170 = vpop.f32.mrb[0].mxu0
        %v2171 = vpop.f32.mrb[0].mxu0
        %v2172 = vadd.f32 0.0, %v2171
        %v2173 = vpop.f32.mrb[0].mxu0
        %2174 = vdwg.mxu0
        %v2175 = vand.u32 2147483647, %v2113
        %v2176 = vand.u32 2147483647, %v2116
        %v2177 = vand.u32 2147483647, %v2121
        %v2178 = vand.u32 2147483647, %v2124
        %v2179 = vand.u32 2147483647, %v2129
        %v2180 = vand.u32 2147483647, %v2132
        %v2181 = vand.u32 2147483647, %v2137
        %v2182 = vand.u32 2147483647, %v2140
        %v2183 = vand.u32 2147483647, %v2145
        %v2184 = vand.u32 2147483647, %v2148
        %v2185 = vand.u32 2147483647, %v2153
        %v2186 = vand.u32 2147483647, %v2156
        %v2187 = vand.u32 2147483647, %v2161
        %v2188 = vand.u32 2147483647, %v2164
        %v2189 = vand.u32 2147483647, %v2169
        %v2190 = vand.u32 2147483647, %v2172
        %v2191 = vadd.f32 %v2175, %v2176
        %v2192 = vadd.f32 %v2191, %v2177
        %v2193 = vadd.f32 %v2192, %v2178
        %v2194 = vadd.f32 %v2193, %v2179
        %v2195 = vadd.f32 %v2194, %v2180
        %v2196 = vadd.f32 %v2195, %v2181
        %v2197 = vadd.f32 %v2196, %v2182
        %v2198 = vadd.f32 %v2197, %v2183
        %v2199 = vadd.f32 %v2198, %v2184
        %v2200 = vadd.f32 %v2199, %v2185
        %v2201 = vadd.f32 %v2200, %v2186
        %v2202 = vadd.f32 %v2201, %v2187
        %v2203 = vadd.f32 %v2202, %v2188
        %v2204 = vadd.f32 %v2203, %v2189
        %v2205 = vadd.f32 %v2204, %v2190
        %v2206 = vrot.slane %v2205, 4
        %v2207 = vadd.f32 %v2205, %v2206
        %v2208 = vrot.slane %v2207, 2
        %v2209 = vadd.f32 %v2207, %v2208
        %v2210 = vrot.slane %v2209, 1
        %v2211 = vadd.f32 %v2209, %v2210
        %v2212 = vmax.f32 %v2211, 1e-12
        %v2213 = vrcp.pop %v2212
        %v2214 = vmul.f32 1.0, %v2213
        %s2215 = sadd.s32 %s1465, 2
        %s2216 = sld [smem:[#allocation15 + %s2215]]
        %v2217 = vstv %s2216
        %v2218 = vmul.f32 %v2214, %v2217
        %v2219 = vmul.f32 %v2113, %v2218
        %v2220 = vmul.f32 %v2116, %v2218
        %v2221 = vmul.f32 %v2121, %v2218
        %v2222 = vmul.f32 %v2124, %v2218
        %v2223 = vmul.f32 %v2129, %v2218
        %v2224 = vmul.f32 %v2132, %v2218
        %v2225 = vmul.f32 %v2137, %v2218
        %v2226 = vmul.f32 %v2140, %v2218
        %v2227 = vmul.f32 %v2145, %v2218
        %v2228 = vmul.f32 %v2148, %v2218
        %v2229 = vmul.f32 %v2153, %v2218
        %v2230 = vmul.f32 %v2156, %v2218
        %v2231 = vmul.f32 %v2161, %v2218
        %v2232 = vmul.f32 %v2164, %v2218
        %v2233 = vmul.f32 %v2169, %v2218
        %v2234 = vmul.f32 %v2172, %v2218
        %v2235 = vadd.f32 %v1470, %v2219
        %v2236 = vadd.f32 %v1471, %v2220
        %v2237 = vadd.f32 %v1472, %v2221
        %v2238 = vadd.f32 %v1473, %v2222
        %v2239 = vadd.f32 %v1474, %v2223
        %v2240 = vadd.f32 %v1475, %v2224
        %v2241 = vadd.f32 %v1476, %v2225
        %v2242 = vadd.f32 %v1477, %v2226
        %v2243 = vadd.f32 %v1478, %v2227
        %v2244 = vadd.f32 %v1479, %v2228
        %v2245 = vadd.f32 %v1480, %v2229
        %v2246 = vadd.f32 %v1481, %v2230
        %v2247 = vadd.f32 %v1482, %v2231
        %v2248 = vadd.f32 %v1483, %v2232
        %v2249 = vadd.f32 %v1484, %v2233
        %v2250 = vadd.f32 %v1485, %v2234
        %v2251 = vld [vmem:[%s573] sm:$0xff]
        %v2252 = vld [vmem:[%s573 + $0x8] sm:$0xff]
        %v2253 = vld [vmem:[%s573 + $0x10] sm:$0xff]
        %v2254 = vld [vmem:[%s573 + $0x18] sm:$0xff]
        %v2255 = vld [vmem:[%s573 + $0x20] sm:$0xff]
        %v2256 = vld [vmem:[%s573 + $0x28] sm:$0xff]
        %v2257 = vld [vmem:[%s573 + $0x30] sm:$0xff]
        %v2258 = vld [vmem:[%s573 + $0x38] sm:$0xff]
        %v2259 = vld [vmem:[%s573 + $0x40] sm:$0xff]
        %v2260 = vld [vmem:[%s573 + $0x48] sm:$0xff]
        %v2261 = vld [vmem:[%s573 + $0x50] sm:$0xff]
        %v2262 = vld [vmem:[%s573 + $0x58] sm:$0xff]
        %v2263 = vld [vmem:[%s573 + $0x60] sm:$0xff]
        %v2264 = vld [vmem:[%s573 + $0x68] sm:$0xff]
        %v2265 = vld [vmem:[%s573 + $0x70] sm:$0xff]
        %v2266 = vld [vmem:[%s573 + $0x78] sm:$0xff]
        %v2267 = vld [vmem:[%s683] sm:$0x1]
        %v2268 = vpack.c.bf16 %v737, %v736
        %v2269 = vpack.c.bf16 %v739, %v738
        %v2270 = vpack.c.bf16 %v741, %v740
        %v2271 = vpack.c.bf16 %v743, %v742
        %v2272 = vpack.c.bf16 %v745, %v744
        %v2273 = vpack.c.bf16 %v747, %v746
        %v2274 = vpack.c.bf16 %v749, %v748
        %v2275 = vpack.c.bf16 %v751, %v750
        %v2276 = vpack.c.bf16 %v2252, %v2251
        %v2277 = vpack.c.bf16 %v2254, %v2253
        %v2278 = vpack.c.bf16 %v2256, %v2255
        %v2279 = vpack.c.bf16 %v2258, %v2257
        %v2280 = vpack.c.bf16 %v2260, %v2259
        %v2281 = vpack.c.bf16 %v2262, %v2261
        %v2282 = vpack.c.bf16 %v2264, %v2263
        %v2283 = vpack.c.bf16 %v2266, %v2265
        %v2285 = vlaneseq
        %v2286 = vshrl.u32 %v2285, 7
        %v2287 = vsub.s32 0, %v2286
        %v2288 = vrot.slane %v2267, %v2287
        %2290 = vmatprep.subr.bf16.mxu0 0
        %2291 = vmatpush1.bf16.msra.mxu0 %v2276
        %2292 = vmatprep.subr.bf16.mxu0 0
        %2293 = vmatpush1.bf16.msra.mxu0 %v2277
        %2294 = vmatprep.subr.bf16.mxu0 0
        %2295 = vmatpush1.bf16.msra.mxu0 %v2278
        %2296 = vmatprep.subr.bf16.mxu0 0
        %2297 = vmatpush1.bf16.msra.mxu0 %v2279
        %2298 = vmatprep.subr.bf16.mxu0 0
        %2299 = vmatpush1.bf16.msra.mxu0 %v2280
        %2300 = vmatprep.subr.bf16.mxu0 0
        %2301 = vmatpush1.bf16.msra.mxu0 %v2281
        %2302 = vmatprep.subr.bf16.mxu0 0
        %2303 = vmatpush1.bf16.msra.mxu0 %v2282
        %2304 = vmatprep.subr.bf16.mxu0 0
        %2305 = vmatpush1.bf16.msra.mxu0 %v2283
        %2306 = vmatprep.subr.bf16.mxu0 0
        %2307 = vmatpush1.bf16.msra.mxu0 0
        %2308 = vmatprep.subr.bf16.mxu0 0
        %2309 = vmatpush1.bf16.msra.mxu0 0
        %2310 = vmatprep.subr.bf16.mxu0 0
        %2311 = vmatpush1.bf16.msra.mxu0 0
        %2312 = vmatprep.subr.bf16.mxu0 0
        %2313 = vmatpush1.bf16.msra.mxu0 0
        %2314 = vmatprep.subr.bf16.mxu0 0
        %2315 = vmatpush1.bf16.msra.mxu0 0
        %2316 = vmatprep.subr.bf16.mxu0 0
        %2317 = vmatpush1.bf16.msra.mxu0 0
        %2318 = vmatprep.subr.bf16.mxu0 0
        %2319 = vmatpush1.bf16.msra.mxu0 0
        %2320 = vmatprep.subr.bf16.mxu0 0
        %2321 = vmatpush1.bf16.msra.mxu0 0
        %2322 = vmatprep.mubr.bf16.mxu0 0
        %2323 = vmatmul.mubr.bf16.gmra.mrb[0].mxu0 %v2268
        %v2324 = vpop.f32.mrb[0].mxu0
        %v2325 = vadd.f32 %v2288, %v2324
        %v2326 = vpop.f32.mrb[0].mxu0
        %v2327 = vpop.f32.mrb[0].mxu0
        %v2328 = vadd.f32 %v2288, %v2327
        %v2329 = vpop.f32.mrb[0].mxu0
        %2330 = vmatprep.mubr.bf16.mxu0 0
        %2331 = vmatmul.mubr.bf16.gmra.mrb[0].mxu0 %v2269
        %v2332 = vpop.f32.mrb[0].mxu0
        %v2333 = vadd.f32 %v2288, %v2332
        %v2334 = vpop.f32.mrb[0].mxu0
        %v2335 = vpop.f32.mrb[0].mxu0
        %v2336 = vadd.f32 %v2288, %v2335
        %v2337 = vpop.f32.mrb[0].mxu0
        %2338 = vmatprep.mubr.bf16.mxu0 0
        %2339 = vmatmul.mubr.bf16.gmra.mrb[0].mxu0 %v2270
        %v2340 = vpop.f32.mrb[0].mxu0
        %v2341 = vadd.f32 %v2288, %v2340
        %v2342 = vpop.f32.mrb[0].mxu0
        %v2343 = vpop.f32.mrb[0].mxu0
        %v2344 = vadd.f32 %v2288, %v2343
        %v2345 = vpop.f32.mrb[0].mxu0
        %2346 = vmatprep.mubr.bf16.mxu0 0
        %2347 = vmatmul.mubr.bf16.gmra.mrb[0].mxu0 %v2271
        %v2348 = vpop.f32.mrb[0].mxu0
        %v2349 = vadd.f32 %v2288, %v2348
        %v2350 = vpop.f32.mrb[0].mxu0
        %v2351 = vpop.f32.mrb[0].mxu0
        %v2352 = vadd.f32 %v2288, %v2351
        %v2353 = vpop.f32.mrb[0].mxu0
        %2354 = vmatprep.mubr.bf16.mxu0 0
        %2355 = vmatmul.mubr.bf16.gmra.mrb[0].mxu0 %v2272
        %v2356 = vpop.f32.mrb[0].mxu0
        %v2357 = vadd.f32 %v2288, %v2356
        %v2358 = vpop.f32.mrb[0].mxu0
        %v2359 = vpop.f32.mrb[0].mxu0
        %v2360 = vadd.f32 %v2288, %v2359
        %v2361 = vpop.f32.mrb[0].mxu0
        %2362 = vmatprep.mubr.bf16.mxu0 0
        %2363 = vmatmul.mubr.bf16.gmra.mrb[0].mxu0 %v2273
        %v2364 = vpop.f32.mrb[0].mxu0
        %v2365 = vadd.f32 %v2288, %v2364
        %v2366 = vpop.f32.mrb[0].mxu0
        %v2367 = vpop.f32.mrb[0].mxu0
        %v2368 = vadd.f32 %v2288, %v2367
        %v2369 = vpop.f32.mrb[0].mxu0
        %2370 = vmatprep.mubr.bf16.mxu0 0
        %2371 = vmatmul.mubr.bf16.gmra.mrb[0].mxu0 %v2274
        %v2372 = vpop.f32.mrb[0].mxu0
        %v2373 = vadd.f32 %v2288, %v2372
        %v2374 = vpop.f32.mrb[0].mxu0
        %v2375 = vpop.f32.mrb[0].mxu0
        %v2376 = vadd.f32 %v2288, %v2375
        %v2377 = vpop.f32.mrb[0].mxu0
        %2378 = vmatprep.mubr.bf16.mxu0 0
        %2379 = vmatmul.mubr.bf16.gmra.mrb[0].mxu0 %v2275
        %v2380 = vpop.f32.mrb[0].mxu0
        %v2381 = vadd.f32 %v2288, %v2380
        %v2382 = vpop.f32.mrb[0].mxu0
        %v2383 = vpop.f32.mrb[0].mxu0
        %v2384 = vadd.f32 %v2288, %v2383
        %v2385 = vpop.f32.mrb[0].mxu0
        %2386 = vdwg.mxu0
        %v2387 = vmax.f32 %v2325, 0.0
        %v2388 = vmax.f32 %v2328, 0.0
        %v2389 = vmax.f32 %v2333, 0.0
        %v2390 = vmax.f32 %v2336, 0.0
        %v2391 = vmax.f32 %v2341, 0.0
        %v2392 = vmax.f32 %v2344, 0.0
        %v2393 = vmax.f32 %v2349, 0.0
        %v2394 = vmax.f32 %v2352, 0.0
        %v2395 = vmax.f32 %v2357, 0.0
        %v2396 = vmax.f32 %v2360, 0.0
        %v2397 = vmax.f32 %v2365, 0.0
        %v2398 = vmax.f32 %v2368, 0.0
        %v2399 = vmax.f32 %v2373, 0.0
        %v2400 = vmax.f32 %v2376, 0.0
        %v2401 = vmax.f32 %v2381, 0.0
        %v2402 = vmax.f32 %v2384, 0.0
        %v2403 = vadd.f32 %v2387, %v2388
        %v2404 = vadd.f32 %v2403, %v2389
        %v2405 = vadd.f32 %v2404, %v2390
        %v2406 = vadd.f32 %v2405, %v2391
        %v2407 = vadd.f32 %v2406, %v2392
        %v2408 = vadd.f32 %v2407, %v2393
        %v2409 = vadd.f32 %v2408, %v2394
        %v2410 = vadd.f32 %v2409, %v2395
        %v2411 = vadd.f32 %v2410, %v2396
        %v2412 = vadd.f32 %v2411, %v2397
        %v2413 = vadd.f32 %v2412, %v2398
        %v2414 = vadd.f32 %v2413, %v2399
        %v2415 = vadd.f32 %v2414, %v2400
        %v2416 = vadd.f32 %v2415, %v2401
        %v2417 = vadd.f32 %v2416, %v2402
        %2418 = vadd.xlane.f32.xlu0 %v2417
        %v2419 = vpop.xlane.xlu0 %2418
        %v2420 = vrot.slane %v2419, 4
        %v2421 = vadd.f32 %v2419, %v2420
        %v2422 = vrot.slane %v2421, 2
        %v2423 = vadd.f32 %v2421, %v2422
        %v2424 = vrot.slane %v2423, 1
        %v2425 = vadd.f32 %v2423, %v2424
        %s2426 = vtos %v2425
        %p2427 = scmp.eq.f32.partialorder %s2426, 0.0
        %s2428 = scalar_select %p2427, 0.0, 1.0
        %2429 = vadd.xlane.f32.xlu0 %v2387
        %v2430 = vpop.xlane.xlu0 %2429
        %2431 = vadd.xlane.f32.xlu0 %v2388
        %v2432 = vpop.xlane.xlu0 %2431
        %2433 = vadd.xlane.f32.xlu0 %v2389
        %v2434 = vpop.xlane.xlu0 %2433
        %2435 = vadd.xlane.f32.xlu0 %v2390
        %v2436 = vpop.xlane.xlu0 %2435
        %2437 = vadd.xlane.f32.xlu0 %v2391
        %v2438 = vpop.xlane.xlu0 %2437
        %2439 = vadd.xlane.f32.xlu0 %v2392
        %v2440 = vpop.xlane.xlu0 %2439
        %2441 = vadd.xlane.f32.xlu0 %v2393
        %v2442 = vpop.xlane.xlu0 %2441
        %2443 = vadd.xlane.f32.xlu0 %v2394
        %v2444 = vpop.xlane.xlu0 %2443
        %2445 = vadd.xlane.f32.xlu0 %v2395
        %v2446 = vpop.xlane.xlu0 %2445
        %2447 = vadd.xlane.f32.xlu0 %v2396
        %v2448 = vpop.xlane.xlu0 %2447
        %2449 = vadd.xlane.f32.xlu0 %v2397
        %v2450 = vpop.xlane.xlu0 %2449
        %2451 = vadd.xlane.f32.xlu0 %v2398
        %v2452 = vpop.xlane.xlu0 %2451
        %2453 = vadd.xlane.f32.xlu0 %v2399
        %v2454 = vpop.xlane.xlu0 %2453
        %2455 = vadd.xlane.f32.xlu0 %v2400
        %v2456 = vpop.xlane.xlu0 %2455
        %2457 = vadd.xlane.f32.xlu0 %v2401
        %v2458 = vpop.xlane.xlu0 %2457
        %2459 = vadd.xlane.f32.xlu0 %v2402
        %v2460 = vpop.xlane.xlu0 %2459
        %vm2461 = vcmp.eq.f32.partialorder %v2430, 0.0
        %vm2462 = vcmp.eq.f32.partialorder %v2432, 0.0
        %vm2463 = vcmp.eq.f32.partialorder %v2434, 0.0
        %vm2464 = vcmp.eq.f32.partialorder %v2436, 0.0
        %vm2465 = vcmp.eq.f32.partialorder %v2438, 0.0
        %vm2466 = vcmp.eq.f32.partialorder %v2440, 0.0
        %vm2467 = vcmp.eq.f32.partialorder %v2442, 0.0
        %vm2468 = vcmp.eq.f32.partialorder %v2444, 0.0
        %vm2469 = vcmp.eq.f32.partialorder %v2446, 0.0
        %vm2470 = vcmp.eq.f32.partialorder %v2448, 0.0
        %vm2471 = vcmp.eq.f32.partialorder %v2450, 0.0
        %vm2472 = vcmp.eq.f32.partialorder %v2452, 0.0
        %vm2473 = vcmp.eq.f32.partialorder %v2454, 0.0
        %vm2474 = vcmp.eq.f32.partialorder %v2456, 0.0
        %vm2475 = vcmp.eq.f32.partialorder %v2458, 0.0
        %vm2476 = vcmp.eq.f32.partialorder %v2460, 0.0
        %v2477 = vadd.f32 %v2387, 1e-08
        %v2478 = vadd.f32 %v2388, 1e-08
        %v2479 = vadd.f32 %v2389, 1e-08
        %v2480 = vadd.f32 %v2390, 1e-08
        %v2481 = vadd.f32 %v2391, 1e-08
        %v2482 = vadd.f32 %v2392, 1e-08
        %v2483 = vadd.f32 %v2393, 1e-08
        %v2484 = vadd.f32 %v2394, 1e-08
        %v2485 = vadd.f32 %v2395, 1e-08
        %v2486 = vadd.f32 %v2396, 1e-08
        %v2487 = vadd.f32 %v2397, 1e-08
        %v2488 = vadd.f32 %v2398, 1e-08
        %v2489 = vadd.f32 %v2399, 1e-08
        %v2490 = vadd.f32 %v2400, 1e-08
        %v2491 = vadd.f32 %v2401, 1e-08
        %v2492 = vadd.f32 %v2402, 1e-08
        %v2493 = vsel %vm2461, 1, 0
        %v2494 = vsel %vm2462, 1, 0
        %v2495 = vsel %vm2463, 1, 0
        %v2496 = vsel %vm2464, 1, 0
        %v2497 = vsel %vm2465, 1, 0
        %v2498 = vsel %vm2466, 1, 0
        %v2499 = vsel %vm2467, 1, 0
        %v2500 = vsel %vm2468, 1, 0
        %v2501 = vsel %vm2469, 1, 0
        %v2502 = vsel %vm2470, 1, 0
        %v2503 = vsel %vm2471, 1, 0
        %v2504 = vsel %vm2472, 1, 0
        %v2505 = vsel %vm2473, 1, 0
        %v2506 = vsel %vm2474, 1, 0
        %v2507 = vsel %vm2475, 1, 0
        %v2508 = vsel %vm2476, 1, 0
        %vm2509 = vcmp.eq.s32.totalorder %v2493, 1
        %vm2510 = vcmp.eq.s32.totalorder %v2494, 1
        %vm2511 = vcmp.eq.s32.totalorder %v2495, 1
        %vm2512 = vcmp.eq.s32.totalorder %v2496, 1
        %vm2513 = vcmp.eq.s32.totalorder %v2497, 1
        %vm2514 = vcmp.eq.s32.totalorder %v2498, 1
        %vm2515 = vcmp.eq.s32.totalorder %v2499, 1
        %vm2516 = vcmp.eq.s32.totalorder %v2500, 1
        %vm2517 = vcmp.eq.s32.totalorder %v2501, 1
        %vm2518 = vcmp.eq.s32.totalorder %v2502, 1
        %vm2519 = vcmp.eq.s32.totalorder %v2503, 1
        %vm2520 = vcmp.eq.s32.totalorder %v2504, 1
        %vm2521 = vcmp.eq.s32.totalorder %v2505, 1
        %vm2522 = vcmp.eq.s32.totalorder %v2506, 1
        %vm2523 = vcmp.eq.s32.totalorder %v2507, 1
        %vm2524 = vcmp.eq.s32.totalorder %v2508, 1
        %v2525 = vsel %vm2509, %v2477, %v2387
        %v2526 = vsel %vm2510, %v2478, %v2388
        %v2527 = vsel %vm2511, %v2479, %v2389
        %v2528 = vsel %vm2512, %v2480, %v2390
        %v2529 = vsel %vm2513, %v2481, %v2391
        %v2530 = vsel %vm2514, %v2482, %v2392
        %v2531 = vsel %vm2515, %v2483, %v2393
        %v2532 = vsel %vm2516, %v2484, %v2394
        %v2533 = vsel %vm2517, %v2485, %v2395
        %v2534 = vsel %vm2518, %v2486, %v2396
        %v2535 = vsel %vm2519, %v2487, %v2397
        %v2536 = vsel %vm2520, %v2488, %v2398
        %v2537 = vsel %vm2521, %v2489, %v2399
        %v2538 = vsel %vm2522, %v2490, %v2400
        %v2539 = vsel %vm2523, %v2491, %v2401
        %v2540 = vsel %vm2524, %v2492, %v2402
        %v2541 = vld [vmem:[%s697] sm:$0x3]
        %v2542 = vlaneseq
        %v2543 = vshrl.u32 %v2542, 7
        %v2544 = vsub.s32 0, %v2543
        %v2545 = vrot.slane %v2541, %v2544
        %v2546 = vmul.f32 %v2525, %v2545
        %v2547 = vmul.f32 %v2526, %v2545
        %v2548 = vmul.f32 %v2527, %v2545
        %v2549 = vmul.f32 %v2528, %v2545
        %v2550 = vmul.f32 %v2529, %v2545
        %v2551 = vmul.f32 %v2530, %v2545
        %v2552 = vmul.f32 %v2531, %v2545
        %v2553 = vmul.f32 %v2532, %v2545
        %v2554 = vmul.f32 %v2533, %v2545
        %v2555 = vmul.f32 %v2534, %v2545
        %v2556 = vmul.f32 %v2535, %v2545
        %v2557 = vmul.f32 %v2536, %v2545
        %v2558 = vmul.f32 %v2537, %v2545
        %v2559 = vmul.f32 %v2538, %v2545
        %v2560 = vmul.f32 %v2539, %v2545
        %v2561 = vmul.f32 %v2540, %v2545
        %v2562 = vmul.f32 %v2546, %v2546
        %v2563 = vmul.f32 %v2547, %v2547
        %v2564 = vmul.f32 %v2548, %v2548
        %v2565 = vmul.f32 %v2549, %v2549
        %v2566 = vmul.f32 %v2550, %v2550
        %v2567 = vmul.f32 %v2551, %v2551
        %v2568 = vmul.f32 %v2552, %v2552
        %v2569 = vmul.f32 %v2553, %v2553
        %v2570 = vmul.f32 %v2554, %v2554
        %v2571 = vmul.f32 %v2555, %v2555
        %v2572 = vmul.f32 %v2556, %v2556
        %v2573 = vmul.f32 %v2557, %v2557
        %v2574 = vmul.f32 %v2558, %v2558
        %v2575 = vmul.f32 %v2559, %v2559
        %v2576 = vmul.f32 %v2560, %v2560
        %v2577 = vmul.f32 %v2561, %v2561
        %2578 = vadd.xlane.f32.xlu0 %v2562
        %v2579 = vpop.xlane.xlu0 %2578
        %2580 = vadd.xlane.f32.xlu0 %v2563
        %v2581 = vpop.xlane.xlu0 %2580
        %2582 = vadd.xlane.f32.xlu0 %v2564
        %v2583 = vpop.xlane.xlu0 %2582
        %2584 = vadd.xlane.f32.xlu0 %v2565
        %v2585 = vpop.xlane.xlu0 %2584
        %2586 = vadd.xlane.f32.xlu0 %v2566
        %v2587 = vpop.xlane.xlu0 %2586
        %2588 = vadd.xlane.f32.xlu0 %v2567
        %v2589 = vpop.xlane.xlu0 %2588
        %2590 = vadd.xlane.f32.xlu0 %v2568
        %v2591 = vpop.xlane.xlu0 %2590
        %2592 = vadd.xlane.f32.xlu0 %v2569
        %v2593 = vpop.xlane.xlu0 %2592
        %2594 = vadd.xlane.f32.xlu0 %v2570
        %v2595 = vpop.xlane.xlu0 %2594
        %2596 = vadd.xlane.f32.xlu0 %v2571
        %v2597 = vpop.xlane.xlu0 %2596
        %2598 = vadd.xlane.f32.xlu0 %v2572
        %v2599 = vpop.xlane.xlu0 %2598
        %2600 = vadd.xlane.f32.xlu0 %v2573
        %v2601 = vpop.xlane.xlu0 %2600
        %2602 = vadd.xlane.f32.xlu0 %v2574
        %v2603 = vpop.xlane.xlu0 %2602
        %2604 = vadd.xlane.f32.xlu0 %v2575
        %v2605 = vpop.xlane.xlu0 %2604
        %2606 = vadd.xlane.f32.xlu0 %v2576
        %v2607 = vpop.xlane.xlu0 %2606
        %2608 = vadd.xlane.f32.xlu0 %v2577
        %v2609 = vpop.xlane.xlu0 %2608
        %vm2610 = vcmp.lt.f32.partialorder %v2579, 1e-16
        %vm2611 = vcmp.lt.f32.partialorder %v2581, 1e-16
        %vm2612 = vcmp.lt.f32.partialorder %v2583, 1e-16
        %vm2613 = vcmp.lt.f32.partialorder %v2585, 1e-16
        %vm2614 = vcmp.lt.f32.partialorder %v2587, 1e-16
        %vm2615 = vcmp.lt.f32.partialorder %v2589, 1e-16
        %vm2616 = vcmp.lt.f32.partialorder %v2591, 1e-16
        %vm2617 = vcmp.lt.f32.partialorder %v2593, 1e-16
        %vm2618 = vcmp.lt.f32.partialorder %v2595, 1e-16
        %vm2619 = vcmp.lt.f32.partialorder %v2597, 1e-16
        %vm2620 = vcmp.lt.f32.partialorder %v2599, 1e-16
        %vm2621 = vcmp.lt.f32.partialorder %v2601, 1e-16
        %vm2622 = vcmp.lt.f32.partialorder %v2603, 1e-16
        %vm2623 = vcmp.lt.f32.partialorder %v2605, 1e-16
        %vm2624 = vcmp.lt.f32.partialorder %v2607, 1e-16
        %vm2625 = vcmp.lt.f32.partialorder %v2609, 1e-16
        %v2626 = vrsqrt.pop %v2579
        %v2627 = vrsqrt.pop %v2581
        %v2628 = vrsqrt.pop %v2583
        %v2629 = vrsqrt.pop %v2585
        %v2630 = vrsqrt.pop %v2587
        %v2631 = vrsqrt.pop %v2589
        %v2632 = vrsqrt.pop %v2591
        %v2633 = vrsqrt.pop %v2593
        %v2634 = vrsqrt.pop %v2595
        %v2635 = vrsqrt.pop %v2597
        %v2636 = vrsqrt.pop %v2599
        %v2637 = vrsqrt.pop %v2601
        %v2638 = vrsqrt.pop %v2603
        %v2639 = vrsqrt.pop %v2605
        %v2640 = vrsqrt.pop %v2607
        %v2641 = vrsqrt.pop %v2609
        %v2642 = vsel %vm2610, 1e+08, %v2626
        %v2643 = vsel %vm2611, 1e+08, %v2627
        %v2644 = vsel %vm2612, 1e+08, %v2628
        %v2645 = vsel %vm2613, 1e+08, %v2629
        %v2646 = vsel %vm2614, 1e+08, %v2630
        %v2647 = vsel %vm2615, 1e+08, %v2631
        %v2648 = vsel %vm2616, 1e+08, %v2632
        %v2649 = vsel %vm2617, 1e+08, %v2633
        %v2650 = vsel %vm2618, 1e+08, %v2634
        %v2651 = vsel %vm2619, 1e+08, %v2635
        %v2652 = vsel %vm2620, 1e+08, %v2636
        %v2653 = vsel %vm2621, 1e+08, %v2637
        %v2654 = vsel %vm2622, 1e+08, %v2638
        %v2655 = vsel %vm2623, 1e+08, %v2639
        %v2656 = vsel %vm2624, 1e+08, %v2640
        %v2657 = vsel %vm2625, 1e+08, %v2641
        %v2658 = vmul.f32 %v2546, %v2642
        %v2659 = vmul.f32 %v2547, %v2643
        %v2660 = vmul.f32 %v2548, %v2644
        %v2661 = vmul.f32 %v2549, %v2645
        %v2662 = vmul.f32 %v2550, %v2646
        %v2663 = vmul.f32 %v2551, %v2647
        %v2664 = vmul.f32 %v2552, %v2648
        %v2665 = vmul.f32 %v2553, %v2649
        %v2666 = vmul.f32 %v2554, %v2650
        %v2667 = vmul.f32 %v2555, %v2651
        %v2668 = vmul.f32 %v2556, %v2652
        %v2669 = vmul.f32 %v2557, %v2653
        %v2670 = vmul.f32 %v2558, %v2654
        %v2671 = vmul.f32 %v2559, %v2655
        %v2672 = vmul.f32 %v2560, %v2656
        %v2673 = vmul.f32 %v2561, %v2657
        %v2674 = vlaneseq
        %v2675 = vshrl.u32 %v2674, 7
        %v2676 = vsub.s32 1, %v2675
        %v2677 = vrot.slane %v2541, %v2676
        %v2678 = vmul.f32 %v2525, %v2677
        %v2679 = vmul.f32 %v2526, %v2677
        %v2680 = vmul.f32 %v2527, %v2677
        %v2681 = vmul.f32 %v2528, %v2677
        %v2682 = vmul.f32 %v2529, %v2677
        %v2683 = vmul.f32 %v2530, %v2677
        %v2684 = vmul.f32 %v2531, %v2677
        %v2685 = vmul.f32 %v2532, %v2677
        %v2686 = vmul.f32 %v2533, %v2677
        %v2687 = vmul.f32 %v2534, %v2677
        %v2688 = vmul.f32 %v2535, %v2677
        %v2689 = vmul.f32 %v2536, %v2677
        %v2690 = vmul.f32 %v2537, %v2677
        %v2691 = vmul.f32 %v2538, %v2677
        %v2692 = vmul.f32 %v2539, %v2677
        %v2693 = vmul.f32 %v2540, %v2677
        %v2694 = vmul.f32 %v2678, %v2678
        %v2695 = vmul.f32 %v2679, %v2679
        %v2696 = vmul.f32 %v2680, %v2680
        %v2697 = vmul.f32 %v2681, %v2681
        %v2698 = vmul.f32 %v2682, %v2682
        %v2699 = vmul.f32 %v2683, %v2683
        %v2700 = vmul.f32 %v2684, %v2684
        %v2701 = vmul.f32 %v2685, %v2685
        %v2702 = vmul.f32 %v2686, %v2686
        %v2703 = vmul.f32 %v2687, %v2687
        %v2704 = vmul.f32 %v2688, %v2688
        %v2705 = vmul.f32 %v2689, %v2689
        %v2706 = vmul.f32 %v2690, %v2690
        %v2707 = vmul.f32 %v2691, %v2691
        %v2708 = vmul.f32 %v2692, %v2692
        %v2709 = vmul.f32 %v2693, %v2693
        %2710 = vadd.xlane.f32.xlu0 %v2694
        %v2711 = vpop.xlane.xlu0 %2710
        %2712 = vadd.xlane.f32.xlu0 %v2695
        %v2713 = vpop.xlane.xlu0 %2712
        %2714 = vadd.xlane.f32.xlu0 %v2696
        %v2715 = vpop.xlane.xlu0 %2714
        %2716 = vadd.xlane.f32.xlu0 %v2697
        %v2717 = vpop.xlane.xlu0 %2716
        %2718 = vadd.xlane.f32.xlu0 %v2698
        %v2719 = vpop.xlane.xlu0 %2718
        %2720 = vadd.xlane.f32.xlu0 %v2699
        %v2721 = vpop.xlane.xlu0 %2720
        %2722 = vadd.xlane.f32.xlu0 %v2700
        %v2723 = vpop.xlane.xlu0 %2722
        %2724 = vadd.xlane.f32.xlu0 %v2701
        %v2725 = vpop.xlane.xlu0 %2724
        %2726 = vadd.xlane.f32.xlu0 %v2702
        %v2727 = vpop.xlane.xlu0 %2726
        %2728 = vadd.xlane.f32.xlu0 %v2703
        %v2729 = vpop.xlane.xlu0 %2728
        %2730 = vadd.xlane.f32.xlu0 %v2704
        %v2731 = vpop.xlane.xlu0 %2730
        %2732 = vadd.xlane.f32.xlu0 %v2705
        %v2733 = vpop.xlane.xlu0 %2732
        %2734 = vadd.xlane.f32.xlu0 %v2706
        %v2735 = vpop.xlane.xlu0 %2734
        %2736 = vadd.xlane.f32.xlu0 %v2707
        %v2737 = vpop.xlane.xlu0 %2736
        %2738 = vadd.xlane.f32.xlu0 %v2708
        %v2739 = vpop.xlane.xlu0 %2738
        %2740 = vadd.xlane.f32.xlu0 %v2709
        %v2741 = vpop.xlane.xlu0 %2740
        %vm2742 = vcmp.lt.f32.partialorder %v2711, 1e-16
        %vm2743 = vcmp.lt.f32.partialorder %v2713, 1e-16
        %vm2744 = vcmp.lt.f32.partialorder %v2715, 1e-16
        %vm2745 = vcmp.lt.f32.partialorder %v2717, 1e-16
        %vm2746 = vcmp.lt.f32.partialorder %v2719, 1e-16
        %vm2747 = vcmp.lt.f32.partialorder %v2721, 1e-16
        %vm2748 = vcmp.lt.f32.partialorder %v2723, 1e-16
        %vm2749 = vcmp.lt.f32.partialorder %v2725, 1e-16
        %vm2750 = vcmp.lt.f32.partialorder %v2727, 1e-16
        %vm2751 = vcmp.lt.f32.partialorder %v2729, 1e-16
        %vm2752 = vcmp.lt.f32.partialorder %v2731, 1e-16
        %vm2753 = vcmp.lt.f32.partialorder %v2733, 1e-16
        %vm2754 = vcmp.lt.f32.partialorder %v2735, 1e-16
        %vm2755 = vcmp.lt.f32.partialorder %v2737, 1e-16
        %vm2756 = vcmp.lt.f32.partialorder %v2739, 1e-16
        %vm2757 = vcmp.lt.f32.partialorder %v2741, 1e-16
        %v2758 = vrsqrt.pop %v2711
        %v2759 = vrsqrt.pop %v2713
        %v2760 = vrsqrt.pop %v2715
        %v2761 = vrsqrt.pop %v2717
        %v2762 = vrsqrt.pop %v2719
        %v2763 = vrsqrt.pop %v2721
        %v2764 = vrsqrt.pop %v2723
        %v2765 = vrsqrt.pop %v2725
        %v2766 = vrsqrt.pop %v2727
        %v2767 = vrsqrt.pop %v2729
        %v2768 = vrsqrt.pop %v2731
        %v2769 = vrsqrt.pop %v2733
        %v2770 = vrsqrt.pop %v2735
        %v2771 = vrsqrt.pop %v2737
        %v2772 = vrsqrt.pop %v2739
        %v2773 = vrsqrt.pop %v2741
        %v2774 = vsel %vm2742, 1e+08, %v2758
        %v2775 = vsel %vm2743, 1e+08, %v2759
        %v2776 = vsel %vm2744, 1e+08, %v2760
        %v2777 = vsel %vm2745, 1e+08, %v2761
        %v2778 = vsel %vm2746, 1e+08, %v2762
        %v2779 = vsel %vm2747, 1e+08, %v2763
        %v2780 = vsel %vm2748, 1e+08, %v2764
        %v2781 = vsel %vm2749, 1e+08, %v2765
        %v2782 = vsel %vm2750, 1e+08, %v2766
        %v2783 = vsel %vm2751, 1e+08, %v2767
        %v2784 = vsel %vm2752, 1e+08, %v2768
        %v2785 = vsel %vm2753, 1e+08, %v2769
        %v2786 = vsel %vm2754, 1e+08, %v2770
        %v2787 = vsel %vm2755, 1e+08, %v2771
        %v2788 = vsel %vm2756, 1e+08, %v2772
        %v2789 = vsel %vm2757, 1e+08, %v2773
        %v2790 = vmul.f32 %v2678, %v2774
        %v2791 = vmul.f32 %v2679, %v2775
        %v2792 = vmul.f32 %v2680, %v2776
        %v2793 = vmul.f32 %v2681, %v2777
        %v2794 = vmul.f32 %v2682, %v2778
        %v2795 = vmul.f32 %v2683, %v2779
        %v2796 = vmul.f32 %v2684, %v2780
        %v2797 = vmul.f32 %v2685, %v2781
        %v2798 = vmul.f32 %v2686, %v2782
        %v2799 = vmul.f32 %v2687, %v2783
        %v2800 = vmul.f32 %v2688, %v2784
        %v2801 = vmul.f32 %v2689, %v2785
        %v2802 = vmul.f32 %v2690, %v2786
        %v2803 = vmul.f32 %v2691, %v2787
        %v2804 = vmul.f32 %v2692, %v2788
        %v2805 = vmul.f32 %v2693, %v2789
        %v2806 = vpack.c.bf16 %v2659, %v2658
        %v2807 = vpack.c.bf16 %v2791, %v2790
        %v2808 = vpack.c.bf16 %v2661, %v2660
        %v2809 = vpack.c.bf16 %v2793, %v2792
        %v2810 = vpack.c.bf16 %v2663, %v2662
        %v2811 = vpack.c.bf16 %v2795, %v2794
        %v2812 = vpack.c.bf16 %v2665, %v2664
        %v2813 = vpack.c.bf16 %v2797, %v2796
        %v2814 = vpack.c.bf16 %v2667, %v2666
        %v2815 = vpack.c.bf16 %v2799, %v2798
        %v2816 = vpack.c.bf16 %v2669, %v2668
        %v2817 = vpack.c.bf16 %v2801, %v2800
        %v2818 = vpack.c.bf16 %v2671, %v2670
        %v2819 = vpack.c.bf16 %v2803, %v2802
        %v2820 = vpack.c.bf16 %v2673, %v2672
        %v2821 = vpack.c.bf16 %v2805, %v2804
        %2822 = vst [vmem:[#allocation2] sm:$0xff] %v2806
        %2823 = vst [vmem:[#allocation2 + $0x8] sm:$0xff] %v2807
        %2824 = vst [vmem:[#allocation2 + $0x10] sm:$0xff] %v2808
        %2825 = vst [vmem:[#allocation2 + $0x18] sm:$0xff] %v2809
        %2826 = vst [vmem:[#allocation2 + $0x20] sm:$0xff] %v2810
        %2827 = vst [vmem:[#allocation2 + $0x28] sm:$0xff] %v2811
        %2828 = vst [vmem:[#allocation2 + $0x30] sm:$0xff] %v2812
        %2829 = vst [vmem:[#allocation2 + $0x38] sm:$0xff] %v2813
        %2830 = vst [vmem:[#allocation2 + $0x40] sm:$0xff] %v2814
        %2831 = vst [vmem:[#allocation2 + $0x48] sm:$0xff] %v2815
        %2832 = vst [vmem:[#allocation2 + $0x50] sm:$0xff] %v2816
        %2833 = vst [vmem:[#allocation2 + $0x58] sm:$0xff] %v2817
        %2834 = vst [vmem:[#allocation2 + $0x60] sm:$0xff] %v2818
        %2835 = vst [vmem:[#allocation2 + $0x68] sm:$0xff] %v2819
        %2836 = vst [vmem:[#allocation2 + $0x70] sm:$0xff] %v2820
        %2837 = vst [vmem:[#allocation2 + $0x78] sm:$0xff] %v2821
        %s2838 = sld [smem:[#allocation4 + %s44]]
        %s2839 = sld [smem:[#allocation5 + %s44]]
        %p2840 = scmp.ne.s32.totalorder %s2838, %s2839
        // Predicated region
        $region89: #{dhgslm_forward.2} parent=63 // pred_check
          %p2841 = pneg %p2840
        $region90: #{dhgslm_forward.2} parent=63 // pred_check_branch
          %2843 = sbr.rel (%p2841) target = $region92
        $region91: #{dhgslm_forward.2} parent=63 // pred_region
          %v2844 = vld [vmem:[%s564] sm:$0xff]
          %v2845 = vld [vmem:[%s564 + $0x8] sm:$0xff]
          %v2846 = vld [vmem:[%s564 + $0x10] sm:$0xff]
          %v2847 = vld [vmem:[%s564 + $0x18] sm:$0xff]
          %v2848 = vld [vmem:[%s564 + $0x20] sm:$0xff]
          %v2849 = vld [vmem:[%s564 + $0x28] sm:$0xff]
          %v2850 = vld [vmem:[%s564 + $0x30] sm:$0xff]
          %v2851 = vld [vmem:[%s564 + $0x38] sm:$0xff]
          %v2852 = vld [vmem:[%s564 + $0x40] sm:$0xff]
          %v2853 = vld [vmem:[%s564 + $0x48] sm:$0xff]
          %v2854 = vld [vmem:[%s564 + $0x50] sm:$0xff]
          %v2855 = vld [vmem:[%s564 + $0x58] sm:$0xff]
          %v2856 = vld [vmem:[%s564 + $0x60] sm:$0xff]
          %v2857 = vld [vmem:[%s564 + $0x68] sm:$0xff]
          %v2858 = vld [vmem:[%s564 + $0x70] sm:$0xff]
          %v2859 = vld [vmem:[%s564 + $0x78] sm:$0xff]
          %v2860 = vld [vmem:[%s582] sm:$0xff]
          %v2861 = vld [vmem:[%s582 + $0x8] sm:$0xff]
          %v2862 = vld [vmem:[%s582 + $0x10] sm:$0xff]
          %v2863 = vld [vmem:[%s582 + $0x18] sm:$0xff]
          %v2864 = vld [vmem:[%s582 + $0x20] sm:$0xff]
          %v2865 = vld [vmem:[%s582 + $0x28] sm:$0xff]
          %v2866 = vld [vmem:[%s582 + $0x30] sm:$0xff]
          %v2867 = vld [vmem:[%s582 + $0x38] sm:$0xff]
          %v2868 = vld [vmem:[%s582 + $0x40] sm:$0xff]
          %v2869 = vld [vmem:[%s582 + $0x48] sm:$0xff]
          %v2870 = vld [vmem:[%s582 + $0x50] sm:$0xff]
          %v2871 = vld [vmem:[%s582 + $0x58] sm:$0xff]
          %v2872 = vld [vmem:[%s582 + $0x60] sm:$0xff]
          %v2873 = vld [vmem:[%s582 + $0x68] sm:$0xff]
          %v2874 = vld [vmem:[%s582 + $0x70] sm:$0xff]
          %v2875 = vld [vmem:[%s582 + $0x78] sm:$0xff]
          %v2876 = vld [vmem:[%s689] sm:$0x1]
          %v2877 = vpack.c.bf16 %v2845, %v2844
          %v2878 = vpack.c.bf16 %v2847, %v2846
          %v2879 = vpack.c.bf16 %v2849, %v2848
          %v2880 = vpack.c.bf16 %v2851, %v2850
          %v2881 = vpack.c.bf16 %v2853, %v2852
          %v2882 = vpack.c.bf16 %v2855, %v2854
          %v2883 = vpack.c.bf16 %v2857, %v2856
          %v2884 = vpack.c.bf16 %v2859, %v2858
          %v2885 = vpack.c.bf16 %v2861, %v2860
          %v2886 = vpack.c.bf16 %v2863, %v2862
          %v2887 = vpack.c.bf16 %v2865, %v2864
          %v2888 = vpack.c.bf16 %v2867, %v2866
          %v2889 = vpack.c.bf16 %v2869, %v2868
          %v2890 = vpack.c.bf16 %v2871, %v2870
          %v2891 = vpack.c.bf16 %v2873, %v2872
          %v2892 = vpack.c.bf16 %v2875, %v2874
          %v2894 = vlaneseq
          %v2895 = vshrl.u32 %v2894, 7
          %v2896 = vsub.s32 0, %v2895
          %v2897 = vrot.slane %v2876, %v2896
          %2899 = vmatprep.subr.bf16.mxu0 0
          %2900 = vmatpush1.bf16.msra.mxu0 %v2885
          %2901 = vmatprep.subr.bf16.mxu0 0
          %2902 = vmatpush1.bf16.msra.mxu0 %v2886
          %2903 = vmatprep.subr.bf16.mxu0 0
          %2904 = vmatpush1.bf16.msra.mxu0 %v2887
          %2905 = vmatprep.subr.bf16.mxu0 0
          %2906 = vmatpush1.bf16.msra.mxu0 %v2888
          %2907 = vmatprep.subr.bf16.mxu0 0
          %2908 = vmatpush1.bf16.msra.mxu0 %v2889
          %2909 = vmatprep.subr.bf16.mxu0 0
          %2910 = vmatpush1.bf16.msra.mxu0 %v2890
          %2911 = vmatprep.subr.bf16.mxu0 0
          %2912 = vmatpush1.bf16.msra.mxu0 %v2891
          %2913 = vmatprep.subr.bf16.mxu0 0
          %2914 = vmatpush1.bf16.msra.mxu0 %v2892
          %2915 = vmatprep.subr.bf16.mxu0 0
          %2916 = vmatpush1.bf16.msra.mxu0 0
          %2917 = vmatprep.subr.bf16.mxu0 0
          %2918 = vmatpush1.bf16.msra.mxu0 0
          %2919 = vmatprep.subr.bf16.mxu0 0
          %2920 = vmatpush1.bf16.msra.mxu0 0
          %2921 = vmatprep.subr.bf16.mxu0 0
          %2922 = vmatpush1.bf16.msra.mxu0 0
          %2923 = vmatprep.subr.bf16.mxu0 0
          %2924 = vmatpush1.bf16.msra.mxu0 0
          %2925 = vmatprep.subr.bf16.mxu0 0
          %2926 = vmatpush1.bf16.msra.mxu0 0
          %2927 = vmatprep.subr.bf16.mxu0 0
          %2928 = vmatpush1.bf16.msra.mxu0 0
          %2929 = vmatprep.subr.bf16.mxu0 0
          %2930 = vmatpush1.bf16.msra.mxu0 0
          %2931 = vmatprep.mubr.bf16.mxu0 0
          %2932 = vmatmul.mubr.bf16.gmra.mrb[0].mxu0 %v2877
          %v2933 = vpop.f32.mrb[0].mxu0
          %v2934 = vadd.f32 %v2897, %v2933
          %v2935 = vpop.f32.mrb[0].mxu0
          %v2936 = vpop.f32.mrb[0].mxu0
          %v2937 = vadd.f32 %v2897, %v2936
          %v2938 = vpop.f32.mrb[0].mxu0
          %2939 = vmatprep.mubr.bf16.mxu0 0
          %2940 = vmatmul.mubr.bf16.gmra.mrb[0].mxu0 %v2878
          %v2941 = vpop.f32.mrb[0].mxu0
          %v2942 = vadd.f32 %v2897, %v2941
          %v2943 = vpop.f32.mrb[0].mxu0
          %v2944 = vpop.f32.mrb[0].mxu0
          %v2945 = vadd.f32 %v2897, %v2944
          %v2946 = vpop.f32.mrb[0].mxu0
          %2947 = vmatprep.mubr.bf16.mxu0 0
          %2948 = vmatmul.mubr.bf16.gmra.mrb[0].mxu0 %v2879
          %v2949 = vpop.f32.mrb[0].mxu0
          %v2950 = vadd.f32 %v2897, %v2949
          %v2951 = vpop.f32.mrb[0].mxu0
          %v2952 = vpop.f32.mrb[0].mxu0
          %v2953 = vadd.f32 %v2897, %v2952
          %v2954 = vpop.f32.mrb[0].mxu0
          %2955 = vmatprep.mubr.bf16.mxu0 0
          %2956 = vmatmul.mubr.bf16.gmra.mrb[0].mxu0 %v2880
          %v2957 = vpop.f32.mrb[0].mxu0
          %v2958 = vadd.f32 %v2897, %v2957
          %v2959 = vpop.f32.mrb[0].mxu0
          %v2960 = vpop.f32.mrb[0].mxu0
          %v2961 = vadd.f32 %v2897, %v2960
          %v2962 = vpop.f32.mrb[0].mxu0
          %2963 = vmatprep.mubr.bf16.mxu0 0
          %2964 = vmatmul.mubr.bf16.gmra.mrb[0].mxu0 %v2881
          %v2965 = vpop.f32.mrb[0].mxu0
          %v2966 = vadd.f32 %v2897, %v2965
          %v2967 = vpop.f32.mrb[0].mxu0
          %v2968 = vpop.f32.mrb[0].mxu0
          %v2969 = vadd.f32 %v2897, %v2968
          %v2970 = vpop.f32.mrb[0].mxu0
          %2971 = vmatprep.mubr.bf16.mxu0 0
          %2972 = vmatmul.mubr.bf16.gmra.mrb[0].mxu0 %v2882
          %v2973 = vpop.f32.mrb[0].mxu0
          %v2974 = vadd.f32 %v2897, %v2973
          %v2975 = vpop.f32.mrb[0].mxu0
          %v2976 = vpop.f32.mrb[0].mxu0
          %v2977 = vadd.f32 %v2897, %v2976
          %v2978 = vpop.f32.mrb[0].mxu0
          %2979 = vmatprep.mubr.bf16.mxu0 0
          %2980 = vmatmul.mubr.bf16.gmra.mrb[0].mxu0 %v2883
          %v2981 = vpop.f32.mrb[0].mxu0
          %v2982 = vadd.f32 %v2897, %v2981
          %v2983 = vpop.f32.mrb[0].mxu0
          %v2984 = vpop.f32.mrb[0].mxu0
          %v2985 = vadd.f32 %v2897, %v2984
          %v2986 = vpop.f32.mrb[0].mxu0
          %2987 = vmatprep.mubr.bf16.mxu0 0
          %2988 = vmatmul.mubr.bf16.gmra.mrb[0].mxu0 %v2884
          %v2989 = vpop.f32.mrb[0].mxu0
          %v2990 = vadd.f32 %v2897, %v2989
          %v2991 = vpop.f32.mrb[0].mxu0
          %v2992 = vpop.f32.mrb[0].mxu0
          %v2993 = vadd.f32 %v2897, %v2992
          %v2994 = vpop.f32.mrb[0].mxu0
          %2995 = vdwg.mxu0
          %v2996 = vmax.f32 %v2934, 0.0
          %v2997 = vmax.f32 %v2937, 0.0
          %v2998 = vmax.f32 %v2942, 0.0
          %v2999 = vmax.f32 %v2945, 0.0
          %v3000 = vmax.f32 %v2950, 0.0
          %v3001 = vmax.f32 %v2953, 0.0
          %v3002 = vmax.f32 %v2958, 0.0
          %v3003 = vmax.f32 %v2961, 0.0
          %v3004 = vmax.f32 %v2966, 0.0
          %v3005 = vmax.f32 %v2969, 0.0
          %v3006 = vmax.f32 %v2974, 0.0
          %v3007 = vmax.f32 %v2977, 0.0
          %v3008 = vmax.f32 %v2982, 0.0
          %v3009 = vmax.f32 %v2985, 0.0
          %v3010 = vmax.f32 %v2990, 0.0
          %v3011 = vmax.f32 %v2993, 0.0
          %v3012 = vadd.f32 %v2996, %v2997
          %v3013 = vadd.f32 %v3012, %v2998
          %v3014 = vadd.f32 %v3013, %v2999
          %v3015 = vadd.f32 %v3014, %v3000
          %v3016 = vadd.f32 %v3015, %v3001
          %v3017 = vadd.f32 %v3016, %v3002
          %v3018 = vadd.f32 %v3017, %v3003
          %v3019 = vadd.f32 %v3018, %v3004
          %v3020 = vadd.f32 %v3019, %v3005
          %v3021 = vadd.f32 %v3020, %v3006
          %v3022 = vadd.f32 %v3021, %v3007
          %v3023 = vadd.f32 %v3022, %v3008
          %v3024 = vadd.f32 %v3023, %v3009
          %v3025 = vadd.f32 %v3024, %v3010
          %v3026 = vadd.f32 %v3025, %v3011
          %3027 = vadd.xlane.f32.xlu0 %v3026
          %v3028 = vpop.xlane.xlu0 %3027
          %v3029 = vrot.slane %v3028, 4
          %v3030 = vadd.f32 %v3028, %v3029
          %v3031 = vrot.slane %v3030, 2
          %v3032 = vadd.f32 %v3030, %v3031
          %v3033 = vrot.slane %v3032, 1
          %v3034 = vadd.f32 %v3032, %v3033
          %s3035 = vtos %v3034
          %p3036 = scmp.eq.f32.partialorder %s3035, 0.0
          %s3037 = scalar_select %p3036, 0.0, 1.0
          %v3038 = vld [vmem:[%s697] sm:$0x3]
          %v3039 = vlaneseq
          %v3040 = vshrl.u32 %v3039, 7
          %v3041 = vsub.s32 0, %v3040
          %v3042 = vrot.slane %v3038, %v3041
          %v3043 = vmul.f32 %v2996, %v3042
          %v3044 = vmul.f32 %v2997, %v3042
          %v3045 = vmul.f32 %v2998, %v3042
          %v3046 = vmul.f32 %v2999, %v3042
          %v3047 = vmul.f32 %v3000, %v3042
          %v3048 = vmul.f32 %v3001, %v3042
          %v3049 = vmul.f32 %v3002, %v3042
          %v3050 = vmul.f32 %v3003, %v3042
          %v3051 = vmul.f32 %v3004, %v3042
          %v3052 = vmul.f32 %v3005, %v3042
          %v3053 = vmul.f32 %v3006, %v3042
          %v3054 = vmul.f32 %v3007, %v3042
          %v3055 = vmul.f32 %v3008, %v3042
          %v3056 = vmul.f32 %v3009, %v3042
          %v3057 = vmul.f32 %v3010, %v3042
          %v3058 = vmul.f32 %v3011, %v3042
          %v3059 = vmul.f32 %v3043, %v3043
          %v3060 = vmul.f32 %v3044, %v3044
          %v3061 = vmul.f32 %v3045, %v3045
          %v3062 = vmul.f32 %v3046, %v3046
          %v3063 = vmul.f32 %v3047, %v3047
          %v3064 = vmul.f32 %v3048, %v3048
          %v3065 = vmul.f32 %v3049, %v3049
          %v3066 = vmul.f32 %v3050, %v3050
          %v3067 = vmul.f32 %v3051, %v3051
          %v3068 = vmul.f32 %v3052, %v3052
          %v3069 = vmul.f32 %v3053, %v3053
          %v3070 = vmul.f32 %v3054, %v3054
          %v3071 = vmul.f32 %v3055, %v3055
          %v3072 = vmul.f32 %v3056, %v3056
          %v3073 = vmul.f32 %v3057, %v3057
          %v3074 = vmul.f32 %v3058, %v3058
          %3075 = vadd.xlane.f32.xlu0 %v3059
          %v3076 = vpop.xlane.xlu0 %3075
          %3077 = vadd.xlane.f32.xlu0 %v3060
          %v3078 = vpop.xlane.xlu0 %3077
          %3079 = vadd.xlane.f32.xlu0 %v3061
          %v3080 = vpop.xlane.xlu0 %3079
          %3081 = vadd.xlane.f32.xlu0 %v3062
          %v3082 = vpop.xlane.xlu0 %3081
          %3083 = vadd.xlane.f32.xlu0 %v3063
          %v3084 = vpop.xlane.xlu0 %3083
          %3085 = vadd.xlane.f32.xlu0 %v3064
          %v3086 = vpop.xlane.xlu0 %3085
          %3087 = vadd.xlane.f32.xlu0 %v3065
          %v3088 = vpop.xlane.xlu0 %3087
          %3089 = vadd.xlane.f32.xlu0 %v3066
          %v3090 = vpop.xlane.xlu0 %3089
          %3091 = vadd.xlane.f32.xlu0 %v3067
          %v3092 = vpop.xlane.xlu0 %3091
          %3093 = vadd.xlane.f32.xlu0 %v3068
          %v3094 = vpop.xlane.xlu0 %3093
          %3095 = vadd.xlane.f32.xlu0 %v3069
          %v3096 = vpop.xlane.xlu0 %3095
          %3097 = vadd.xlane.f32.xlu0 %v3070
          %v3098 = vpop.xlane.xlu0 %3097
          %3099 = vadd.xlane.f32.xlu0 %v3071
          %v3100 = vpop.xlane.xlu0 %3099
          %3101 = vadd.xlane.f32.xlu0 %v3072
          %v3102 = vpop.xlane.xlu0 %3101
          %3103 = vadd.xlane.f32.xlu0 %v3073
          %v3104 = vpop.xlane.xlu0 %3103
          %3105 = vadd.xlane.f32.xlu0 %v3074
          %v3106 = vpop.xlane.xlu0 %3105
          %vm3107 = vcmp.lt.f32.partialorder %v3076, 1e-16
          %vm3108 = vcmp.lt.f32.partialorder %v3078, 1e-16
          %vm3109 = vcmp.lt.f32.partialorder %v3080, 1e-16
          %vm3110 = vcmp.lt.f32.partialorder %v3082, 1e-16
          %vm3111 = vcmp.lt.f32.partialorder %v3084, 1e-16
          %vm3112 = vcmp.lt.f32.partialorder %v3086, 1e-16
          %vm3113 = vcmp.lt.f32.partialorder %v3088, 1e-16
          %vm3114 = vcmp.lt.f32.partialorder %v3090, 1e-16
          %vm3115 = vcmp.lt.f32.partialorder %v3092, 1e-16
          %vm3116 = vcmp.lt.f32.partialorder %v3094, 1e-16
          %vm3117 = vcmp.lt.f32.partialorder %v3096, 1e-16
          %vm3118 = vcmp.lt.f32.partialorder %v3098, 1e-16
          %vm3119 = vcmp.lt.f32.partialorder %v3100, 1e-16
          %vm3120 = vcmp.lt.f32.partialorder %v3102, 1e-16
          %vm3121 = vcmp.lt.f32.partialorder %v3104, 1e-16
          %vm3122 = vcmp.lt.f32.partialorder %v3106, 1e-16
          %v3123 = vrsqrt.pop %v3076
          %v3124 = vrsqrt.pop %v3078
          %v3125 = vrsqrt.pop %v3080
          %v3126 = vrsqrt.pop %v3082
          %v3127 = vrsqrt.pop %v3084
          %v3128 = vrsqrt.pop %v3086
          %v3129 = vrsqrt.pop %v3088
          %v3130 = vrsqrt.pop %v3090
          %v3131 = vrsqrt.pop %v3092
          %v3132 = vrsqrt.pop %v3094
          %v3133 = vrsqrt.pop %v3096
          %v3134 = vrsqrt.pop %v3098
          %v3135 = vrsqrt.pop %v3100
          %v3136 = vrsqrt.pop %v3102
          %v3137 = vrsqrt.pop %v3104
          %v3138 = vrsqrt.pop %v3106
          %v3139 = vsel %vm3107, 1e+08, %v3123
          %v3140 = vsel %vm3108, 1e+08, %v3124
          %v3141 = vsel %vm3109, 1e+08, %v3125
          %v3142 = vsel %vm3110, 1e+08, %v3126
          %v3143 = vsel %vm3111, 1e+08, %v3127
          %v3144 = vsel %vm3112, 1e+08, %v3128
          %v3145 = vsel %vm3113, 1e+08, %v3129
          %v3146 = vsel %vm3114, 1e+08, %v3130
          %v3147 = vsel %vm3115, 1e+08, %v3131
          %v3148 = vsel %vm3116, 1e+08, %v3132
          %v3149 = vsel %vm3117, 1e+08, %v3133
          %v3150 = vsel %vm3118, 1e+08, %v3134
          %v3151 = vsel %vm3119, 1e+08, %v3135
          %v3152 = vsel %vm3120, 1e+08, %v3136
          %v3153 = vsel %vm3121, 1e+08, %v3137
          %v3154 = vsel %vm3122, 1e+08, %v3138
          %v3155 = vmul.f32 %v3043, %v3139
          %v3156 = vmul.f32 %v3044, %v3140
          %v3157 = vmul.f32 %v3045, %v3141
          %v3158 = vmul.f32 %v3046, %v3142
          %v3159 = vmul.f32 %v3047, %v3143
          %v3160 = vmul.f32 %v3048, %v3144
          %v3161 = vmul.f32 %v3049, %v3145
          %v3162 = vmul.f32 %v3050, %v3146
          %v3163 = vmul.f32 %v3051, %v3147
          %v3164 = vmul.f32 %v3052, %v3148
          %v3165 = vmul.f32 %v3053, %v3149
          %v3166 = vmul.f32 %v3054, %v3150
          %v3167 = vmul.f32 %v3055, %v3151
          %v3168 = vmul.f32 %v3056, %v3152
          %v3169 = vmul.f32 %v3057, %v3153
          %v3170 = vmul.f32 %v3058, %v3154
          %v3171 = vlaneseq
          %v3172 = vshrl.u32 %v3171, 7
          %v3173 = vsub.s32 1, %v3172
          %v3174 = vrot.slane %v3038, %v3173
          %v3175 = vmul.f32 %v2996, %v3174
          %v3176 = vmul.f32 %v2997, %v3174
          %v3177 = vmul.f32 %v2998, %v3174
          %v3178 = vmul.f32 %v2999, %v3174
          %v3179 = vmul.f32 %v3000, %v3174
          %v3180 = vmul.f32 %v3001, %v3174
          %v3181 = vmul.f32 %v3002, %v3174
          %v3182 = vmul.f32 %v3003, %v3174
          %v3183 = vmul.f32 %v3004, %v3174
          %v3184 = vmul.f32 %v3005, %v3174
          %v3185 = vmul.f32 %v3006, %v3174
          %v3186 = vmul.f32 %v3007, %v3174
          %v3187 = vmul.f32 %v3008, %v3174
          %v3188 = vmul.f32 %v3009, %v3174
          %v3189 = vmul.f32 %v3010, %v3174
          %v3190 = vmul.f32 %v3011, %v3174
          %v3191 = vmul.f32 %v3175, %v3175
          %v3192 = vmul.f32 %v3176, %v3176
          %v3193 = vmul.f32 %v3177, %v3177
          %v3194 = vmul.f32 %v3178, %v3178
          %v3195 = vmul.f32 %v3179, %v3179
          %v3196 = vmul.f32 %v3180, %v3180
          %v3197 = vmul.f32 %v3181, %v3181
          %v3198 = vmul.f32 %v3182, %v3182
          %v3199 = vmul.f32 %v3183, %v3183
          %v3200 = vmul.f32 %v3184, %v3184
          %v3201 = vmul.f32 %v3185, %v3185
          %v3202 = vmul.f32 %v3186, %v3186
          %v3203 = vmul.f32 %v3187, %v3187
          %v3204 = vmul.f32 %v3188, %v3188
          %v3205 = vmul.f32 %v3189, %v3189
          %v3206 = vmul.f32 %v3190, %v3190
          %3207 = vadd.xlane.f32.xlu0 %v3191
          %v3208 = vpop.xlane.xlu0 %3207
          %3209 = vadd.xlane.f32.xlu0 %v3192
          %v3210 = vpop.xlane.xlu0 %3209
          %3211 = vadd.xlane.f32.xlu0 %v3193
          %v3212 = vpop.xlane.xlu0 %3211
          %3213 = vadd.xlane.f32.xlu0 %v3194
          %v3214 = vpop.xlane.xlu0 %3213
          %3215 = vadd.xlane.f32.xlu0 %v3195
          %v3216 = vpop.xlane.xlu0 %3215
          %3217 = vadd.xlane.f32.xlu0 %v3196
          %v3218 = vpop.xlane.xlu0 %3217
          %3219 = vadd.xlane.f32.xlu0 %v3197
          %v3220 = vpop.xlane.xlu0 %3219
          %3221 = vadd.xlane.f32.xlu0 %v3198
          %v3222 = vpop.xlane.xlu0 %3221
          %3223 = vadd.xlane.f32.xlu0 %v3199
          %v3224 = vpop.xlane.xlu0 %3223
          %3225 = vadd.xlane.f32.xlu0 %v3200
          %v3226 = vpop.xlane.xlu0 %3225
          %3227 = vadd.xlane.f32.xlu0 %v3201
          %v3228 = vpop.xlane.xlu0 %3227
          %3229 = vadd.xlane.f32.xlu0 %v3202
          %v3230 = vpop.xlane.xlu0 %3229
          %3231 = vadd.xlane.f32.xlu0 %v3203
          %v3232 = vpop.xlane.xlu0 %3231
          %3233 = vadd.xlane.f32.xlu0 %v3204
          %v3234 = vpop.xlane.xlu0 %3233
          %3235 = vadd.xlane.f32.xlu0 %v3205
          %v3236 = vpop.xlane.xlu0 %3235
          %3237 = vadd.xlane.f32.xlu0 %v3206
          %v3238 = vpop.xlane.xlu0 %3237
          %vm3239 = vcmp.lt.f32.partialorder %v3208, 1e-16
          %vm3240 = vcmp.lt.f32.partialorder %v3210, 1e-16
          %vm3241 = vcmp.lt.f32.partialorder %v3212, 1e-16
          %vm3242 = vcmp.lt.f32.partialorder %v3214, 1e-16
          %vm3243 = vcmp.lt.f32.partialorder %v3216, 1e-16
          %vm3244 = vcmp.lt.f32.partialorder %v3218, 1e-16
          %vm3245 = vcmp.lt.f32.partialorder %v3220, 1e-16
          %vm3246 = vcmp.lt.f32.partialorder %v3222, 1e-16
          %vm3247 = vcmp.lt.f32.partialorder %v3224, 1e-16
          %vm3248 = vcmp.lt.f32.partialorder %v3226, 1e-16
          %vm3249 = vcmp.lt.f32.partialorder %v3228, 1e-16
          %vm3250 = vcmp.lt.f32.partialorder %v3230, 1e-16
          %vm3251 = vcmp.lt.f32.partialorder %v3232, 1e-16
          %vm3252 = vcmp.lt.f32.partialorder %v3234, 1e-16
          %vm3253 = vcmp.lt.f32.partialorder %v3236, 1e-16
          %vm3254 = vcmp.lt.f32.partialorder %v3238, 1e-16
          %v3255 = vrsqrt.pop %v3208
          %v3256 = vrsqrt.pop %v3210
          %v3257 = vrsqrt.pop %v3212
          %v3258 = vrsqrt.pop %v3214
          %v3259 = vrsqrt.pop %v3216
          %v3260 = vrsqrt.pop %v3218
          %v3261 = vrsqrt.pop %v3220
          %v3262 = vrsqrt.pop %v3222
          %v3263 = vrsqrt.pop %v3224
          %v3264 = vrsqrt.pop %v3226
          %v3265 = vrsqrt.pop %v3228
          %v3266 = vrsqrt.pop %v3230
          %v3267 = vrsqrt.pop %v3232
          %v3268 = vrsqrt.pop %v3234
          %v3269 = vrsqrt.pop %v3236
          %v3270 = vrsqrt.pop %v3238
          %v3271 = vsel %vm3239, 1e+08, %v3255
          %v3272 = vsel %vm3240, 1e+08, %v3256
          %v3273 = vsel %vm3241, 1e+08, %v3257
          %v3274 = vsel %vm3242, 1e+08, %v3258
          %v3275 = vsel %vm3243, 1e+08, %v3259
          %v3276 = vsel %vm3244, 1e+08, %v3260
          %v3277 = vsel %vm3245, 1e+08, %v3261
          %v3278 = vsel %vm3246, 1e+08, %v3262
          %v3279 = vsel %vm3247, 1e+08, %v3263
          %v3280 = vsel %vm3248, 1e+08, %v3264
          %v3281 = vsel %vm3249, 1e+08, %v3265
          %v3282 = vsel %vm3250, 1e+08, %v3266
          %v3283 = vsel %vm3251, 1e+08, %v3267
          %v3284 = vsel %vm3252, 1e+08, %v3268
          %v3285 = vsel %vm3253, 1e+08, %v3269
          %v3286 = vsel %vm3254, 1e+08, %v3270
          %v3287 = vmul.f32 %v3175, %v3271
          %v3288 = vmul.f32 %v3176, %v3272
          %v3289 = vmul.f32 %v3177, %v3273
          %v3290 = vmul.f32 %v3178, %v3274
          %v3291 = vmul.f32 %v3179, %v3275
          %v3292 = vmul.f32 %v3180, %v3276
          %v3293 = vmul.f32 %v3181, %v3277
          %v3294 = vmul.f32 %v3182, %v3278
          %v3295 = vmul.f32 %v3183, %v3279
          %v3296 = vmul.f32 %v3184, %v3280
          %v3297 = vmul.f32 %v3185, %v3281
          %v3298 = vmul.f32 %v3186, %v3282
          %v3299 = vmul.f32 %v3187, %v3283
          %v3300 = vmul.f32 %v3188, %v3284
          %v3301 = vmul.f32 %v3189, %v3285
          %v3302 = vmul.f32 %v3190, %v3286
          %v3303 = vstv %s3037
          %v3304 = vmul.f32 %v3155, %v3303
          %v3305 = vmul.f32 %v3287, %v3303
          %v3306 = vmul.f32 %v3156, %v3303
          %v3307 = vmul.f32 %v3288, %v3303
          %v3308 = vmul.f32 %v3157, %v3303
          %v3309 = vmul.f32 %v3289, %v3303
          %v3310 = vmul.f32 %v3158, %v3303
          %v3311 = vmul.f32 %v3290, %v3303
          %v3312 = vmul.f32 %v3159, %v3303
          %v3313 = vmul.f32 %v3291, %v3303
          %v3314 = vmul.f32 %v3160, %v3303
          %v3315 = vmul.f32 %v3292, %v3303
          %v3316 = vmul.f32 %v3161, %v3303
          %v3317 = vmul.f32 %v3293, %v3303
          %v3318 = vmul.f32 %v3162, %v3303
          %v3319 = vmul.f32 %v3294, %v3303
          %v3320 = vmul.f32 %v3163, %v3303
          %v3321 = vmul.f32 %v3295, %v3303
          %v3322 = vmul.f32 %v3164, %v3303
          %v3323 = vmul.f32 %v3296, %v3303
          %v3324 = vmul.f32 %v3165, %v3303
          %v3325 = vmul.f32 %v3297, %v3303
          %v3326 = vmul.f32 %v3166, %v3303
          %v3327 = vmul.f32 %v3298, %v3303
          %v3328 = vmul.f32 %v3167, %v3303
          %v3329 = vmul.f32 %v3299, %v3303
          %v3330 = vmul.f32 %v3168, %v3303
          %v3331 = vmul.f32 %v3300, %v3303
          %v3332 = vmul.f32 %v3169, %v3303
          %v3333 = vmul.f32 %v3301, %v3303
          %v3334 = vmul.f32 %v3170, %v3303
          %v3335 = vmul.f32 %v3302, %v3303
          %v3336 = vpack.c.bf16 %v3306, %v3304
          %v3337 = vpack.c.bf16 %v3307, %v3305
          %v3338 = vpack.c.bf16 %v3310, %v3308
          %v3339 = vpack.c.bf16 %v3311, %v3309
          %v3340 = vpack.c.bf16 %v3314, %v3312
          %v3341 = vpack.c.bf16 %v3315, %v3313
          %v3342 = vpack.c.bf16 %v3318, %v3316
          %v3343 = vpack.c.bf16 %v3319, %v3317
          %v3344 = vpack.c.bf16 %v3322, %v3320
          %v3345 = vpack.c.bf16 %v3323, %v3321
          %v3346 = vpack.c.bf16 %v3326, %v3324
          %v3347 = vpack.c.bf16 %v3327, %v3325
          %v3348 = vpack.c.bf16 %v3330, %v3328
          %v3349 = vpack.c.bf16 %v3331, %v3329
          %v3350 = vpack.c.bf16 %v3334, %v3332
          %v3351 = vpack.c.bf16 %v3335, %v3333
          %3352 = vst [vmem:[#allocation2] sm:$0xff] %v3336
          %3353 = vst [vmem:[#allocation2 + $0x8] sm:$0xff] %v3337
          %3354 = vst [vmem:[#allocation2 + $0x10] sm:$0xff] %v3338
          %3355 = vst [vmem:[#allocation2 + $0x18] sm:$0xff] %v3339
          %3356 = vst [vmem:[#allocation2 + $0x20] sm:$0xff] %v3340
          %3357 = vst [vmem:[#allocation2 + $0x28] sm:$0xff] %v3341
          %3358 = vst [vmem:[#allocation2 + $0x30] sm:$0xff] %v3342
          %3359 = vst [vmem:[#allocation2 + $0x38] sm:$0xff] %v3343
          %3360 = vst [vmem:[#allocation2 + $0x40] sm:$0xff] %v3344
          %3361 = vst [vmem:[#allocation2 + $0x48] sm:$0xff] %v3345
          %3362 = vst [vmem:[#allocation2 + $0x50] sm:$0xff] %v3346
          %3363 = vst [vmem:[#allocation2 + $0x58] sm:$0xff] %v3347
          %3364 = vst [vmem:[#allocation2 + $0x60] sm:$0xff] %v3348
          %3365 = vst [vmem:[#allocation2 + $0x68] sm:$0xff] %v3349
          %3366 = vst [vmem:[#allocation2 + $0x70] sm:$0xff] %v3350
          %3367 = vst [vmem:[#allocation2 + $0x78] sm:$0xff] %v3351
        $region92: #{dhgslm_forward.2} parent=63 // pred_fallthru
          _
        %v3368 = vld [vmem:[#allocation2] sm:$0xff]
        %v3369 = vld [vmem:[#allocation2 + $0x8] sm:$0xff]
        %v3370 = vld [vmem:[#allocation2 + $0x10] sm:$0xff]
        %v3371 = vld [vmem:[#allocation2 + $0x18] sm:$0xff]
        %v3372 = vld [vmem:[#allocation2 + $0x20] sm:$0xff]
        %v3373 = vld [vmem:[#allocation2 + $0x28] sm:$0xff]
        %v3374 = vld [vmem:[#allocation2 + $0x30] sm:$0xff]
        %v3375 = vld [vmem:[#allocation2 + $0x38] sm:$0xff]
        %v3376 = vld [vmem:[#allocation2 + $0x40] sm:$0xff]
        %v3377 = vld [vmem:[#allocation2 + $0x48] sm:$0xff]
        %v3378 = vld [vmem:[#allocation2 + $0x50] sm:$0xff]
        %v3379 = vld [vmem:[#allocation2 + $0x58] sm:$0xff]
        %v3380 = vld [vmem:[#allocation2 + $0x60] sm:$0xff]
        %v3381 = vld [vmem:[#allocation2 + $0x68] sm:$0xff]
        %v3382 = vld [vmem:[#allocation2 + $0x70] sm:$0xff]
        %v3383 = vld [vmem:[#allocation2 + $0x78] sm:$0xff]
        %3384 = vmatprep.subr.bf16.mxu0 %v3369
        %3385 = vmatpush1.bf16.xpose.msra.mxu0 %v3368
        %3386 = vmatprep.subr.bf16.mxu0 %v3371
        %3387 = vmatpush1.bf16.xpose.msra.mxu0 %v3370
        %3388 = vmatprep.subr.bf16.mxu0 %v3373
        %3389 = vmatpush1.bf16.xpose.msra.mxu0 %v3372
        %3390 = vmatprep.subr.bf16.mxu0 %v3375
        %3391 = vmatpush1.bf16.xpose.msra.mxu0 %v3374
        %3392 = vmatprep.subr.bf16.mxu0 %v3377
        %3393 = vmatpush1.bf16.xpose.msra.mxu0 %v3376
        %3394 = vmatprep.subr.bf16.mxu0 %v3379
        %3395 = vmatpush1.bf16.xpose.msra.mxu0 %v3378
        %3396 = vmatprep.subr.bf16.mxu0 %v3381
        %3397 = vmatpush1.bf16.xpose.msra.mxu0 %v3380
        %3398 = vmatprep.subr.bf16.mxu0 %v3383
        %3399 = vmatpush1.bf16.xpose.msra.mxu0 %v3382
        %3400 = vmatprep.subr.bf16.mxu0 0
        %3401 = vmatpush1.bf16.xpose.msra.mxu0 0
        %3402 = vmatprep.subr.bf16.mxu0 0
        %3403 = vmatpush1.bf16.xpose.msra.mxu0 0
        %3404 = vmatprep.subr.bf16.mxu0 0
        %3405 = vmatpush1.bf16.xpose.msra.mxu0 0
        %3406 = vmatprep.subr.bf16.mxu0 0
        %3407 = vmatpush1.bf16.xpose.msra.mxu0 0
        %3408 = vmatprep.subr.bf16.mxu0 0
        %3409 = vmatpush1.bf16.xpose.msra.mxu0 0
        %3410 = vmatprep.subr.bf16.mxu0 0
        %3411 = vmatpush1.bf16.xpose.msra.mxu0 0
        %3412 = vmatprep.subr.bf16.mxu0 0
        %3413 = vmatpush1.bf16.xpose.msra.mxu0 0
        %3414 = vmatprep.subr.bf16.mxu0 0
        %3415 = vmatpush1.bf16.xpose.msra.mxu0 0
        %3416 = vmatprep.mubr.bf16.mxu0 %v2807
        %3417 = vmatmul.mubr.bf16.gmra.mrb[0].mxu0 %v2806
        %v3418 = vpop.f32.mrb[0].mxu0
        %v3419 = vadd.f32 0.0, %v3418
        %v3420 = vpop.f32.mrb[0].mxu0
        %v3421 = vpop.f32.mrb[0].mxu0
        %v3422 = vadd.f32 0.0, %v3421
        %v3423 = vpop.f32.mrb[0].mxu0
        %3424 = vmatprep.mubr.bf16.mxu0 %v2809
        %3425 = vmatmul.mubr.bf16.gmra.mrb[0].mxu0 %v2808
        %v3426 = vpop.f32.mrb[0].mxu0
        %v3427 = vadd.f32 0.0, %v3426
        %v3428 = vpop.f32.mrb[0].mxu0
        %v3429 = vpop.f32.mrb[0].mxu0
        %v3430 = vadd.f32 0.0, %v3429
        %v3431 = vpop.f32.mrb[0].mxu0
        %3432 = vmatprep.mubr.bf16.mxu0 %v2811
        %3433 = vmatmul.mubr.bf16.gmra.mrb[0].mxu0 %v2810
        %v3434 = vpop.f32.mrb[0].mxu0
        %v3435 = vadd.f32 0.0, %v3434
        %v3436 = vpop.f32.mrb[0].mxu0
        %v3437 = vpop.f32.mrb[0].mxu0
        %v3438 = vadd.f32 0.0, %v3437
        %v3439 = vpop.f32.mrb[0].mxu0
        %3440 = vmatprep.mubr.bf16.mxu0 %v2813
        %3441 = vmatmul.mubr.bf16.gmra.mrb[0].mxu0 %v2812
        %v3442 = vpop.f32.mrb[0].mxu0
        %v3443 = vadd.f32 0.0, %v3442
        %v3444 = vpop.f32.mrb[0].mxu0
        %v3445 = vpop.f32.mrb[0].mxu0
        %v3446 = vadd.f32 0.0, %v3445
        %v3447 = vpop.f32.mrb[0].mxu0
        %3448 = vmatprep.mubr.bf16.mxu0 %v2815
        %3449 = vmatmul.mubr.bf16.gmra.mrb[0].mxu0 %v2814
        %v3450 = vpop.f32.mrb[0].mxu0
        %v3451 = vadd.f32 0.0, %v3450
        %v3452 = vpop.f32.mrb[0].mxu0
        %v3453 = vpop.f32.mrb[0].mxu0
        %v3454 = vadd.f32 0.0, %v3453
        %v3455 = vpop.f32.mrb[0].mxu0
        %3456 = vmatprep.mubr.bf16.mxu0 %v2817
        %3457 = vmatmul.mubr.bf16.gmra.mrb[0].mxu0 %v2816
        %v3458 = vpop.f32.mrb[0].mxu0
        %v3459 = vadd.f32 0.0, %v3458
        %v3460 = vpop.f32.mrb[0].mxu0
        %v3461 = vpop.f32.mrb[0].mxu0
        %v3462 = vadd.f32 0.0, %v3461
        %v3463 = vpop.f32.mrb[0].mxu0
        %3464 = vmatprep.mubr.bf16.mxu0 %v2819
        %3465 = vmatmul.mubr.bf16.gmra.mrb[0].mxu0 %v2818
        %v3466 = vpop.f32.mrb[0].mxu0
        %v3467 = vadd.f32 0.0, %v3466
        %v3468 = vpop.f32.mrb[0].mxu0
        %v3469 = vpop.f32.mrb[0].mxu0
        %v3470 = vadd.f32 0.0, %v3469
        %v3471 = vpop.f32.mrb[0].mxu0
        %3472 = vmatprep.mubr.bf16.mxu0 %v2821
        %3473 = vmatmul.mubr.bf16.gmra.mrb[0].mxu0 %v2820
        %v3474 = vpop.f32.mrb[0].mxu0
        %v3475 = vadd.f32 0.0, %v3474
        %v3476 = vpop.f32.mrb[0].mxu0
        %v3477 = vpop.f32.mrb[0].mxu0
        %v3478 = vadd.f32 0.0, %v3477
        %v3479 = vpop.f32.mrb[0].mxu0
        %3480 = vdwg.mxu0
        %v3481 = vrcp.pop 2.0
        %s3482 = vtos %v3481
        %s3483 = smul.f32 %s2428, %s3482
        %v3484 = vstv %s3483
        %v3485 = vmul.f32 %v3419, %v3484
        %v3486 = vmul.f32 %v3422, %v3484
        %v3487 = vmul.f32 %v3427, %v3484
        %v3488 = vmul.f32 %v3430, %v3484
        %v3489 = vmul.f32 %v3435, %v3484
        %v3490 = vmul.f32 %v3438, %v3484
        %v3491 = vmul.f32 %v3443, %v3484
        %v3492 = vmul.f32 %v3446, %v3484
        %v3493 = vmul.f32 %v3451, %v3484
        %v3494 = vmul.f32 %v3454, %v3484
        %v3495 = vmul.f32 %v3459, %v3484
        %v3496 = vmul.f32 %v3462, %v3484
        %v3497 = vmul.f32 %v3467, %v3484
        %v3498 = vmul.f32 %v3470, %v3484
        %v3499 = vmul.f32 %v3475, %v3484
        %v3500 = vmul.f32 %v3478, %v3484
        %vm3501 = vcmp.lt.f32.partialorder %v3485, 0.1
        %vm3502 = vcmp.lt.f32.partialorder %v3486, 0.1
        %vm3503 = vcmp.lt.f32.partialorder %v3487, 0.1
        %vm3504 = vcmp.lt.f32.partialorder %v3488, 0.1
        %vm3505 = vcmp.lt.f32.partialorder %v3489, 0.1
        %vm3506 = vcmp.lt.f32.partialorder %v3490, 0.1
        %vm3507 = vcmp.lt.f32.partialorder %v3491, 0.1
        %vm3508 = vcmp.lt.f32.partialorder %v3492, 0.1
        %vm3509 = vcmp.lt.f32.partialorder %v3493, 0.1
        %vm3510 = vcmp.lt.f32.partialorder %v3494, 0.1
        %vm3511 = vcmp.lt.f32.partialorder %v3495, 0.1
        %vm3512 = vcmp.lt.f32.partialorder %v3496, 0.1
        %vm3513 = vcmp.lt.f32.partialorder %v3497, 0.1
        %vm3514 = vcmp.lt.f32.partialorder %v3498, 0.1
        %vm3515 = vcmp.lt.f32.partialorder %v3499, 0.1
        %vm3516 = vcmp.lt.f32.partialorder %v3500, 0.1
        %v3517 = vsel %vm3501, 0.0, %v3485
        %v3518 = vsel %vm3502, 0.0, %v3486
        %v3519 = vsel %vm3503, 0.0, %v3487
        %v3520 = vsel %vm3504, 0.0, %v3488
        %v3521 = vsel %vm3505, 0.0, %v3489
        %v3522 = vsel %vm3506, 0.0, %v3490
        %v3523 = vsel %vm3507, 0.0, %v3491
        %v3524 = vsel %vm3508, 0.0, %v3492
        %v3525 = vsel %vm3509, 0.0, %v3493
        %v3526 = vsel %vm3510, 0.0, %v3494
        %v3527 = vsel %vm3511, 0.0, %v3495
        %v3528 = vsel %vm3512, 0.0, %v3496
        %v3529 = vsel %vm3513, 0.0, %v3497
        %v3530 = vsel %vm3514, 0.0, %v3498
        %v3531 = vsel %vm3515, 0.0, %v3499
        %v3532 = vsel %vm3516, 0.0, %v3500
        %v3533 = vand.u32 2147483647, %v3517
        %v3534 = vand.u32 2147483647, %v3518
        %v3535 = vand.u32 2147483647, %v3519
        %v3536 = vand.u32 2147483647, %v3520
        %v3537 = vand.u32 2147483647, %v3521
        %v3538 = vand.u32 2147483647, %v3522
        %v3539 = vand.u32 2147483647, %v3523
        %v3540 = vand.u32 2147483647, %v3524
        %v3541 = vand.u32 2147483647, %v3525
        %v3542 = vand.u32 2147483647, %v3526
        %v3543 = vand.u32 2147483647, %v3527
        %v3544 = vand.u32 2147483647, %v3528
        %v3545 = vand.u32 2147483647, %v3529
        %v3546 = vand.u32 2147483647, %v3530
        %v3547 = vand.u32 2147483647, %v3531
        %v3548 = vand.u32 2147483647, %v3532
        %v3549 = vadd.f32 %v3533, %v3534
        %v3550 = vadd.f32 %v3549, %v3535
        %v3551 = vadd.f32 %v3550, %v3536
        %v3552 = vadd.f32 %v3551, %v3537
        %v3553 = vadd.f32 %v3552, %v3538
        %v3554 = vadd.f32 %v3553, %v3539
        %v3555 = vadd.f32 %v3554, %v3540
        %v3556 = vadd.f32 %v3555, %v3541
        %v3557 = vadd.f32 %v3556, %v3542
        %v3558 = vadd.f32 %v3557, %v3543
        %v3559 = vadd.f32 %v3558, %v3544
        %v3560 = vadd.f32 %v3559, %v3545
        %v3561 = vadd.f32 %v3560, %v3546
        %v3562 = vadd.f32 %v3561, %v3547
        %v3563 = vadd.f32 %v3562, %v3548
        %v3564 = vrot.slane %v3563, 4
        %v3565 = vadd.f32 %v3563, %v3564
        %v3566 = vrot.slane %v3565, 2
        %v3567 = vadd.f32 %v3565, %v3566
        %v3568 = vrot.slane %v3567, 1
        %v3569 = vadd.f32 %v3567, %v3568
        %v3570 = vmax.f32 %v3569, 1e-12
        %v3571 = vrcp.pop %v3570
        %v3572 = vmul.f32 1.0, %v3571
        %s3573 = sld [smem:[#allocation15 + %s1465]]
        %v3574 = vstv %s3573
        %v3575 = vmul.f32 %v3572, %v3574
        %v3576 = vmul.f32 %v3517, %v3575
        %v3577 = vmul.f32 %v3518, %v3575
        %v3578 = vmul.f32 %v3519, %v3575
        %v3579 = vmul.f32 %v3520, %v3575
        %v3580 = vmul.f32 %v3521, %v3575
        %v3581 = vmul.f32 %v3522, %v3575
        %v3582 = vmul.f32 %v3523, %v3575
        %v3583 = vmul.f32 %v3524, %v3575
        %v3584 = vmul.f32 %v3525, %v3575
        %v3585 = vmul.f32 %v3526, %v3575
        %v3586 = vmul.f32 %v3527, %v3575
        %v3587 = vmul.f32 %v3528, %v3575
        %v3588 = vmul.f32 %v3529, %v3575
        %v3589 = vmul.f32 %v3530, %v3575
        %v3590 = vmul.f32 %v3531, %v3575
        %v3591 = vmul.f32 %v3532, %v3575
        %v3592 = vadd.f32 %v2235, %v3576
        %v3593 = vadd.f32 %v2236, %v3577
        %v3594 = vadd.f32 %v2237, %v3578
        %v3595 = vadd.f32 %v2238, %v3579
        %v3596 = vadd.f32 %v2239, %v3580
        %v3597 = vadd.f32 %v2240, %v3581
        %v3598 = vadd.f32 %v2241, %v3582
        %v3599 = vadd.f32 %v2242, %v3583
        %v3600 = vadd.f32 %v2243, %v3584
        %v3601 = vadd.f32 %v2244, %v3585
        %v3602 = vadd.f32 %v2245, %v3586
        %v3603 = vadd.f32 %v2246, %v3587
        %v3604 = vadd.f32 %v2247, %v3588
        %v3605 = vadd.f32 %v2248, %v3589
        %v3606 = vadd.f32 %v2249, %v3590
        %v3607 = vadd.f32 %v2250, %v3591
        %v3608 = vld [vmem:[%s591] sm:$0xff]
        %v3609 = vld [vmem:[%s591 + $0x8] sm:$0xff]
        %v3610 = vld [vmem:[%s591 + $0x10] sm:$0xff]
        %v3611 = vld [vmem:[%s591 + $0x18] sm:$0xff]
        %v3612 = vld [vmem:[%s591 + $0x20] sm:$0xff]
        %v3613 = vld [vmem:[%s591 + $0x28] sm:$0xff]
        %v3614 = vld [vmem:[%s591 + $0x30] sm:$0xff]
        %v3615 = vld [vmem:[%s591 + $0x38] sm:$0xff]
        %v3616 = vld [vmem:[%s591 + $0x40] sm:$0xff]
        %v3617 = vld [vmem:[%s591 + $0x48] sm:$0xff]
        %v3618 = vld [vmem:[%s591 + $0x50] sm:$0xff]
        %v3619 = vld [vmem:[%s591 + $0x58] sm:$0xff]
        %v3620 = vld [vmem:[%s591 + $0x60] sm:$0xff]
        %v3621 = vld [vmem:[%s591 + $0x68] sm:$0xff]
        %v3622 = vld [vmem:[%s591 + $0x70] sm:$0xff]
        %v3623 = vld [vmem:[%s591 + $0x78] sm:$0xff]
        %v3624 = vand.u32 2147483647, %v3608
        %v3625 = vand.u32 2147483647, %v3609
        %v3626 = vand.u32 2147483647, %v3610
        %v3627 = vand.u32 2147483647, %v3611
        %v3628 = vand.u32 2147483647, %v3612
        %v3629 = vand.u32 2147483647, %v3613
        %v3630 = vand.u32 2147483647, %v3614
        %v3631 = vand.u32 2147483647, %v3615
        %v3632 = vand.u32 2147483647, %v3616
        %v3633 = vand.u32 2147483647, %v3617
        %v3634 = vand.u32 2147483647, %v3618
        %v3635 = vand.u32 2147483647, %v3619
        %v3636 = vand.u32 2147483647, %v3620
        %v3637 = vand.u32 2147483647, %v3621
        %v3638 = vand.u32 2147483647, %v3622
        %v3639 = vand.u32 2147483647, %v3623
        %v3640 = vadd.f32 %v3624, %v3625
        %v3641 = vadd.f32 %v3640, %v3626
        %v3642 = vadd.f32 %v3641, %v3627
        %v3643 = vadd.f32 %v3642, %v3628
        %v3644 = vadd.f32 %v3643, %v3629
        %v3645 = vadd.f32 %v3644, %v3630
        %v3646 = vadd.f32 %v3645, %v3631
        %v3647 = vadd.f32 %v3646, %v3632
        %v3648 = vadd.f32 %v3647, %v3633
        %v3649 = vadd.f32 %v3648, %v3634
        %v3650 = vadd.f32 %v3649, %v3635
        %v3651 = vadd.f32 %v3650, %v3636
        %v3652 = vadd.f32 %v3651, %v3637
        %v3653 = vadd.f32 %v3652, %v3638
        %v3654 = vadd.f32 %v3653, %v3639
        %v3655 = vrot.slane %v3654, 4
        %v3656 = vadd.f32 %v3654, %v3655
        %v3657 = vrot.slane %v3656, 2
        %v3658 = vadd.f32 %v3656, %v3657
        %v3659 = vrot.slane %v3658, 1
        %v3660 = vadd.f32 %v3658, %v3659
        %v3661 = vmax.f32 %v3660, 1e-12
        %v3662 = vrcp.pop %v3661
        %v3663 = vmul.f32 1.0, %v3662
        %s3664 = sadd.s32 %s1465, 3
        %s3665 = sld [smem:[#allocation15 + %s3664]]
        %v3666 = vstv %s3665
        %v3667 = vmul.f32 %v3663, %v3666
        %v3668 = vmul.f32 %v3608, %v3667
        %v3669 = vmul.f32 %v3609, %v3667
        %v3670 = vmul.f32 %v3610, %v3667
        %v3671 = vmul.f32 %v3611, %v3667
        %v3672 = vmul.f32 %v3612, %v3667
        %v3673 = vmul.f32 %v3613, %v3667
        %v3674 = vmul.f32 %v3614, %v3667
        %v3675 = vmul.f32 %v3615, %v3667
        %v3676 = vmul.f32 %v3616, %v3667
        %v3677 = vmul.f32 %v3617, %v3667
        %v3678 = vmul.f32 %v3618, %v3667
        %v3679 = vmul.f32 %v3619, %v3667
        %v3680 = vmul.f32 %v3620, %v3667
        %v3681 = vmul.f32 %v3621, %v3667
        %v3682 = vmul.f32 %v3622, %v3667
        %v3683 = vmul.f32 %v3623, %v3667
        %v3684 = vadd.f32 %v3592, %v3668
        %v3685 = vadd.f32 %v3593, %v3669
        %v3686 = vadd.f32 %v3594, %v3670
        %v3687 = vadd.f32 %v3595, %v3671
        %v3688 = vadd.f32 %v3596, %v3672
        %v3689 = vadd.f32 %v3597, %v3673
        %v3690 = vadd.f32 %v3598, %v3674
        %v3691 = vadd.f32 %v3599, %v3675
        %v3692 = vadd.f32 %v3600, %v3676
        %v3693 = vadd.f32 %v3601, %v3677
        %v3694 = vadd.f32 %v3602, %v3678
        %v3695 = vadd.f32 %v3603, %v3679
        %v3696 = vadd.f32 %v3604, %v3680
        %v3697 = vadd.f32 %v3605, %v3681
        %v3698 = vadd.f32 %v3606, %v3682
        %v3699 = vadd.f32 %v3607, %v3683
        %3700 = vst [vmem:[%s710] sm:$0xff] %v3684
        %3701 = vst [vmem:[%s710 + $0x8] sm:$0xff] %v3685
        %3702 = vst [vmem:[%s710 + $0x10] sm:$0xff] %v3686
        %3703 = vst [vmem:[%s710 + $0x18] sm:$0xff] %v3687
        %3704 = vst [vmem:[%s710 + $0x20] sm:$0xff] %v3688
        %3705 = vst [vmem:[%s710 + $0x28] sm:$0xff] %v3689
        %3706 = vst [vmem:[%s710 + $0x30] sm:$0xff] %v3690
        %3707 = vst [vmem:[%s710 + $0x38] sm:$0xff] %v3691
        %3708 = vst [vmem:[%s710 + $0x40] sm:$0xff] %v3692
        %3709 = vst [vmem:[%s710 + $0x48] sm:$0xff] %v3693
        %3710 = vst [vmem:[%s710 + $0x50] sm:$0xff] %v3694
        %3711 = vst [vmem:[%s710 + $0x58] sm:$0xff] %v3695
        %3712 = vst [vmem:[%s710 + $0x60] sm:$0xff] %v3696
        %3713 = vst [vmem:[%s710 + $0x68] sm:$0xff] %v3697
        %3714 = vst [vmem:[%s710 + $0x70] sm:$0xff] %v3698
        %3715 = vst [vmem:[%s710 + $0x78] sm:$0xff] %v3699
        %p3716 = scmp.lt.s32.totalorder %s44, 2
        %s3717 = scalar_select %p3716, %s44, 2
        %s3718 = smul.addr %s3717, 16
        %s3719 = smul.addr %s3718, 8
        %s3720 = scalar_lea.vmem %s13, %s3719
        // Predicated region
        $region93: #{dhgslm_forward.2} parent=63 // pred_check
          %p3721 = pneg %p361
        $region94: #{dhgslm_forward.2} parent=63 // pred_check_branch
          %3723 = sbr.rel (%p3721) target = $region96
        $region95: #{dhgslm_forward.2} parent=63 // pred_region
          _
        $region96: #{dhgslm_forward.2} parent=63 // pred_fallthru
          _
      $region64: #{dhgslm_forward.2} parent=5 // pred_fallthru
        _
      %p3724 = scmp.le.s32.totalorder 2, %s39
      // Predicated region
      $region97: #{dhgslm_forward.2} parent=5 // pred_check
        %p3725 = pneg %p3724
      $region98: #{dhgslm_forward.2} parent=5 // pred_check_branch
        %3727 = sbr.rel (%p3725) target = $region100
      $region99: #{dhgslm_forward.2} parent=5 // pred_region
        %s3728 = ssub.s32 %s39, 2
        // Predicated region
        $region101: #{dhgslm_forward.2} parent=99 // pred_check
          %p3729 = pneg %p367
        $region102: #{dhgslm_forward.2} parent=99 // pred_check_branch
          %3731 = sbr.rel (%p3729) target = $region104
        $region103: #{dhgslm_forward.2} parent=99 // pred_region
          %p3732 = scmp.lt.s32.totalorder %s45, 2
          %s3733 = scalar_select %p3732, %s45, 2
          %s3734 = smul.addr %s3733, 16
          %s3735 = smul.addr %s3734, 8
          %s3736 = scalar_lea.vmem %s13, %s3735
        $region104: #{dhgslm_forward.2} parent=99 // pred_fallthru
          _
      $region100: #{dhgslm_forward.2} parent=5 // pred_fallthru
        _
    $region6: #{dhgslm_forward.2} parent=1 // loop_footer
      %s43 = sadd.s32 1, %s39
    $region7: #{dhgslm_forward.2} parent=1 // loop_footer_branch
      %38 = sbr.rel target = $region3
    $region8: #{dhgslm_forward.2} parent=1 // loop_exit
      _
    %3737 = vsyncpa [#allocation7], 1
    %s3738 = scalar_lea.sflag [#allocation7], 1
    %3739 = vsyncpa %s3738, 1
    %3740 = vsyncpa [#allocation10], 1
    %s3741 = scalar_lea.sflag [#allocation10], 1
    %3742 = vsyncpa %s3741, 1
    %3743 = vsyncpa [#allocation13], 1
    %s3744 = scalar_lea.sflag [#allocation13], 1
    %3745 = vsyncpa %s3744, 1
    %3746 = vsyncpa [#allocation8], 1
    %s3747 = scalar_lea.sflag [#allocation8], 1
    %3748 = vsyncpa %s3747, 1

</llo_original>
